<compile_context>
chip_gen: v5e
topology: v5e:2x2
jax: 0.10.0
libtpu: 0.0.40
codegen_flags: <defaults>
</compile_context>

<pallas_src>
import math
import jax
import jax.numpy as jnp
from jax.experimental import pallas as pl
from jax.experimental.pallas import tpu as pltpu

NORM_EPS = 1e-8


def _round_up(x, m):
    return ((x + m - 1) // m) * m


def _rms_norm_in_kernel(z):
    # z / (sqrt(mean(z^2, -1)) + eps); exact f32 reciprocal on the per-row
    # (tile_b, 1) column (cheap), then a broadcast multiply.
    rms = jnp.sqrt(jnp.mean(z * z, axis=-1, keepdims=True))
    return z * (1.0 / (rms + NORM_EPS))


def _make_fused_mlp_kernel(num_layers):
    """Kernel refs: (x, w1, b1, ..., wN, bN, out)."""

    def kernel(x_ref, *refs):
        o_ref = refs[-1]
        z = x_ref[...].astype(jnp.float32)          # bf16 tile -> f32 stats
        z = _rms_norm_in_kernel(z)
        # Static (trace-time unrolled) layer loop; weights are VMEM-resident.
        for i in range(num_layers):
            w = refs[2 * i][...]                          # bf16 (in_dim, out_dim)
            b = refs[2 * i + 1][...].astype(jnp.float32)  # (1, out_dim), broadcasts
            pre = jnp.dot(z.astype(jnp.bfloat16), w,
                          preferred_element_type=jnp.float32) + b
            act = jnp.maximum(pre, 0.0)                   # nn.ReLU (eval path), f32
            z = _rms_norm_in_kernel(act)
        o_ref[...] = z.astype(o_ref.dtype)

    return kernel


def _vmem_capacity_bytes():
    """Per-core VMEM capacity; conservative fallback if the query is unavailable."""
    try:
        info = pltpu.get_tpu_info()
        cap = getattr(info, "vmem_capacity_bytes", None)
        if cap:
            return int(cap)
    except Exception:
        pass
    return 64 << 20  # conservative: v7x per-TC VMEM


def _pick_batch_tiling(B, tile_b_req):
    """Pick (tile_b, b_pad): 16-aligned tiles (bf16 sublane packing), >= 2 grid
    steps when the batch allows it, and balanced so small batches are not
    over-padded."""
    b_min = _round_up(B, 16)
    tile = min(_round_up(max(tile_b_req, 16), 16), b_min)
    n_tiles = -(-b_min // tile)
    if n_tiles == 1 and b_min >= 32:
        n_tiles = 2          # let both v7x TCs work / pipeline DMA on 1-TC parts
    tile = _round_up(-(-b_min // n_tiles), 16)
    return tile, tile * n_tiles


def ff_mlp_forward(x, weights, biases, *, tile_b=1024, out_dtype=jnp.bfloat16):
    """x: (B, C, H, W) or (B, D). weights[i]: (in_dim, out_dim) f32.
    Returns (B, hidden_dims[-1]) in `out_dtype`."""
    B = x.shape[0]
    # bf16 input halves the dominant HBM traffic (input tile DMA).
    x_flat = x.reshape(B, -1).astype(jnp.bfloat16)
    D = x_flat.shape[1]
    num_layers = len(weights)
    out_dim = weights[-1].shape[1]

    tile_b, b_pad = _pick_batch_tiling(B, tile_b)
    if b_pad != B:
        x_flat = jnp.pad(x_flat, ((0, b_pad - B), (0, 0)))

    # bf16 weights for the MXU (also halves weight DMA); biases stay f32.
    w_bf16 = [w.astype(jnp.bfloat16) for w in weights]
    b_f32 = [b.reshape(1, -1).astype(jnp.float32) for b in biases]
    args = [x_flat]
    for w, b in zip(w_bf16, b_f32):
        args.extend((w, b))

    # Generation-aware VMEM budget (~75% of physical per-core VMEM max).
    resident = sum(w.size * 2 for w in w_bf16) + sum(b.size * 4 for b in b_f32)
    in_tile_bytes = 2 * tile_b * D * 2                         # dbl-buffered bf16 input
    out_tile_bytes = 2 * tile_b * out_dim * jnp.dtype(out_dtype).itemsize
    widest = max([D] + [w.shape[1] for w in weights])
    temp_bytes = 4 * tile_b * widest * 4                       # in-kernel f32 temporaries
    needed = 2 * resident + in_tile_bytes + out_tile_bytes + temp_bytes
    vmem_cap = _vmem_capacity_bytes()
    vmem_limit = int(min(max(32 << 20, 2 * needed), 0.75 * vmem_cap))

    def run(single_buffer_resident):
        res_kw = {"pipeline_mode": pl.Buffered(1)} if single_buffer_resident else {}
        in_specs = [pl.BlockSpec((tile_b, D), lambda i: (i, 0))]
        for w, b in zip(w_bf16, b_f32):
            # Constant-index (resident) weights/biases never re-fetch.
            in_specs.append(pl.BlockSpec(w.shape, lambda i: (0, 0), **res_kw))
            in_specs.append(pl.BlockSpec(b.shape, lambda i: (0, 0), **res_kw))
        return pl.pallas_call(
            _make_fused_mlp_kernel(num_layers),
            out_shape=jax.ShapeDtypeStruct((b_pad, out_dim), out_dtype),
            grid=(b_pad // tile_b,),
            in_specs=in_specs,
            out_specs=pl.BlockSpec((tile_b, out_dim), lambda i: (i, 0)),
            compiler_params=pltpu.CompilerParams(
                dimension_semantics=("parallel",),   # batch tiles shard across TCs
                vmem_limit_bytes=vmem_limit,
            ),
        )(*args)

    try:
        out = run(True)            # single-buffered resident weights
    except Exception:
        out = run(False)           # fallback: default (double-buffered) specs
    return out[:B]


def init_params(key, input_dim, hidden_dims, bias_init=0.0):
    """Matches FF_MLP._init_layer_weights: W ~ N(0, 1/sqrt(out_dim)), bias = bias_init.
    Weights stored as (in_dim, out_dim) (transpose of torch's (out, in))."""
    weights, biases = [], []
    cur = input_dim
    for h in hidden_dims:
        key, sub = jax.random.split(key)
        std = 1.0 / math.sqrt(h)  # layer.weight.shape[0] == out_features
        w = jax.random.normal(sub, (cur, h), dtype=jnp.float32) * std
        b = jnp.full((1, h), bias_init, dtype=jnp.float32)
        weights.append(w)
        biases.append(b)
        cur = h
    return weights, biases


def ff_mlp_forward_ref(x, weights, biases, *, bf16_io=True):
    """Pure-JAX reference. bf16_io=True mirrors the kernel's numerics
    (bf16 input quantization + bf16-MXU matmuls with f32 accumulation)."""
    B = x.shape[0]
    z = x.reshape(B, -1)
    z = (z.astype(jnp.bfloat16) if bf16_io else z).astype(jnp.float32)
    rms = jnp.sqrt(jnp.mean(z * z, axis=-1, keepdims=True))
    z = z / (rms + NORM_EPS)
    for w, b in zip(weights, biases):
        if bf16_io:
            pre = jnp.dot(z.astype(jnp.bfloat16), w.astype(jnp.bfloat16),
                          preferred_element_type=jnp.float32)
        else:
            pre = z @ w
        pre = pre + b.reshape(1, -1).astype(jnp.float32)
        a = jnp.maximum(pre, 0.0)
        rms = jnp.sqrt(jnp.mean(a * a, axis=-1, keepdims=True))
        z = a / (rms + NORM_EPS)
    return z


if __name__ == "__main__":
    key = jax.random.PRNGKey(0)
    k_x, k_p = jax.random.split(key)

    # Small, module-consistent shapes: B=8, C=4, 16x16 images -> input_dim=1024.
    B, C, H, W = 8, 4, 16, 16
    hidden_dims = [256, 256, 128]
    input_dim = C * H * W

    x = jax.random.normal(k_x, (B, C, H, W), dtype=jnp.float32)
    weights, biases = init_params(k_p, input_dim, hidden_dims)

    out = ff_mlp_forward(x, weights, biases)
    out = jax.block_until_ready(out)
    assert out.shape == (B, hidden_dims[-1])

    # Compare against a reference mirroring the kernel's bf16 I/O + MXU path;
    # the tolerance absorbs bf16 output quantization.
    ref = ff_mlp_forward_ref(x, weights, biases, bf16_io=True)
    out_f32 = out.astype(jnp.float32)
    assert jnp.allclose(out_f32, ref, atol=2e-2, rtol=2e-2), (
        f"mismatch vs reference: max abs diff {jnp.max(jnp.abs(out_f32 - ref))}")

    print("KERNEL_OK")
</pallas_src>

<mosaic_0001>
module attributes {stable_mosaic.version = 11 : i64} {
  func.func @kernel(%arg0: i32, %arg1: memref<16x1024xbf16, #tpu.memory_space<vmem>>, %arg2: memref<1024x256xbf16, #tpu.memory_space<vmem>>, %arg3: memref<1x256xf32, #tpu.memory_space<vmem>>, %arg4: memref<256x256xbf16, #tpu.memory_space<vmem>>, %arg5: memref<1x256xf32, #tpu.memory_space<vmem>>, %arg6: memref<256x128xbf16, #tpu.memory_space<vmem>>, %arg7: memref<1x128xf32, #tpu.memory_space<vmem>>, %arg8: memref<16x128xbf16, #tpu.memory_space<vmem>>) attributes {dimension_semantics = [#tpu.dimension_semantics<parallel>], iteration_bounds = array<i64: 1>, scalar_prefetch = 0 : i64, scratch_operands = 0 : i64, tpu.core_type = #tpu.core_type<tc>, window_params = [{transform_indices = @transform_0, window_bounds = array<i64: 16, 1024>}, {pipeline_mode = #tpu.pipeline_mode<synchronous>, transform_indices = @transform_1, window_bounds = array<i64: 1024, 256>}, {pipeline_mode = #tpu.pipeline_mode<synchronous>, transform_indices = @transform_2, window_bounds = array<i64: 1, 256>}, {pipeline_mode = #tpu.pipeline_mode<synchronous>, transform_indices = @transform_3, window_bounds = array<i64: 256, 256>}, {pipeline_mode = #tpu.pipeline_mode<synchronous>, transform_indices = @transform_4, window_bounds = array<i64: 1, 256>}, {pipeline_mode = #tpu.pipeline_mode<synchronous>, transform_indices = @transform_5, window_bounds = array<i64: 256, 128>}, {pipeline_mode = #tpu.pipeline_mode<synchronous>, transform_indices = @transform_6, window_bounds = array<i64: 1, 128>}, {transform_indices = @transform_7, window_bounds = array<i64: 16, 128>}]} {
    %c0 = arith.constant 0 : index
    %c0_0 = arith.constant 0 : index
    %0 = vector.load %arg1[%c0, %c0_0] : memref<16x1024xbf16, #tpu.memory_space<vmem>>, vector<16x1024xbf16>
    %1 = arith.extf %0 : vector<16x1024xbf16> to vector<16x1024xf32>
    %2 = arith.mulf %1, %1 : vector<16x1024xf32>
    %cst = arith.constant dense<0.000000e+00> : vector<16xf32>
    %3 = vector.multi_reduction <add>, %2, %cst [1] : vector<16x1024xf32> to vector<16xf32>
    %4 = vector.shape_cast %3 : vector<16xf32> to vector<16x1xf32>
    %cst_1 = arith.constant 1.024000e+03 : f32
    %5 = vector.broadcast %cst_1 : f32 to vector<16x1xf32>
    %6 = arith.divf %4, %5 : vector<16x1xf32>
    %7 = math.sqrt %6 : vector<16x1xf32>
    %cst_2 = arith.constant 9.99999993E-9 : f32
    %8 = vector.broadcast %cst_2 : f32 to vector<16x1xf32>
    %9 = arith.addf %7, %8 : vector<16x1xf32>
    %cst_3 = arith.constant 1.000000e+00 : f32
    %10 = vector.broadcast %cst_3 : f32 to vector<16x1xf32>
    %11 = arith.divf %10, %9 : vector<16x1xf32>
    %12 = vector.broadcast %11 : vector<16x1xf32> to vector<16x1024xf32>
    %13 = arith.mulf %1, %12 : vector<16x1024xf32>
    %c0_4 = arith.constant 0 : index
    %c0_5 = arith.constant 0 : index
    %14 = vector.load %arg2[%c0_4, %c0_5] : memref<1024x256xbf16, #tpu.memory_space<vmem>>, vector<1024x256xbf16>
    %c0_6 = arith.constant 0 : index
    %c0_7 = arith.constant 0 : index
    %15 = vector.load %arg3[%c0_6, %c0_7] : memref<1x256xf32, #tpu.memory_space<vmem>>, vector<1x256xf32>
    %16 = arith.truncf %13 : vector<16x1024xf32> to vector<16x1024xbf16>
    %cst_8 = arith.constant dense<0.000000e+00> : vector<16x256xf32>
    %17 = tpu.matmul %16, %14, %cst_8 {dimension_numbers = #tpu.dot_dimension_numbers<[1], [0], [0], [1], [0, 0, 1, 1], [], []>} : vector<16x1024xbf16>, vector<1024x256xbf16>, vector<16x256xf32> -> vector<16x256xf32>
    %18 = vector.broadcast %15 : vector<1x256xf32> to vector<16x256xf32>
    %19 = arith.addf %17, %18 : vector<16x256xf32>
    %cst_9 = arith.constant 0.000000e+00 : f32
    %20 = vector.broadcast %cst_9 : f32 to vector<16x256xf32>
    %21 = arith.maximumf %19, %20 : vector<16x256xf32>
    %22 = arith.mulf %21, %21 : vector<16x256xf32>
    %cst_10 = arith.constant dense<0.000000e+00> : vector<16xf32>
    %23 = vector.multi_reduction <add>, %22, %cst_10 [1] : vector<16x256xf32> to vector<16xf32>
    %24 = vector.shape_cast %23 : vector<16xf32> to vector<16x1xf32>
    %cst_11 = arith.constant 2.560000e+02 : f32
    %25 = vector.broadcast %cst_11 : f32 to vector<16x1xf32>
    %26 = arith.divf %24, %25 : vector<16x1xf32>
    %27 = math.sqrt %26 : vector<16x1xf32>
    %cst_12 = arith.constant 9.99999993E-9 : f32
    %28 = vector.broadcast %cst_12 : f32 to vector<16x1xf32>
    %29 = arith.addf %27, %28 : vector<16x1xf32>
    %cst_13 = arith.constant 1.000000e+00 : f32
    %30 = vector.broadcast %cst_13 : f32 to vector<16x1xf32>
    %31 = arith.divf %30, %29 : vector<16x1xf32>
    %32 = vector.broadcast %31 : vector<16x1xf32> to vector<16x256xf32>
    %33 = arith.mulf %21, %32 : vector<16x256xf32>
    %c0_14 = arith.constant 0 : index
    %c0_15 = arith.constant 0 : index
    %34 = vector.load %arg4[%c0_14, %c0_15] : memref<256x256xbf16, #tpu.memory_space<vmem>>, vector<256x256xbf16>
    %c0_16 = arith.constant 0 : index
    %c0_17 = arith.constant 0 : index
    %35 = vector.load %arg5[%c0_16, %c0_17] : memref<1x256xf32, #tpu.memory_space<vmem>>, vector<1x256xf32>
    %36 = arith.truncf %33 : vector<16x256xf32> to vector<16x256xbf16>
    %cst_18 = arith.constant dense<0.000000e+00> : vector<16x256xf32>
    %37 = tpu.matmul %36, %34, %cst_18 {dimension_numbers = #tpu.dot_dimension_numbers<[1], [0], [0], [1], [0, 0, 1, 1], [], []>} : vector<16x256xbf16>, vector<256x256xbf16>, vector<16x256xf32> -> vector<16x256xf32>
    %38 = vector.broadcast %35 : vector<1x256xf32> to vector<16x256xf32>
    %39 = arith.addf %37, %38 : vector<16x256xf32>
    %cst_19 = arith.constant 0.000000e+00 : f32
    %40 = vector.broadcast %cst_19 : f32 to vector<16x256xf32>
    %41 = arith.maximumf %39, %40 : vector<16x256xf32>
    %42 = arith.mulf %41, %41 : vector<16x256xf32>
    %cst_20 = arith.constant dense<0.000000e+00> : vector<16xf32>
    %43 = vector.multi_reduction <add>, %42, %cst_20 [1] : vector<16x256xf32> to vector<16xf32>
    %44 = vector.shape_cast %43 : vector<16xf32> to vector<16x1xf32>
    %cst_21 = arith.constant 2.560000e+02 : f32
    %45 = vector.broadcast %cst_21 : f32 to vector<16x1xf32>
    %46 = arith.divf %44, %45 : vector<16x1xf32>
    %47 = math.sqrt %46 : vector<16x1xf32>
    %cst_22 = arith.constant 9.99999993E-9 : f32
    %48 = vector.broadcast %cst_22 : f32 to vector<16x1xf32>
    %49 = arith.addf %47, %48 : vector<16x1xf32>
    %cst_23 = arith.constant 1.000000e+00 : f32
    %50 = vector.broadcast %cst_23 : f32 to vector<16x1xf32>
    %51 = arith.divf %50, %49 : vector<16x1xf32>
    %52 = vector.broadcast %51 : vector<16x1xf32> to vector<16x256xf32>
    %53 = arith.mulf %41, %52 : vector<16x256xf32>
    %c0_24 = arith.constant 0 : index
    %c0_25 = arith.constant 0 : index
    %54 = vector.load %arg6[%c0_24, %c0_25] : memref<256x128xbf16, #tpu.memory_space<vmem>>, vector<256x128xbf16>
    %c0_26 = arith.constant 0 : index
    %c0_27 = arith.constant 0 : index
    %55 = vector.load %arg7[%c0_26, %c0_27] : memref<1x128xf32, #tpu.memory_space<vmem>>, vector<1x128xf32>
    %56 = arith.truncf %53 : vector<16x256xf32> to vector<16x256xbf16>
    %cst_28 = arith.constant dense<0.000000e+00> : vector<16x128xf32>
    %57 = tpu.matmul %56, %54, %cst_28 {dimension_numbers = #tpu.dot_dimension_numbers<[1], [0], [0], [1], [0, 0, 1, 1], [], []>} : vector<16x256xbf16>, vector<256x128xbf16>, vector<16x128xf32> -> vector<16x128xf32>
    %58 = vector.broadcast %55 : vector<1x128xf32> to vector<16x128xf32>
    %59 = arith.addf %57, %58 : vector<16x128xf32>
    %cst_29 = arith.constant 0.000000e+00 : f32
    %60 = vector.broadcast %cst_29 : f32 to vector<16x128xf32>
    %61 = arith.maximumf %59, %60 : vector<16x128xf32>
    %62 = arith.mulf %61, %61 : vector<16x128xf32>
    %cst_30 = arith.constant dense<0.000000e+00> : vector<16xf32>
    %63 = vector.multi_reduction <add>, %62, %cst_30 [1] : vector<16x128xf32> to vector<16xf32>
    %64 = vector.shape_cast %63 : vector<16xf32> to vector<16x1xf32>
    %cst_31 = arith.constant 1.280000e+02 : f32
    %65 = vector.broadcast %cst_31 : f32 to vector<16x1xf32>
    %66 = arith.divf %64, %65 : vector<16x1xf32>
    %67 = math.sqrt %66 : vector<16x1xf32>
    %cst_32 = arith.constant 9.99999993E-9 : f32
    %68 = vector.broadcast %cst_32 : f32 to vector<16x1xf32>
    %69 = arith.addf %67, %68 : vector<16x1xf32>
    %cst_33 = arith.constant 1.000000e+00 : f32
    %70 = vector.broadcast %cst_33 : f32 to vector<16x1xf32>
    %71 = arith.divf %70, %69 : vector<16x1xf32>
    %72 = vector.broadcast %71 : vector<16x1xf32> to vector<16x128xf32>
    %73 = arith.mulf %61, %72 : vector<16x128xf32>
    %74 = arith.truncf %73 : vector<16x128xf32> to vector<16x128xbf16>
    %c0_34 = arith.constant 0 : index
    %c0_35 = arith.constant 0 : index
    %75 = vector.load %arg8[%c0_34, %c0_35] : memref<16x128xbf16, #tpu.memory_space<vmem>>, vector<16x128xbf16>
    tpu.vector_store %arg8[%c0_34, %c0_35], %74 {strides = array<i32>} : memref<16x128xbf16, #tpu.memory_space<vmem>>, vector<16x128xbf16>,
    return
  }
  func.func @transform_0(%arg0: i32) -> (i32, i32) {
    %c0_i32 = arith.constant 0 : i32
    %c0_i32_0 = arith.constant 0 : i32
    return %arg0, %c0_i32 : i32, i32
  }
  func.func @transform_1(%arg0: i32) -> (i32, i32) {
    %c0_i32 = arith.constant 0 : i32
    %c0_i32_0 = arith.constant 0 : i32
    %c0_i32_1 = arith.constant 0 : i32
    return %c0_i32, %c0_i32_0 : i32, i32
  }
  func.func @transform_2(%arg0: i32) -> (i32, i32) {
    %c0_i32 = arith.constant 0 : i32
    %c0_i32_0 = arith.constant 0 : i32
    %c0_i32_1 = arith.constant 0 : i32
    return %c0_i32, %c0_i32_0 : i32, i32
  }
  func.func @transform_3(%arg0: i32) -> (i32, i32) {
    %c0_i32 = arith.constant 0 : i32
    %c0_i32_0 = arith.constant 0 : i32
    %c0_i32_1 = arith.constant 0 : i32
    return %c0_i32, %c0_i32_0 : i32, i32
  }
  func.func @transform_4(%arg0: i32) -> (i32, i32) {
    %c0_i32 = arith.constant 0 : i32
    %c0_i32_0 = arith.constant 0 : i32
    %c0_i32_1 = arith.constant 0 : i32
    return %c0_i32, %c0_i32_0 : i32, i32
  }
  func.func @transform_5(%arg0: i32) -> (i32, i32) {
    %c0_i32 = arith.constant 0 : i32
    %c0_i32_0 = arith.constant 0 : i32
    %c0_i32_1 = arith.constant 0 : i32
    return %c0_i32, %c0_i32_0 : i32, i32
  }
  func.func @transform_6(%arg0: i32) -> (i32, i32) {
    %c0_i32 = arith.constant 0 : i32
    %c0_i32_0 = arith.constant 0 : i32
    %c0_i32_1 = arith.constant 0 : i32
    return %c0_i32, %c0_i32_0 : i32, i32
  }
  func.func @transform_7(%arg0: i32) -> (i32, i32) {
    %c0_i32 = arith.constant 0 : i32
    %c0_i32_0 = arith.constant 0 : i32
    return %arg0, %c0_i32 : i32, i32
  }
}

module attributes {stable_mosaic.version = 11 : i64} {
  func.func @kernel(%arg0: i32, %arg1: memref<16x1024xbf16, #tpu.memory_space<vmem>>, %arg2: memref<1024x256xbf16, #tpu.memory_space<vmem>>, %arg3: memref<1x256xf32, #tpu.memory_space<vmem>>, %arg4: memref<256x256xbf16, #tpu.memory_space<vmem>>, %arg5: memref<1x256xf32, #tpu.memory_space<vmem>>, %arg6: memref<256x128xbf16, #tpu.memory_space<vmem>>, %arg7: memref<1x128xf32, #tpu.memory_space<vmem>>, %arg8: memref<16x128xbf16, #tpu.memory_space<vmem>>) attributes {dimension_semantics = [#tpu.dimension_semantics<parallel>], iteration_bounds = array<i64: 1>, scalar_prefetch = 0 : i64, scratch_operands = 0 : i64, tpu.core_type = #tpu.core_type<tc>, window_params = [{transform_indices = @transform_0, window_bounds = array<i64: 16, 1024>}, {pipeline_mode = #tpu.pipeline_mode<synchronous>, transform_indices = @transform_1, window_bounds = array<i64: 1024, 256>}, {pipeline_mode = #tpu.pipeline_mode<synchronous>, transform_indices = @transform_2, window_bounds = array<i64: 1, 256>}, {pipeline_mode = #tpu.pipeline_mode<synchronous>, transform_indices = @transform_3, window_bounds = array<i64: 256, 256>}, {pipeline_mode = #tpu.pipeline_mode<synchronous>, transform_indices = @transform_4, window_bounds = array<i64: 1, 256>}, {pipeline_mode = #tpu.pipeline_mode<synchronous>, transform_indices = @transform_5, window_bounds = array<i64: 256, 128>}, {pipeline_mode = #tpu.pipeline_mode<synchronous>, transform_indices = @transform_6, window_bounds = array<i64: 1, 128>}, {transform_indices = @transform_7, window_bounds = array<i64: 16, 128>}]} {
    %c0 = arith.constant 0 : index
    %c0_0 = arith.constant 0 : index
    %0 = vector.load %arg1[%c0, %c0_0] : memref<16x1024xbf16, #tpu.memory_space<vmem>>, vector<16x1024xbf16>
    %1 = arith.extf %0 : vector<16x1024xbf16> to vector<16x1024xf32>
    %2 = arith.mulf %1, %1 : vector<16x1024xf32>
    %cst = arith.constant dense<0.000000e+00> : vector<16xf32>
    %3 = vector.multi_reduction <add>, %2, %cst [1] : vector<16x1024xf32> to vector<16xf32>
    %4 = vector.shape_cast %3 : vector<16xf32> to vector<16x1xf32>
    %cst_1 = arith.constant 1.024000e+03 : f32
    %5 = vector.broadcast %cst_1 : f32 to vector<16x1xf32>
    %6 = arith.divf %4, %5 : vector<16x1xf32>
    %7 = math.sqrt %6 : vector<16x1xf32>
    %cst_2 = arith.constant 9.99999993E-9 : f32
    %8 = vector.broadcast %cst_2 : f32 to vector<16x1xf32>
    %9 = arith.addf %7, %8 : vector<16x1xf32>
    %cst_3 = arith.constant 1.000000e+00 : f32
    %10 = vector.broadcast %cst_3 : f32 to vector<16x1xf32>
    %11 = arith.divf %10, %9 : vector<16x1xf32>
    %12 = vector.broadcast %11 : vector<16x1xf32> to vector<16x1024xf32>
    %13 = arith.mulf %1, %12 : vector<16x1024xf32>
    %c0_4 = arith.constant 0 : index
    %c0_5 = arith.constant 0 : index
    %14 = vector.load %arg2[%c0_4, %c0_5] : memref<1024x256xbf16, #tpu.memory_space<vmem>>, vector<1024x256xbf16>
    %c0_6 = arith.constant 0 : index
    %c0_7 = arith.constant 0 : index
    %15 = vector.load %arg3[%c0_6, %c0_7] : memref<1x256xf32, #tpu.memory_space<vmem>>, vector<1x256xf32>
    %16 = arith.truncf %13 : vector<16x1024xf32> to vector<16x1024xbf16>
    %cst_8 = arith.constant dense<0.000000e+00> : vector<16x256xf32>
    %17 = tpu.matmul %16, %14, %cst_8 {dimension_numbers = #tpu.dot_dimension_numbers<[1], [0], [0], [1], [0, 0, 1, 1], [], []>} : vector<16x1024xbf16>, vector<1024x256xbf16>, vector<16x256xf32> -> vector<16x256xf32>
    %18 = vector.broadcast %15 : vector<1x256xf32> to vector<16x256xf32>
    %19 = arith.addf %17, %18 : vector<16x256xf32>
    %cst_9 = arith.constant 0.000000e+00 : f32
    %20 = vector.broadcast %cst_9 : f32 to vector<16x256xf32>
    %21 = arith.maximumf %19, %20 : vector<16x256xf32>
    %22 = arith.mulf %21, %21 : vector<16x256xf32>
    %cst_10 = arith.constant dense<0.000000e+00> : vector<16xf32>
    %23 = vector.multi_reduction <add>, %22, %cst_10 [1] : vector<16x256xf32> to vector<16xf32>
    %24 = vector.shape_cast %23 : vector<16xf32> to vector<16x1xf32>
    %cst_11 = arith.constant 2.560000e+02 : f32
    %25 = vector.broadcast %cst_11 : f32 to vector<16x1xf32>
    %26 = arith.divf %24, %25 : vector<16x1xf32>
    %27 = math.sqrt %26 : vector<16x1xf32>
    %cst_12 = arith.constant 9.99999993E-9 : f32
    %28 = vector.broadcast %cst_12 : f32 to vector<16x1xf32>
    %29 = arith.addf %27, %28 : vector<16x1xf32>
    %cst_13 = arith.constant 1.000000e+00 : f32
    %30 = vector.broadcast %cst_13 : f32 to vector<16x1xf32>
    %31 = arith.divf %30, %29 : vector<16x1xf32>
    %32 = vector.broadcast %31 : vector<16x1xf32> to vector<16x256xf32>
    %33 = arith.mulf %21, %32 : vector<16x256xf32>
    %c0_14 = arith.constant 0 : index
    %c0_15 = arith.constant 0 : index
    %34 = vector.load %arg4[%c0_14, %c0_15] : memref<256x256xbf16, #tpu.memory_space<vmem>>, vector<256x256xbf16>
    %c0_16 = arith.constant 0 : index
    %c0_17 = arith.constant 0 : index
    %35 = vector.load %arg5[%c0_16, %c0_17] : memref<1x256xf32, #tpu.memory_space<vmem>>, vector<1x256xf32>
    %36 = arith.truncf %33 : vector<16x256xf32> to vector<16x256xbf16>
    %cst_18 = arith.constant dense<0.000000e+00> : vector<16x256xf32>
    %37 = tpu.matmul %36, %34, %cst_18 {dimension_numbers = #tpu.dot_dimension_numbers<[1], [0], [0], [1], [0, 0, 1, 1], [], []>} : vector<16x256xbf16>, vector<256x256xbf16>, vector<16x256xf32> -> vector<16x256xf32>
    %38 = vector.broadcast %35 : vector<1x256xf32> to vector<16x256xf32>
    %39 = arith.addf %37, %38 : vector<16x256xf32>
    %cst_19 = arith.constant 0.000000e+00 : f32
    %40 = vector.broadcast %cst_19 : f32 to vector<16x256xf32>
    %41 = arith.maximumf %39, %40 : vector<16x256xf32>
    %42 = arith.mulf %41, %41 : vector<16x256xf32>
    %cst_20 = arith.constant dense<0.000000e+00> : vector<16xf32>
    %43 = vector.multi_reduction <add>, %42, %cst_20 [1] : vector<16x256xf32> to vector<16xf32>
    %44 = vector.shape_cast %43 : vector<16xf32> to vector<16x1xf32>
    %cst_21 = arith.constant 2.560000e+02 : f32
    %45 = vector.broadcast %cst_21 : f32 to vector<16x1xf32>
    %46 = arith.divf %44, %45 : vector<16x1xf32>
    %47 = math.sqrt %46 : vector<16x1xf32>
    %cst_22 = arith.constant 9.99999993E-9 : f32
    %48 = vector.broadcast %cst_22 : f32 to vector<16x1xf32>
    %49 = arith.addf %47, %48 : vector<16x1xf32>
    %cst_23 = arith.constant 1.000000e+00 : f32
    %50 = vector.broadcast %cst_23 : f32 to vector<16x1xf32>
    %51 = arith.divf %50, %49 : vector<16x1xf32>
    %52 = vector.broadcast %51 : vector<16x1xf32> to vector<16x256xf32>
    %53 = arith.mulf %41, %52 : vector<16x256xf32>
    %c0_24 = arith.constant 0 : index
    %c0_25 = arith.constant 0 : index
    %54 = vector.load %arg6[%c0_24, %c0_25] : memref<256x128xbf16, #tpu.memory_space<vmem>>, vector<256x128xbf16>
    %c0_26 = arith.constant 0 : index
    %c0_27 = arith.constant 0 : index
    %55 = vector.load %arg7[%c0_26, %c0_27] : memref<1x128xf32, #tpu.memory_space<vmem>>, vector<1x128xf32>
    %56 = arith.truncf %53 : vector<16x256xf32> to vector<16x256xbf16>
    %cst_28 = arith.constant dense<0.000000e+00> : vector<16x128xf32>
    %57 = tpu.matmul %56, %54, %cst_28 {dimension_numbers = #tpu.dot_dimension_numbers<[1], [0], [0], [1], [0, 0, 1, 1], [], []>} : vector<16x256xbf16>, vector<256x128xbf16>, vector<16x128xf32> -> vector<16x128xf32>
    %58 = vector.broadcast %55 : vector<1x128xf32> to vector<16x128xf32>
    %59 = arith.addf %57, %58 : vector<16x128xf32>
    %cst_29 = arith.constant 0.000000e+00 : f32
    %60 = vector.broadcast %cst_29 : f32 to vector<16x128xf32>
    %61 = arith.maximumf %59, %60 : vector<16x128xf32>
    %62 = arith.mulf %61, %61 : vector<16x128xf32>
    %cst_30 = arith.constant dense<0.000000e+00> : vector<16xf32>
    %63 = vector.multi_reduction <add>, %62, %cst_30 [1] : vector<16x128xf32> to vector<16xf32>
    %64 = vector.shape_cast %63 : vector<16xf32> to vector<16x1xf32>
    %cst_31 = arith.constant 1.280000e+02 : f32
    %65 = vector.broadcast %cst_31 : f32 to vector<16x1xf32>
    %66 = arith.divf %64, %65 : vector<16x1xf32>
    %67 = math.sqrt %66 : vector<16x1xf32>
    %cst_32 = arith.constant 9.99999993E-9 : f32
    %68 = vector.broadcast %cst_32 : f32 to vector<16x1xf32>
    %69 = arith.addf %67, %68 : vector<16x1xf32>
    %cst_33 = arith.constant 1.000000e+00 : f32
    %70 = vector.broadcast %cst_33 : f32 to vector<16x1xf32>
    %71 = arith.divf %70, %69 : vector<16x1xf32>
    %72 = vector.broadcast %71 : vector<16x1xf32> to vector<16x128xf32>
    %73 = arith.mulf %61, %72 : vector<16x128xf32>
    %74 = arith.truncf %73 : vector<16x128xf32> to vector<16x128xbf16>
    %c0_34 = arith.constant 0 : index
    %c0_35 = arith.constant 0 : index
    %75 = vector.load %arg8[%c0_34, %c0_35] : memref<16x128xbf16, #tpu.memory_space<vmem>>, vector<16x128xbf16>
    tpu.vector_store %arg8[%c0_34, %c0_35], %74 {strides = array<i32>} : memref<16x128xbf16, #tpu.memory_space<vmem>>, vector<16x128xbf16>,
    return
  }
  func.func @transform_0(%arg0: i32) -> (i32, i32) {
    %c0_i32 = arith.constant 0 : i32
    %c0_i32_0 = arith.constant 0 : i32
    return %arg0, %c0_i32 : i32, i32
  }
  func.func @transform_1(%arg0: i32) -> (i32, i32) {
    %c0_i32 = arith.constant 0 : i32
    %c0_i32_0 = arith.constant 0 : i32
    %c0_i32_1 = arith.constant 0 : i32
    return %c0_i32, %c0_i32_0 : i32, i32
  }
  func.func @transform_2(%arg0: i32) -> (i32, i32) {
    %c0_i32 = arith.constant 0 : i32
    %c0_i32_0 = arith.constant 0 : i32
    %c0_i32_1 = arith.constant 0 : i32
    return %c0_i32, %c0_i32_0 : i32, i32
  }
  func.func @transform_3(%arg0: i32) -> (i32, i32) {
    %c0_i32 = arith.constant 0 : i32
    %c0_i32_0 = arith.constant 0 : i32
    %c0_i32_1 = arith.constant 0 : i32
    return %c0_i32, %c0_i32_0 : i32, i32
  }
  func.func @transform_4(%arg0: i32) -> (i32, i32) {
    %c0_i32 = arith.constant 0 : i32
    %c0_i32_0 = arith.constant 0 : i32
    %c0_i32_1 = arith.constant 0 : i32
    return %c0_i32, %c0_i32_0 : i32, i32
  }
  func.func @transform_5(%arg0: i32) -> (i32, i32) {
    %c0_i32 = arith.constant 0 : i32
    %c0_i32_0 = arith.constant 0 : i32
    %c0_i32_1 = arith.constant 0 : i32
    return %c0_i32, %c0_i32_0 : i32, i32
  }
  func.func @transform_6(%arg0: i32) -> (i32, i32) {
    %c0_i32 = arith.constant 0 : i32
    %c0_i32_0 = arith.constant 0 : i32
    %c0_i32_1 = arith.constant 0 : i32
    return %c0_i32, %c0_i32_0 : i32, i32
  }
  func.func @transform_7(%arg0: i32) -> (i32, i32) {
    %c0_i32 = arith.constant 0 : i32
    %c0_i32_0 = arith.constant 0 : i32
    return %arg0, %c0_i32 : i32, i32
  }
}

</mosaic_0001>

<llo_original>
// kernel: tpu_custom_call.1
$region0: #{tpu_custom_call.1}
  #allocation0 [shape = 'u32[]', space=smem, size = 0x4, offset = 0x4, fixed_abs, tag = 'smem constant byte address 0x4 - core index']
  #allocation1 [shape = 'u32[72,128]{1,0:T(1,128)}', space=vmem, size = 0x9000, scoped, tag = 'internal scratch']
  %s0 = inlined_call_operand.hbm [shape: bf16[16,1024], index: 0, kind: input, shape index: {}]
  %s1 = inlined_call_operand.hbm [shape: bf16[1024,256], index: 1, kind: input, shape index: {}]
  %s2 = inlined_call_operand.hbm [shape: f32[1,256], index: 2, kind: input, shape index: {}]
  %s3 = inlined_call_operand.hbm [shape: bf16[256,256], index: 3, kind: input, shape index: {}]
  %s4 = inlined_call_operand.vmem [shape: f32[1,256], index: 4, kind: input, shape index: {}]
  %s5 = inlined_call_operand.hbm [shape: bf16[256,128], index: 5, kind: input, shape index: {}]
  %s6 = inlined_call_operand.vmem [shape: f32[1,128], index: 6, kind: input, shape index: {}]
  %s7 = inlined_call_operand.hbm [shape: bf16[16,128], index: 7, kind: output, shape index: {}]
  %s8 = sld [smem:[#allocation0]]
  $region58: #{tpu_custom_call.1} parent=0
    _
  %s10 = ssub.s32 1, %s8
  %s11 = scalar_select 0, %s10, %s8
  $region1: #{tpu_custom_call.1} parent=0
    #allocation2 [shape = 'u8[32768]{0}', space=vmem, size = 0x8000, scoped, tag = 'input window, operand 0, single buffered']
    #allocation3 [shape = 's32[1]{0}', space=sflag, size = 0x4, scoped, tag = 'scoped memory for tpu_custom_call.1']
    #allocation4 [shape = 's32[1]{0}', space=sflag, size = 0x4, scoped, tag = 'scoped memory for tpu_custom_call.1']
    #allocation5 [shape = 'u8[524288]{0}', space=vmem, size = 0x80000, scoped, tag = 'input window, operand 1, single buffered']
    #allocation6 [shape = 's32[1]{0}', space=sflag, size = 0x4, scoped, tag = 'scoped memory for tpu_custom_call.1']
    #allocation7 [shape = 'u8[1024]{0}', space=vmem, size = 0x400, scoped, tag = 'input window, operand 2, single buffered']
    #allocation8 [shape = 'u8[131072]{0}', space=vmem, size = 0x20000, scoped, tag = 'input window, operand 3, single buffered']
    #allocation9 [shape = 's32[1]{0}', space=sflag, size = 0x4, scoped, tag = 'scoped memory for tpu_custom_call.1']
    #allocation10 [shape = 'u8[65536]{0}', space=vmem, size = 0x10000, scoped, tag = 'input window, operand 5, single buffered']
    #allocation11 [shape = 'u8[4096]{0}', space=vmem, size = 0x1000, scoped, tag = 'output window, operand 0, single buffered']
    %12 = vsyncpa [#allocation3], 0
    %13 = vsyncpa [#allocation6], 0
    %14 = vsyncpa [#allocation9], 0
    %15 = vsyncpa [#allocation4], 0
    // Predicated region
    $region2: #{tpu_custom_call.1} parent=1 // pred_check
      _
    $region3: #{tpu_custom_call.1} parent=1 // pred_check_branch
      %17 = sbr.rel (0) target = $region5
    $region4: #{tpu_custom_call.1} parent=1 // pred_region
      %19 = vsyncadd [#allocation3], 0
      %s20 = sshll.u32 %s0, 4
      %s21 = int_to_ptr.hbm [resolvable:$true] %s20
      %s22 = sshll.u32 [#allocation2], 4
      %s23 = int_to_ptr.vmem [resolvable:$true] %s22
      %28 = dma.hbm_to_vmem [thread:$0]  %s21, 1024, %s23, [#allocation3], 512, 512, 32
    $region5: #{tpu_custom_call.1} parent=1 // pred_fallthru
      _
    // Predicated region
    $region6: #{tpu_custom_call.1} parent=1 // pred_check
      _
    $region7: #{tpu_custom_call.1} parent=1 // pred_check_branch
      %30 = sbr.rel (0) target = $region9
    $region8: #{tpu_custom_call.1} parent=1 // pred_region
      %32 = vsyncadd [#allocation6], 0
      %s33 = sshll.u32 %s1, 4
      %s34 = int_to_ptr.hbm [resolvable:$true] %s33
      %s35 = sshll.u32 [#allocation5], 4
      %s36 = int_to_ptr.vmem [resolvable:$true] %s35
      %41 = dma.hbm_to_vmem [thread:$0]  %s34, 16384, %s36, [#allocation6], 128, 128, 8
    $region9: #{tpu_custom_call.1} parent=1 // pred_fallthru
      _
    // Predicated region
    $region10: #{tpu_custom_call.1} parent=1 // pred_check
      _
    $region11: #{tpu_custom_call.1} parent=1 // pred_check_branch
      %43 = sbr.rel (0) target = $region13
    $region12: #{tpu_custom_call.1} parent=1 // pred_region
      %45 = vsyncadd [#allocation6], 0
      %s47 = sshll.u32 %s2, 4
      %s48 = int_to_ptr.hbm [resolvable:$true] %s47
      %s49 = sshll.u32 [#allocation7], 4
      %s50 = int_to_ptr.vmem [resolvable:$true] %s49
      %52 = dma.hbm_to_vmem [thread:$0]  %s48, 32, %s50, [#allocation6]
    $region13: #{tpu_custom_call.1} parent=1 // pred_fallthru
      _
    // Predicated region
    $region14: #{tpu_custom_call.1} parent=1 // pred_check
      _
    $region15: #{tpu_custom_call.1} parent=1 // pred_check_branch
      %54 = sbr.rel (0) target = $region17
    $region16: #{tpu_custom_call.1} parent=1 // pred_region
      %56 = vsyncadd [#allocation9], 0
      %s57 = sshll.u32 %s3, 4
      %s58 = int_to_ptr.hbm [resolvable:$true] %s57
      %s59 = sshll.u32 [#allocation8], 4
      %s60 = int_to_ptr.vmem [resolvable:$true] %s59
      %65 = dma.hbm_to_vmem [thread:$0]  %s58, 4096, %s60, [#allocation9], 128, 128, 8
    $region17: #{tpu_custom_call.1} parent=1 // pred_fallthru
      _
    // Predicated region
    $region18: #{tpu_custom_call.1} parent=1 // pred_check
      _
    $region19: #{tpu_custom_call.1} parent=1 // pred_check_branch
      %67 = sbr.rel (0) target = $region21
    $region20: #{tpu_custom_call.1} parent=1 // pred_region
      _
    $region21: #{tpu_custom_call.1} parent=1 // pred_fallthru
      _
    // Predicated region
    $region22: #{tpu_custom_call.1} parent=1 // pred_check
      _
    $region23: #{tpu_custom_call.1} parent=1 // pred_check_branch
      %69 = sbr.rel (0) target = $region25
    $region24: #{tpu_custom_call.1} parent=1 // pred_region
      %71 = vsyncadd [#allocation9], 0
      %s72 = sshll.u32 %s5, 4
      %s73 = int_to_ptr.hbm [resolvable:$true] %s72
      %s74 = sshll.u32 [#allocation10], 4
      %s75 = int_to_ptr.vmem [resolvable:$true] %s74
      %80 = dma.hbm_to_vmem [thread:$0]  %s73, 2048, %s75, [#allocation9], 64, 64, 4
    $region25: #{tpu_custom_call.1} parent=1 // pred_fallthru
      _
    // Predicated region
    $region26: #{tpu_custom_call.1} parent=1 // pred_check
      _
    $region27: #{tpu_custom_call.1} parent=1 // pred_check_branch
      %82 = sbr.rel (0) target = $region29
    $region28: #{tpu_custom_call.1} parent=1 // pred_region
      _
    $region29: #{tpu_custom_call.1} parent=1 // pred_fallthru
      _
    // Predicated region
    $region30: #{tpu_custom_call.1} parent=1 // pred_check
      _
    $region31: #{tpu_custom_call.1} parent=1 // pred_check_branch
      %84 = sbr.rel (0) target = $region33
    $region32: #{tpu_custom_call.1} parent=1 // pred_region
      %86 = dma.done [#allocation3], 1024
    $region33: #{tpu_custom_call.1} parent=1 // pred_fallthru
      _
    // Predicated region
    $region34: #{tpu_custom_call.1} parent=1 // pred_check
      _
    $region35: #{tpu_custom_call.1} parent=1 // pred_check_branch
      %88 = sbr.rel (0) target = $region37
    $region36: #{tpu_custom_call.1} parent=1 // pred_region
      %90 = dma.done [#allocation6], 16384
    $region37: #{tpu_custom_call.1} parent=1 // pred_fallthru
      _
    // Predicated region
    $region38: #{tpu_custom_call.1} parent=1 // pred_check
      _
    $region39: #{tpu_custom_call.1} parent=1 // pred_check_branch
      %92 = sbr.rel (0) target = $region41
    $region40: #{tpu_custom_call.1} parent=1 // pred_region
      %94 = dma.done [#allocation6], 32
    $region41: #{tpu_custom_call.1} parent=1 // pred_fallthru
      _
    // Predicated region
    $region42: #{tpu_custom_call.1} parent=1 // pred_check
      _
    $region43: #{tpu_custom_call.1} parent=1 // pred_check_branch
      %96 = sbr.rel (0) target = $region45
    $region44: #{tpu_custom_call.1} parent=1 // pred_region
      %98 = dma.done [#allocation9], 4096
    $region45: #{tpu_custom_call.1} parent=1 // pred_fallthru
      _
    // Predicated region
    $region46: #{tpu_custom_call.1} parent=1 // pred_check
      _
    $region47: #{tpu_custom_call.1} parent=1 // pred_check_branch
      %100 = sbr.rel (0) target = $region49
    $region48: #{tpu_custom_call.1} parent=1 // pred_region
      %102 = dma.done [#allocation9], 2048
    $region49: #{tpu_custom_call.1} parent=1 // pred_fallthru
      _
    %v103 = vld [vmem:[#allocation2] sm:$0xff]
    %v104 = vld [vmem:[#allocation2 + $0x8] sm:$0xff]
    %v105 = vld [vmem:[#allocation2 + $0x10] sm:$0xff]
    %v106 = vld [vmem:[#allocation2 + $0x18] sm:$0xff]
    %v107 = vld [vmem:[#allocation2 + $0x20] sm:$0xff]
    %v108 = vld [vmem:[#allocation2 + $0x28] sm:$0xff]
    %v109 = vld [vmem:[#allocation2 + $0x30] sm:$0xff]
    %v110 = vld [vmem:[#allocation2 + $0x38] sm:$0xff]
    %v111 = vunpack.c.l.bf16 %v103
    %v112 = vunpack.c.h.bf16 %v103
    %v113 = vunpack.c.l.bf16 %v104
    %v114 = vunpack.c.h.bf16 %v104
    %v115 = vunpack.c.l.bf16 %v105
    %v116 = vunpack.c.h.bf16 %v105
    %v117 = vunpack.c.l.bf16 %v106
    %v118 = vunpack.c.h.bf16 %v106
    %v119 = vunpack.c.l.bf16 %v107
    %v120 = vunpack.c.h.bf16 %v107
    %v121 = vunpack.c.l.bf16 %v108
    %v122 = vunpack.c.h.bf16 %v108
    %v123 = vunpack.c.l.bf16 %v109
    %v124 = vunpack.c.h.bf16 %v109
    %v125 = vunpack.c.l.bf16 %v110
    %v126 = vunpack.c.h.bf16 %v110
    %v127 = vmul.f32 %v111, %v111
    %v128 = vmul.f32 %v112, %v112
    %v129 = vmul.f32 %v113, %v113
    %v130 = vmul.f32 %v114, %v114
    %v131 = vmul.f32 %v115, %v115
    %v132 = vmul.f32 %v116, %v116
    %v133 = vmul.f32 %v117, %v117
    %v134 = vmul.f32 %v118, %v118
    %v135 = vmul.f32 %v119, %v119
    %v136 = vmul.f32 %v120, %v120
    %v137 = vmul.f32 %v121, %v121
    %v138 = vmul.f32 %v122, %v122
    %v139 = vmul.f32 %v123, %v123
    %v140 = vmul.f32 %v124, %v124
    %v141 = vmul.f32 %v125, %v125
    %v142 = vmul.f32 %v126, %v126
    %v143 = vadd.f32 %v127, %v128
    %v144 = vadd.f32 %v143, %v129
    %v145 = vadd.f32 %v144, %v130
    %v146 = vadd.f32 %v145, %v131
    %v147 = vadd.f32 %v146, %v132
    %v148 = vadd.f32 %v147, %v133
    %v149 = vadd.f32 %v148, %v134
    %150 = vadd.xlane.f32.xlu0 %v149
    %v151 = vpop.xlane.xlu0 %150
    %v152 = vadd.f32 %v135, %v136
    %v153 = vadd.f32 %v152, %v137
    %v154 = vadd.f32 %v153, %v138
    %v155 = vadd.f32 %v154, %v139
    %v156 = vadd.f32 %v155, %v140
    %v157 = vadd.f32 %v156, %v141
    %v158 = vadd.f32 %v157, %v142
    %159 = vadd.xlane.f32.xlu0 %v158
    %v160 = vpop.xlane.xlu0 %159
    %v161 = vrcp.pop 1024.0
    %v162 = vmul.f32 1024.0, %v161
    %v163 = vsub.f32 1.0, %v162
    %v164 = vmul.f32 %v161, %v163
    %v165 = vadd.f32 %v161, %v164
    %vm166 = vweird.f32 %v161
    %v167 = vsel %vm166, %v161, %v165
    %v168 = vmul.f32 %v151, %v167
    %v169 = vmul.f32 %v160, %v167
    %v170 = vrsqrt.pop %v168
    %v171 = vmul.f32 %v170, %v168
    %v172 = vmul.f32 %v171, %v170
    %v173 = vmul.f32 0.5, %v172
    %v174 = vsub.f32 1.5, %v173
    %v175 = vmul.f32 %v170, %v174
    %v176 = vmul.f32 %v168, %v175
    %vm177 = vcmp.eq.f32.partialorder %v168, inf
    %v178 = vsel %vm177, %v168, %v176
    %vm179 = vcmp.eq.f32.partialorder %v168, 0.0
    %v180 = vand.u32 %v168, 2147483648
    %v181 = vsel %vm179, %v180, %v178
    %v182 = vrsqrt.pop %v169
    %v183 = vmul.f32 %v182, %v169
    %v184 = vmul.f32 %v183, %v182
    %v185 = vmul.f32 0.5, %v184
    %v186 = vsub.f32 1.5, %v185
    %v187 = vmul.f32 %v182, %v186
    %v188 = vmul.f32 %v169, %v187
    %vm189 = vcmp.eq.f32.partialorder %v169, inf
    %v190 = vsel %vm189, %v169, %v188
    %vm191 = vcmp.eq.f32.partialorder %v169, 0.0
    %v192 = vand.u32 %v169, 2147483648
    %v193 = vsel %vm191, %v192, %v190
    %v194 = vadd.f32 %v181, 1e-08
    %v195 = vadd.f32 %v193, 1e-08
    %v196 = vrcp.pop %v194
    %v197 = vmul.f32 %v194, %v196
    %v198 = vsub.f32 1.0, %v197
    %v199 = vmul.f32 %v196, %v198
    %v200 = vadd.f32 %v196, %v199
    %vm201 = vweird.f32 %v194
    %vm202 = vweird.f32 %v196
    %vm203 = vmor %vm201, %vm202
    %v204 = vsel %vm203, %v196, %v200
    %v205 = vand.u32 2147483647, %v194
    %vm206 = vcmp.eq.f32.partialorder %v205, 8.507059e+37
    %v207 = vand.u32 %v194, 2147483648
    %v208 = vor.u32 1.1754944e-38, %v207
    %v209 = vsel %vm206, %v208, %v204
    %v210 = vmul.f32 1.0, %v209
    %v211 = vrcp.pop %v195
    %v212 = vmul.f32 %v195, %v211
    %v213 = vsub.f32 1.0, %v212
    %v214 = vmul.f32 %v211, %v213
    %v215 = vadd.f32 %v211, %v214
    %vm216 = vweird.f32 %v195
    %vm217 = vweird.f32 %v211
    %vm218 = vmor %vm216, %vm217
    %v219 = vsel %vm218, %v211, %v215
    %v220 = vand.u32 2147483647, %v195
    %vm221 = vcmp.eq.f32.partialorder %v220, 8.507059e+37
    %v222 = vand.u32 %v195, 2147483648
    %v223 = vor.u32 1.1754944e-38, %v222
    %v224 = vsel %vm221, %v223, %v219
    %v225 = vmul.f32 1.0, %v224
    %v226 = vmul.f32 %v111, %v210
    %v227 = vmul.f32 %v112, %v210
    %v228 = vmul.f32 %v113, %v210
    %v229 = vmul.f32 %v114, %v210
    %v230 = vmul.f32 %v115, %v210
    %v231 = vmul.f32 %v116, %v210
    %v232 = vmul.f32 %v117, %v210
    %v233 = vmul.f32 %v118, %v210
    %v234 = vmul.f32 %v119, %v225
    %v235 = vmul.f32 %v120, %v225
    %v236 = vmul.f32 %v121, %v225
    %v237 = vmul.f32 %v122, %v225
    %v238 = vmul.f32 %v123, %v225
    %v239 = vmul.f32 %v124, %v225
    %v240 = vmul.f32 %v125, %v225
    %v241 = vmul.f32 %v126, %v225
    %v242 = vld [vmem:[#allocation5] sm:$0xff]
    %v243 = vld [vmem:[#allocation5 + $0x8] sm:$0xff]
    %v244 = vld [vmem:[#allocation5 + $0x10] sm:$0xff]
    %v245 = vld [vmem:[#allocation5 + $0x18] sm:$0xff]
    %v246 = vld [vmem:[#allocation5 + $0x20] sm:$0xff]
    %v247 = vld [vmem:[#allocation5 + $0x28] sm:$0xff]
    %v248 = vld [vmem:[#allocation5 + $0x30] sm:$0xff]
    %v249 = vld [vmem:[#allocation5 + $0x38] sm:$0xff]
    %v250 = vld [vmem:[#allocation5 + $0x40] sm:$0xff]
    %v251 = vld [vmem:[#allocation5 + $0x48] sm:$0xff]
    %v252 = vld [vmem:[#allocation5 + $0x50] sm:$0xff]
    %v253 = vld [vmem:[#allocation5 + $0x58] sm:$0xff]
    %v254 = vld [vmem:[#allocation5 + $0x60] sm:$0xff]
    %v255 = vld [vmem:[#allocation5 + $0x68] sm:$0xff]
    %v256 = vld [vmem:[#allocation5 + $0x70] sm:$0xff]
    %v257 = vld [vmem:[#allocation5 + $0x78] sm:$0xff]
    %v258 = vld [vmem:[#allocation5 + $0x80] sm:$0xff]
    %v259 = vld [vmem:[#allocation5 + $0x88] sm:$0xff]
    %v260 = vld [vmem:[#allocation5 + $0x90] sm:$0xff]
    %v261 = vld [vmem:[#allocation5 + $0x98] sm:$0xff]
    %v262 = vld [vmem:[#allocation5 + $0xa0] sm:$0xff]
    %v263 = vld [vmem:[#allocation5 + $0xa8] sm:$0xff]
    %v264 = vld [vmem:[#allocation5 + $0xb0] sm:$0xff]
    %v265 = vld [vmem:[#allocation5 + $0xb8] sm:$0xff]
    %v266 = vld [vmem:[#allocation5 + $0xc0] sm:$0xff]
    %v267 = vld [vmem:[#allocation5 + $0xc8] sm:$0xff]
    %v268 = vld [vmem:[#allocation5 + $0xd0] sm:$0xff]
    %v269 = vld [vmem:[#allocation5 + $0xd8] sm:$0xff]
    %v270 = vld [vmem:[#allocation5 + $0xe0] sm:$0xff]
    %v271 = vld [vmem:[#allocation5 + $0xe8] sm:$0xff]
    %v272 = vld [vmem:[#allocation5 + $0xf0] sm:$0xff]
    %v273 = vld [vmem:[#allocation5 + $0xf8] sm:$0xff]
    %v274 = vld [vmem:[#allocation5 + $0x100] sm:$0xff]
    %v275 = vld [vmem:[#allocation5 + $0x108] sm:$0xff]
    %v276 = vld [vmem:[#allocation5 + $0x110] sm:$0xff]
    %v277 = vld [vmem:[#allocation5 + $0x118] sm:$0xff]
    %v278 = vld [vmem:[#allocation5 + $0x120] sm:$0xff]
    %v279 = vld [vmem:[#allocation5 + $0x128] sm:$0xff]
    %v280 = vld [vmem:[#allocation5 + $0x130] sm:$0xff]
    %v281 = vld [vmem:[#allocation5 + $0x138] sm:$0xff]
    %v282 = vld [vmem:[#allocation5 + $0x140] sm:$0xff]
    %v283 = vld [vmem:[#allocation5 + $0x148] sm:$0xff]
    %v284 = vld [vmem:[#allocation5 + $0x150] sm:$0xff]
    %v285 = vld [vmem:[#allocation5 + $0x158] sm:$0xff]
    %v286 = vld [vmem:[#allocation5 + $0x160] sm:$0xff]
    %v287 = vld [vmem:[#allocation5 + $0x168] sm:$0xff]
    %v288 = vld [vmem:[#allocation5 + $0x170] sm:$0xff]
    %v289 = vld [vmem:[#allocation5 + $0x178] sm:$0xff]
    %v290 = vld [vmem:[#allocation5 + $0x180] sm:$0xff]
    %v291 = vld [vmem:[#allocation5 + $0x188] sm:$0xff]
    %v292 = vld [vmem:[#allocation5 + $0x190] sm:$0xff]
    %v293 = vld [vmem:[#allocation5 + $0x198] sm:$0xff]
    %v294 = vld [vmem:[#allocation5 + $0x1a0] sm:$0xff]
    %v295 = vld [vmem:[#allocation5 + $0x1a8] sm:$0xff]
    %v296 = vld [vmem:[#allocation5 + $0x1b0] sm:$0xff]
    %v297 = vld [vmem:[#allocation5 + $0x1b8] sm:$0xff]
    %v298 = vld [vmem:[#allocation5 + $0x1c0] sm:$0xff]
    %v299 = vld [vmem:[#allocation5 + $0x1c8] sm:$0xff]
    %v300 = vld [vmem:[#allocation5 + $0x1d0] sm:$0xff]
    %v301 = vld [vmem:[#allocation5 + $0x1d8] sm:$0xff]
    %v302 = vld [vmem:[#allocation5 + $0x1e0] sm:$0xff]
    %v303 = vld [vmem:[#allocation5 + $0x1e8] sm:$0xff]
    %v304 = vld [vmem:[#allocation5 + $0x1f0] sm:$0xff]
    %v305 = vld [vmem:[#allocation5 + $0x1f8] sm:$0xff]
    %v306 = vld [vmem:[#allocation5 + $0x200] sm:$0xff]
    %v307 = vld [vmem:[#allocation5 + $0x208] sm:$0xff]
    %v308 = vld [vmem:[#allocation5 + $0x210] sm:$0xff]
    %v309 = vld [vmem:[#allocation5 + $0x218] sm:$0xff]
    %v310 = vld [vmem:[#allocation5 + $0x220] sm:$0xff]
    %v311 = vld [vmem:[#allocation5 + $0x228] sm:$0xff]
    %v312 = vld [vmem:[#allocation5 + $0x230] sm:$0xff]
    %v313 = vld [vmem:[#allocation5 + $0x238] sm:$0xff]
    %v314 = vld [vmem:[#allocation5 + $0x240] sm:$0xff]
    %v315 = vld [vmem:[#allocation5 + $0x248] sm:$0xff]
    %v316 = vld [vmem:[#allocation5 + $0x250] sm:$0xff]
    %v317 = vld [vmem:[#allocation5 + $0x258] sm:$0xff]
    %v318 = vld [vmem:[#allocation5 + $0x260] sm:$0xff]
    %v319 = vld [vmem:[#allocation5 + $0x268] sm:$0xff]
    %v320 = vld [vmem:[#allocation5 + $0x270] sm:$0xff]
    %v321 = vld [vmem:[#allocation5 + $0x278] sm:$0xff]
    %v322 = vld [vmem:[#allocation5 + $0x280] sm:$0xff]
    %v323 = vld [vmem:[#allocation5 + $0x288] sm:$0xff]
    %v324 = vld [vmem:[#allocation5 + $0x290] sm:$0xff]
    %v325 = vld [vmem:[#allocation5 + $0x298] sm:$0xff]
    %v326 = vld [vmem:[#allocation5 + $0x2a0] sm:$0xff]
    %v327 = vld [vmem:[#allocation5 + $0x2a8] sm:$0xff]
    %v328 = vld [vmem:[#allocation5 + $0x2b0] sm:$0xff]
    %v329 = vld [vmem:[#allocation5 + $0x2b8] sm:$0xff]
    %v330 = vld [vmem:[#allocation5 + $0x2c0] sm:$0xff]
    %v331 = vld [vmem:[#allocation5 + $0x2c8] sm:$0xff]
    %v332 = vld [vmem:[#allocation5 + $0x2d0] sm:$0xff]
    %v333 = vld [vmem:[#allocation5 + $0x2d8] sm:$0xff]
    %v334 = vld [vmem:[#allocation5 + $0x2e0] sm:$0xff]
    %v335 = vld [vmem:[#allocation5 + $0x2e8] sm:$0xff]
    %v336 = vld [vmem:[#allocation5 + $0x2f0] sm:$0xff]
    %v337 = vld [vmem:[#allocation5 + $0x2f8] sm:$0xff]
    %v338 = vld [vmem:[#allocation5 + $0x300] sm:$0xff]
    %v339 = vld [vmem:[#allocation5 + $0x308] sm:$0xff]
    %v340 = vld [vmem:[#allocation5 + $0x310] sm:$0xff]
    %v341 = vld [vmem:[#allocation5 + $0x318] sm:$0xff]
    %v342 = vld [vmem:[#allocation5 + $0x320] sm:$0xff]
    %v343 = vld [vmem:[#allocation5 + $0x328] sm:$0xff]
    %v344 = vld [vmem:[#allocation5 + $0x330] sm:$0xff]
    %v345 = vld [vmem:[#allocation5 + $0x338] sm:$0xff]
    %v346 = vld [vmem:[#allocation5 + $0x340] sm:$0xff]
    %v347 = vld [vmem:[#allocation5 + $0x348] sm:$0xff]
    %v348 = vld [vmem:[#allocation5 + $0x350] sm:$0xff]
    %v349 = vld [vmem:[#allocation5 + $0x358] sm:$0xff]
    %v350 = vld [vmem:[#allocation5 + $0x360] sm:$0xff]
    %v351 = vld [vmem:[#allocation5 + $0x368] sm:$0xff]
    %v352 = vld [vmem:[#allocation5 + $0x370] sm:$0xff]
    %v353 = vld [vmem:[#allocation5 + $0x378] sm:$0xff]
    %v354 = vld [vmem:[#allocation5 + $0x380] sm:$0xff]
    %v355 = vld [vmem:[#allocation5 + $0x388] sm:$0xff]
    %v356 = vld [vmem:[#allocation5 + $0x390] sm:$0xff]
    %v357 = vld [vmem:[#allocation5 + $0x398] sm:$0xff]
    %v358 = vld [vmem:[#allocation5 + $0x3a0] sm:$0xff]
    %v359 = vld [vmem:[#allocation5 + $0x3a8] sm:$0xff]
    %v360 = vld [vmem:[#allocation5 + $0x3b0] sm:$0xff]
    %v361 = vld [vmem:[#allocation5 + $0x3b8] sm:$0xff]
    %v362 = vld [vmem:[#allocation5 + $0x3c0] sm:$0xff]
    %v363 = vld [vmem:[#allocation5 + $0x3c8] sm:$0xff]
    %v364 = vld [vmem:[#allocation5 + $0x3d0] sm:$0xff]
    %v365 = vld [vmem:[#allocation5 + $0x3d8] sm:$0xff]
    %v366 = vld [vmem:[#allocation5 + $0x3e0] sm:$0xff]
    %v367 = vld [vmem:[#allocation5 + $0x3e8] sm:$0xff]
    %v368 = vld [vmem:[#allocation5 + $0x3f0] sm:$0xff]
    %v369 = vld [vmem:[#allocation5 + $0x3f8] sm:$0xff]
    %v370 = vld [vmem:[#allocation7] sm:$0x3]
    %v371 = vpack.c.bf16 %v234, %v226
    %v372 = vpack.c.bf16 %v235, %v227
    %v373 = vpack.c.bf16 %v236, %v228
    %v374 = vpack.c.bf16 %v237, %v229
    %v375 = vpack.c.bf16 %v238, %v230
    %v376 = vpack.c.bf16 %v239, %v231
    %v377 = vpack.c.bf16 %v240, %v232
    %v378 = vpack.c.bf16 %v241, %v233
    %v380 = vperm.slane %v370, 0
    %v381 = vperm.slane %v370, 1
    %v512 = vunpack.c.l.b16 %v242
    %v513 = vunpack.c.h.b16 %v242
    %v514 = vunpack.c.l.b16 %v243
    %v515 = vunpack.c.h.b16 %v243
    %v516 = vunpack.c.l.b16 %v244
    %v517 = vunpack.c.h.b16 %v244
    %v518 = vunpack.c.l.b16 %v245
    %v519 = vunpack.c.h.b16 %v245
    %v520 = vunpack.c.l.b16 %v246
    %v521 = vunpack.c.h.b16 %v246
    %v522 = vunpack.c.l.b16 %v247
    %v523 = vunpack.c.h.b16 %v247
    %v524 = vunpack.c.l.b16 %v248
    %v525 = vunpack.c.h.b16 %v248
    %v526 = vunpack.c.l.b16 %v249
    %v527 = vunpack.c.h.b16 %v249
    %v528 = vunpack.c.l.b16 %v250
    %v529 = vunpack.c.h.b16 %v250
    %v530 = vunpack.c.l.b16 %v251
    %v531 = vunpack.c.h.b16 %v251
    %v532 = vunpack.c.l.b16 %v252
    %v533 = vunpack.c.h.b16 %v252
    %v534 = vunpack.c.l.b16 %v253
    %v535 = vunpack.c.h.b16 %v253
    %v536 = vunpack.c.l.b16 %v254
    %v537 = vunpack.c.h.b16 %v254
    %v538 = vunpack.c.l.b16 %v255
    %v539 = vunpack.c.h.b16 %v255
    %v540 = vunpack.c.l.b16 %v256
    %v541 = vunpack.c.h.b16 %v256
    %v542 = vunpack.c.l.b16 %v257
    %v543 = vunpack.c.h.b16 %v257
    %v544 = vunpack.c.l.b16 %v258
    %v545 = vunpack.c.h.b16 %v258
    %v546 = vunpack.c.l.b16 %v259
    %v547 = vunpack.c.h.b16 %v259
    %v548 = vunpack.c.l.b16 %v260
    %v549 = vunpack.c.h.b16 %v260
    %v550 = vunpack.c.l.b16 %v261
    %v551 = vunpack.c.h.b16 %v261
    %v552 = vunpack.c.l.b16 %v262
    %v553 = vunpack.c.h.b16 %v262
    %v554 = vunpack.c.l.b16 %v263
    %v555 = vunpack.c.h.b16 %v263
    %v556 = vunpack.c.l.b16 %v264
    %v557 = vunpack.c.h.b16 %v264
    %v558 = vunpack.c.l.b16 %v265
    %v559 = vunpack.c.h.b16 %v265
    %v560 = vunpack.c.l.b16 %v266
    %v561 = vunpack.c.h.b16 %v266
    %v562 = vunpack.c.l.b16 %v267
    %v563 = vunpack.c.h.b16 %v267
    %v564 = vunpack.c.l.b16 %v268
    %v565 = vunpack.c.h.b16 %v268
    %v566 = vunpack.c.l.b16 %v269
    %v567 = vunpack.c.h.b16 %v269
    %v568 = vunpack.c.l.b16 %v270
    %v569 = vunpack.c.h.b16 %v270
    %v570 = vunpack.c.l.b16 %v271
    %v571 = vunpack.c.h.b16 %v271
    %v572 = vunpack.c.l.b16 %v272
    %v573 = vunpack.c.h.b16 %v272
    %v574 = vunpack.c.l.b16 %v273
    %v575 = vunpack.c.h.b16 %v273
    %v576 = vunpack.c.l.b16 %v274
    %v577 = vunpack.c.h.b16 %v274
    %v578 = vunpack.c.l.b16 %v275
    %v579 = vunpack.c.h.b16 %v275
    %v580 = vunpack.c.l.b16 %v276
    %v581 = vunpack.c.h.b16 %v276
    %v582 = vunpack.c.l.b16 %v277
    %v583 = vunpack.c.h.b16 %v277
    %v584 = vunpack.c.l.b16 %v278
    %v585 = vunpack.c.h.b16 %v278
    %v586 = vunpack.c.l.b16 %v279
    %v587 = vunpack.c.h.b16 %v279
    %v588 = vunpack.c.l.b16 %v280
    %v589 = vunpack.c.h.b16 %v280
    %v590 = vunpack.c.l.b16 %v281
    %v591 = vunpack.c.h.b16 %v281
    %v592 = vunpack.c.l.b16 %v282
    %v593 = vunpack.c.h.b16 %v282
    %v594 = vunpack.c.l.b16 %v283
    %v595 = vunpack.c.h.b16 %v283
    %v596 = vunpack.c.l.b16 %v284
    %v597 = vunpack.c.h.b16 %v284
    %v598 = vunpack.c.l.b16 %v285
    %v599 = vunpack.c.h.b16 %v285
    %v600 = vunpack.c.l.b16 %v286
    %v601 = vunpack.c.h.b16 %v286
    %v602 = vunpack.c.l.b16 %v287
    %v603 = vunpack.c.h.b16 %v287
    %v604 = vunpack.c.l.b16 %v288
    %v605 = vunpack.c.h.b16 %v288
    %v606 = vunpack.c.l.b16 %v289
    %v607 = vunpack.c.h.b16 %v289
    %v608 = vunpack.c.l.b16 %v290
    %v609 = vunpack.c.h.b16 %v290
    %v610 = vunpack.c.l.b16 %v291
    %v611 = vunpack.c.h.b16 %v291
    %v612 = vunpack.c.l.b16 %v292
    %v613 = vunpack.c.h.b16 %v292
    %v614 = vunpack.c.l.b16 %v293
    %v615 = vunpack.c.h.b16 %v293
    %v616 = vunpack.c.l.b16 %v294
    %v617 = vunpack.c.h.b16 %v294
    %v618 = vunpack.c.l.b16 %v295
    %v619 = vunpack.c.h.b16 %v295
    %v620 = vunpack.c.l.b16 %v296
    %v621 = vunpack.c.h.b16 %v296
    %v622 = vunpack.c.l.b16 %v297
    %v623 = vunpack.c.h.b16 %v297
    %v624 = vunpack.c.l.b16 %v298
    %v625 = vunpack.c.h.b16 %v298
    %v626 = vunpack.c.l.b16 %v299
    %v627 = vunpack.c.h.b16 %v299
    %v628 = vunpack.c.l.b16 %v300
    %v629 = vunpack.c.h.b16 %v300
    %v630 = vunpack.c.l.b16 %v301
    %v631 = vunpack.c.h.b16 %v301
    %v632 = vunpack.c.l.b16 %v302
    %v633 = vunpack.c.h.b16 %v302
    %v634 = vunpack.c.l.b16 %v303
    %v635 = vunpack.c.h.b16 %v303
    %v636 = vunpack.c.l.b16 %v304
    %v637 = vunpack.c.h.b16 %v304
    %v638 = vunpack.c.l.b16 %v305
    %v639 = vunpack.c.h.b16 %v305
    %v640 = vunpack.c.l.b16 %v306
    %v641 = vunpack.c.h.b16 %v306
    %v642 = vunpack.c.l.b16 %v307
    %v643 = vunpack.c.h.b16 %v307
    %v644 = vunpack.c.l.b16 %v308
    %v645 = vunpack.c.h.b16 %v308
    %v646 = vunpack.c.l.b16 %v309
    %v647 = vunpack.c.h.b16 %v309
    %v648 = vunpack.c.l.b16 %v310
    %v649 = vunpack.c.h.b16 %v310
    %v650 = vunpack.c.l.b16 %v311
    %v651 = vunpack.c.h.b16 %v311
    %v652 = vunpack.c.l.b16 %v312
    %v653 = vunpack.c.h.b16 %v312
    %v654 = vunpack.c.l.b16 %v313
    %v655 = vunpack.c.h.b16 %v313
    %v656 = vunpack.c.l.b16 %v314
    %v657 = vunpack.c.h.b16 %v314
    %v658 = vunpack.c.l.b16 %v315
    %v659 = vunpack.c.h.b16 %v315
    %v660 = vunpack.c.l.b16 %v316
    %v661 = vunpack.c.h.b16 %v316
    %v662 = vunpack.c.l.b16 %v317
    %v663 = vunpack.c.h.b16 %v317
    %v664 = vunpack.c.l.b16 %v318
    %v665 = vunpack.c.h.b16 %v318
    %v666 = vunpack.c.l.b16 %v319
    %v667 = vunpack.c.h.b16 %v319
    %v668 = vunpack.c.l.b16 %v320
    %v669 = vunpack.c.h.b16 %v320
    %v670 = vunpack.c.l.b16 %v321
    %v671 = vunpack.c.h.b16 %v321
    %v672 = vunpack.c.l.b16 %v322
    %v673 = vunpack.c.h.b16 %v322
    %v674 = vunpack.c.l.b16 %v323
    %v675 = vunpack.c.h.b16 %v323
    %v676 = vunpack.c.l.b16 %v324
    %v677 = vunpack.c.h.b16 %v324
    %v678 = vunpack.c.l.b16 %v325
    %v679 = vunpack.c.h.b16 %v325
    %v680 = vunpack.c.l.b16 %v326
    %v681 = vunpack.c.h.b16 %v326
    %v682 = vunpack.c.l.b16 %v327
    %v683 = vunpack.c.h.b16 %v327
    %v684 = vunpack.c.l.b16 %v328
    %v685 = vunpack.c.h.b16 %v328
    %v686 = vunpack.c.l.b16 %v329
    %v687 = vunpack.c.h.b16 %v329
    %v688 = vunpack.c.l.b16 %v330
    %v689 = vunpack.c.h.b16 %v330
    %v690 = vunpack.c.l.b16 %v331
    %v691 = vunpack.c.h.b16 %v331
    %v692 = vunpack.c.l.b16 %v332
    %v693 = vunpack.c.h.b16 %v332
    %v694 = vunpack.c.l.b16 %v333
    %v695 = vunpack.c.h.b16 %v333
    %v696 = vunpack.c.l.b16 %v334
    %v697 = vunpack.c.h.b16 %v334
    %v698 = vunpack.c.l.b16 %v335
    %v699 = vunpack.c.h.b16 %v335
    %v700 = vunpack.c.l.b16 %v336
    %v701 = vunpack.c.h.b16 %v336
    %v702 = vunpack.c.l.b16 %v337
    %v703 = vunpack.c.h.b16 %v337
    %v704 = vunpack.c.l.b16 %v338
    %v705 = vunpack.c.h.b16 %v338
    %v706 = vunpack.c.l.b16 %v339
    %v707 = vunpack.c.h.b16 %v339
    %v708 = vunpack.c.l.b16 %v340
    %v709 = vunpack.c.h.b16 %v340
    %v710 = vunpack.c.l.b16 %v341
    %v711 = vunpack.c.h.b16 %v341
    %v712 = vunpack.c.l.b16 %v342
    %v713 = vunpack.c.h.b16 %v342
    %v714 = vunpack.c.l.b16 %v343
    %v715 = vunpack.c.h.b16 %v343
    %v716 = vunpack.c.l.b16 %v344
    %v717 = vunpack.c.h.b16 %v344
    %v718 = vunpack.c.l.b16 %v345
    %v719 = vunpack.c.h.b16 %v345
    %v720 = vunpack.c.l.b16 %v346
    %v721 = vunpack.c.h.b16 %v346
    %v722 = vunpack.c.l.b16 %v347
    %v723 = vunpack.c.h.b16 %v347
    %v724 = vunpack.c.l.b16 %v348
    %v725 = vunpack.c.h.b16 %v348
    %v726 = vunpack.c.l.b16 %v349
    %v727 = vunpack.c.h.b16 %v349
    %v728 = vunpack.c.l.b16 %v350
    %v729 = vunpack.c.h.b16 %v350
    %v730 = vunpack.c.l.b16 %v351
    %v731 = vunpack.c.h.b16 %v351
    %v732 = vunpack.c.l.b16 %v352
    %v733 = vunpack.c.h.b16 %v352
    %v734 = vunpack.c.l.b16 %v353
    %v735 = vunpack.c.h.b16 %v353
    %v736 = vunpack.c.l.b16 %v354
    %v737 = vunpack.c.h.b16 %v354
    %v738 = vunpack.c.l.b16 %v355
    %v739 = vunpack.c.h.b16 %v355
    %v740 = vunpack.c.l.b16 %v356
    %v741 = vunpack.c.h.b16 %v356
    %v742 = vunpack.c.l.b16 %v357
    %v743 = vunpack.c.h.b16 %v357
    %v744 = vunpack.c.l.b16 %v358
    %v745 = vunpack.c.h.b16 %v358
    %v746 = vunpack.c.l.b16 %v359
    %v747 = vunpack.c.h.b16 %v359
    %v748 = vunpack.c.l.b16 %v360
    %v749 = vunpack.c.h.b16 %v360
    %v750 = vunpack.c.l.b16 %v361
    %v751 = vunpack.c.h.b16 %v361
    %v752 = vunpack.c.l.b16 %v362
    %v753 = vunpack.c.h.b16 %v362
    %v754 = vunpack.c.l.b16 %v363
    %v755 = vunpack.c.h.b16 %v363
    %v756 = vunpack.c.l.b16 %v364
    %v757 = vunpack.c.h.b16 %v364
    %v758 = vunpack.c.l.b16 %v365
    %v759 = vunpack.c.h.b16 %v365
    %v760 = vunpack.c.l.b16 %v366
    %v761 = vunpack.c.h.b16 %v366
    %v762 = vunpack.c.l.b16 %v367
    %v763 = vunpack.c.h.b16 %v367
    %v764 = vunpack.c.l.b16 %v368
    %v765 = vunpack.c.h.b16 %v368
    %v766 = vunpack.c.l.b16 %v369
    %v767 = vunpack.c.h.b16 %v369
    %v768 = vpack.c.b16 %v514, %v512
    %v769 = vpack.c.b16 %v515, %v513
    %v770 = vpack.c.b16 %v518, %v516
    %v771 = vpack.c.b16 %v519, %v517
    %v772 = vpack.c.b16 %v522, %v520
    %v773 = vpack.c.b16 %v523, %v521
    %v774 = vpack.c.b16 %v526, %v524
    %v775 = vpack.c.b16 %v527, %v525
    %v776 = vpack.c.b16 %v530, %v528
    %v777 = vpack.c.b16 %v531, %v529
    %v778 = vpack.c.b16 %v534, %v532
    %v779 = vpack.c.b16 %v535, %v533
    %v780 = vpack.c.b16 %v538, %v536
    %v781 = vpack.c.b16 %v539, %v537
    %v782 = vpack.c.b16 %v542, %v540
    %v783 = vpack.c.b16 %v543, %v541
    %v784 = vpack.c.b16 %v546, %v544
    %v785 = vpack.c.b16 %v547, %v545
    %v786 = vpack.c.b16 %v550, %v548
    %v787 = vpack.c.b16 %v551, %v549
    %v788 = vpack.c.b16 %v554, %v552
    %v789 = vpack.c.b16 %v555, %v553
    %v790 = vpack.c.b16 %v558, %v556
    %v791 = vpack.c.b16 %v559, %v557
    %v792 = vpack.c.b16 %v562, %v560
    %v793 = vpack.c.b16 %v563, %v561
    %v794 = vpack.c.b16 %v566, %v564
    %v795 = vpack.c.b16 %v567, %v565
    %v796 = vpack.c.b16 %v570, %v568
    %v797 = vpack.c.b16 %v571, %v569
    %v798 = vpack.c.b16 %v574, %v572
    %v799 = vpack.c.b16 %v575, %v573
    %v800 = vpack.c.b16 %v578, %v576
    %v801 = vpack.c.b16 %v579, %v577
    %v802 = vpack.c.b16 %v582, %v580
    %v803 = vpack.c.b16 %v583, %v581
    %v804 = vpack.c.b16 %v586, %v584
    %v805 = vpack.c.b16 %v587, %v585
    %v806 = vpack.c.b16 %v590, %v588
    %v807 = vpack.c.b16 %v591, %v589
    %v808 = vpack.c.b16 %v594, %v592
    %v809 = vpack.c.b16 %v595, %v593
    %v810 = vpack.c.b16 %v598, %v596
    %v811 = vpack.c.b16 %v599, %v597
    %v812 = vpack.c.b16 %v602, %v600
    %v813 = vpack.c.b16 %v603, %v601
    %v814 = vpack.c.b16 %v606, %v604
    %v815 = vpack.c.b16 %v607, %v605
    %v816 = vpack.c.b16 %v610, %v608
    %v817 = vpack.c.b16 %v611, %v609
    %v818 = vpack.c.b16 %v614, %v612
    %v819 = vpack.c.b16 %v615, %v613
    %v820 = vpack.c.b16 %v618, %v616
    %v821 = vpack.c.b16 %v619, %v617
    %v822 = vpack.c.b16 %v622, %v620
    %v823 = vpack.c.b16 %v623, %v621
    %v824 = vpack.c.b16 %v626, %v624
    %v825 = vpack.c.b16 %v627, %v625
    %v826 = vpack.c.b16 %v630, %v628
    %v827 = vpack.c.b16 %v631, %v629
    %v828 = vpack.c.b16 %v634, %v632
    %v829 = vpack.c.b16 %v635, %v633
    %v830 = vpack.c.b16 %v638, %v636
    %v831 = vpack.c.b16 %v639, %v637
    %v832 = vpack.c.b16 %v642, %v640
    %v833 = vpack.c.b16 %v643, %v641
    %v834 = vpack.c.b16 %v646, %v644
    %v835 = vpack.c.b16 %v647, %v645
    %v836 = vpack.c.b16 %v650, %v648
    %v837 = vpack.c.b16 %v651, %v649
    %v838 = vpack.c.b16 %v654, %v652
    %v839 = vpack.c.b16 %v655, %v653
    %v840 = vpack.c.b16 %v658, %v656
    %v841 = vpack.c.b16 %v659, %v657
    %v842 = vpack.c.b16 %v662, %v660
    %v843 = vpack.c.b16 %v663, %v661
    %v844 = vpack.c.b16 %v666, %v664
    %v845 = vpack.c.b16 %v667, %v665
    %v846 = vpack.c.b16 %v670, %v668
    %v847 = vpack.c.b16 %v671, %v669
    %v848 = vpack.c.b16 %v674, %v672
    %v849 = vpack.c.b16 %v675, %v673
    %v850 = vpack.c.b16 %v678, %v676
    %v851 = vpack.c.b16 %v679, %v677
    %v852 = vpack.c.b16 %v682, %v680
    %v853 = vpack.c.b16 %v683, %v681
    %v854 = vpack.c.b16 %v686, %v684
    %v855 = vpack.c.b16 %v687, %v685
    %v856 = vpack.c.b16 %v690, %v688
    %v857 = vpack.c.b16 %v691, %v689
    %v858 = vpack.c.b16 %v694, %v692
    %v859 = vpack.c.b16 %v695, %v693
    %v860 = vpack.c.b16 %v698, %v696
    %v861 = vpack.c.b16 %v699, %v697
    %v862 = vpack.c.b16 %v702, %v700
    %v863 = vpack.c.b16 %v703, %v701
    %v864 = vpack.c.b16 %v706, %v704
    %v865 = vpack.c.b16 %v707, %v705
    %v866 = vpack.c.b16 %v710, %v708
    %v867 = vpack.c.b16 %v711, %v709
    %v868 = vpack.c.b16 %v714, %v712
    %v869 = vpack.c.b16 %v715, %v713
    %v870 = vpack.c.b16 %v718, %v716
    %v871 = vpack.c.b16 %v719, %v717
    %v872 = vpack.c.b16 %v722, %v720
    %v873 = vpack.c.b16 %v723, %v721
    %v874 = vpack.c.b16 %v726, %v724
    %v875 = vpack.c.b16 %v727, %v725
    %v876 = vpack.c.b16 %v730, %v728
    %v877 = vpack.c.b16 %v731, %v729
    %v878 = vpack.c.b16 %v734, %v732
    %v879 = vpack.c.b16 %v735, %v733
    %v880 = vpack.c.b16 %v738, %v736
    %v881 = vpack.c.b16 %v739, %v737
    %v882 = vpack.c.b16 %v742, %v740
    %v883 = vpack.c.b16 %v743, %v741
    %v884 = vpack.c.b16 %v746, %v744
    %v885 = vpack.c.b16 %v747, %v745
    %v886 = vpack.c.b16 %v750, %v748
    %v887 = vpack.c.b16 %v751, %v749
    %v888 = vpack.c.b16 %v754, %v752
    %v889 = vpack.c.b16 %v755, %v753
    %v890 = vpack.c.b16 %v758, %v756
    %v891 = vpack.c.b16 %v759, %v757
    %v892 = vpack.c.b16 %v762, %v760
    %v893 = vpack.c.b16 %v763, %v761
    %v894 = vpack.c.b16 %v766, %v764
    %v895 = vpack.c.b16 %v767, %v765
    %1024 = vmatpush.bf16.msra.mxu0 %v782
    %1025 = vmatpush.bf16.msra.mxu0 %v780
    %1026 = vmatpush.bf16.msra.mxu0 %v778
    %1027 = vmatpush.bf16.msra.mxu0 %v776
    %1028 = vmatpush.bf16.msra.mxu0 %v774
    %1029 = vmatpush.bf16.msra.mxu0 %v772
    %1030 = vmatpush.bf16.msra.mxu0 %v770
    %1031 = vmatpush.bf16.msra.mxu0 %v768
    %1032 = vmatmul.bf16.gmra.mxu0 %v371
    %v1033 = vpop.f32.mrf.mxu0
    %v1034 = vadd.f32 %v380, %v1033
    %v1035 = vpop.f32.mrf.mxu0
    %v1036 = vadd.f32 %v380, %v1035
    %1037 = vdwg.mxu0
    %1038 = vmatpush.bf16.msra.mxu0 %v798
    %1039 = vmatpush.bf16.msra.mxu0 %v796
    %1040 = vmatpush.bf16.msra.mxu0 %v794
    %1041 = vmatpush.bf16.msra.mxu0 %v792
    %1042 = vmatpush.bf16.msra.mxu0 %v790
    %1043 = vmatpush.bf16.msra.mxu0 %v788
    %1044 = vmatpush.bf16.msra.mxu0 %v786
    %1045 = vmatpush.bf16.msra.mxu0 %v784
    %1046 = vmatmul.bf16.gmra.mxu0 %v372
    %v1047 = vpop.f32.mrf.mxu0
    %v1048 = vadd.f32 %v1034, %v1047
    %v1049 = vpop.f32.mrf.mxu0
    %v1050 = vadd.f32 %v1036, %v1049
    %1051 = vdwg.mxu0
    %1052 = vmatpush.bf16.msra.mxu0 %v814
    %1053 = vmatpush.bf16.msra.mxu0 %v812
    %1054 = vmatpush.bf16.msra.mxu0 %v810
    %1055 = vmatpush.bf16.msra.mxu0 %v808
    %1056 = vmatpush.bf16.msra.mxu0 %v806
    %1057 = vmatpush.bf16.msra.mxu0 %v804
    %1058 = vmatpush.bf16.msra.mxu0 %v802
    %1059 = vmatpush.bf16.msra.mxu0 %v800
    %1060 = vmatmul.bf16.gmra.mxu0 %v373
    %v1061 = vpop.f32.mrf.mxu0
    %v1062 = vadd.f32 %v1048, %v1061
    %v1063 = vpop.f32.mrf.mxu0
    %v1064 = vadd.f32 %v1050, %v1063
    %1065 = vdwg.mxu0
    %1066 = vmatpush.bf16.msra.mxu0 %v830
    %1067 = vmatpush.bf16.msra.mxu0 %v828
    %1068 = vmatpush.bf16.msra.mxu0 %v826
    %1069 = vmatpush.bf16.msra.mxu0 %v824
    %1070 = vmatpush.bf16.msra.mxu0 %v822
    %1071 = vmatpush.bf16.msra.mxu0 %v820
    %1072 = vmatpush.bf16.msra.mxu0 %v818
    %1073 = vmatpush.bf16.msra.mxu0 %v816
    %1074 = vmatmul.bf16.gmra.mxu0 %v374
    %v1075 = vpop.f32.mrf.mxu0
    %v1076 = vadd.f32 %v1062, %v1075
    %v1077 = vpop.f32.mrf.mxu0
    %v1078 = vadd.f32 %v1064, %v1077
    %1079 = vdwg.mxu0
    %1080 = vmatpush.bf16.msra.mxu0 %v846
    %1081 = vmatpush.bf16.msra.mxu0 %v844
    %1082 = vmatpush.bf16.msra.mxu0 %v842
    %1083 = vmatpush.bf16.msra.mxu0 %v840
    %1084 = vmatpush.bf16.msra.mxu0 %v838
    %1085 = vmatpush.bf16.msra.mxu0 %v836
    %1086 = vmatpush.bf16.msra.mxu0 %v834
    %1087 = vmatpush.bf16.msra.mxu0 %v832
    %1088 = vmatmul.bf16.gmra.mxu0 %v375
    %v1089 = vpop.f32.mrf.mxu0
    %v1090 = vadd.f32 %v1076, %v1089
    %v1091 = vpop.f32.mrf.mxu0
    %v1092 = vadd.f32 %v1078, %v1091
    %1093 = vdwg.mxu0
    %1094 = vmatpush.bf16.msra.mxu0 %v862
    %1095 = vmatpush.bf16.msra.mxu0 %v860
    %1096 = vmatpush.bf16.msra.mxu0 %v858
    %1097 = vmatpush.bf16.msra.mxu0 %v856
    %1098 = vmatpush.bf16.msra.mxu0 %v854
    %1099 = vmatpush.bf16.msra.mxu0 %v852
    %1100 = vmatpush.bf16.msra.mxu0 %v850
    %1101 = vmatpush.bf16.msra.mxu0 %v848
    %1102 = vmatmul.bf16.gmra.mxu0 %v376
    %v1103 = vpop.f32.mrf.mxu0
    %v1104 = vadd.f32 %v1090, %v1103
    %v1105 = vpop.f32.mrf.mxu0
    %v1106 = vadd.f32 %v1092, %v1105
    %1107 = vdwg.mxu0
    %1108 = vmatpush.bf16.msra.mxu0 %v878
    %1109 = vmatpush.bf16.msra.mxu0 %v876
    %1110 = vmatpush.bf16.msra.mxu0 %v874
    %1111 = vmatpush.bf16.msra.mxu0 %v872
    %1112 = vmatpush.bf16.msra.mxu0 %v870
    %1113 = vmatpush.bf16.msra.mxu0 %v868
    %1114 = vmatpush.bf16.msra.mxu0 %v866
    %1115 = vmatpush.bf16.msra.mxu0 %v864
    %1116 = vmatmul.bf16.gmra.mxu0 %v377
    %v1117 = vpop.f32.mrf.mxu0
    %v1118 = vadd.f32 %v1104, %v1117
    %v1119 = vpop.f32.mrf.mxu0
    %v1120 = vadd.f32 %v1106, %v1119
    %1121 = vdwg.mxu0
    %1122 = vmatpush.bf16.msra.mxu0 %v894
    %1123 = vmatpush.bf16.msra.mxu0 %v892
    %1124 = vmatpush.bf16.msra.mxu0 %v890
    %1125 = vmatpush.bf16.msra.mxu0 %v888
    %1126 = vmatpush.bf16.msra.mxu0 %v886
    %1127 = vmatpush.bf16.msra.mxu0 %v884
    %1128 = vmatpush.bf16.msra.mxu0 %v882
    %1129 = vmatpush.bf16.msra.mxu0 %v880
    %1130 = vmatmul.bf16.gmra.mxu0 %v378
    %v1131 = vpop.f32.mrf.mxu0
    %v1132 = vadd.f32 %v1118, %v1131
    %v1133 = vpop.f32.mrf.mxu0
    %v1134 = vadd.f32 %v1120, %v1133
    %1135 = vdwg.mxu0
    %1136 = vmatpush.bf16.msra.mxu0 %v783
    %1137 = vmatpush.bf16.msra.mxu0 %v781
    %1138 = vmatpush.bf16.msra.mxu0 %v779
    %1139 = vmatpush.bf16.msra.mxu0 %v777
    %1140 = vmatpush.bf16.msra.mxu0 %v775
    %1141 = vmatpush.bf16.msra.mxu0 %v773
    %1142 = vmatpush.bf16.msra.mxu0 %v771
    %1143 = vmatpush.bf16.msra.mxu0 %v769
    %1144 = vmatmul.bf16.gmra.mxu0 %v371
    %v1145 = vpop.f32.mrf.mxu0
    %v1146 = vadd.f32 %v381, %v1145
    %v1147 = vpop.f32.mrf.mxu0
    %v1148 = vadd.f32 %v381, %v1147
    %1149 = vdwg.mxu0
    %1150 = vmatpush.bf16.msra.mxu0 %v799
    %1151 = vmatpush.bf16.msra.mxu0 %v797
    %1152 = vmatpush.bf16.msra.mxu0 %v795
    %1153 = vmatpush.bf16.msra.mxu0 %v793
    %1154 = vmatpush.bf16.msra.mxu0 %v791
    %1155 = vmatpush.bf16.msra.mxu0 %v789
    %1156 = vmatpush.bf16.msra.mxu0 %v787
    %1157 = vmatpush.bf16.msra.mxu0 %v785
    %1158 = vmatmul.bf16.gmra.mxu0 %v372
    %v1159 = vpop.f32.mrf.mxu0
    %v1160 = vadd.f32 %v1146, %v1159
    %v1161 = vpop.f32.mrf.mxu0
    %v1162 = vadd.f32 %v1148, %v1161
    %1163 = vdwg.mxu0
    %1164 = vmatpush.bf16.msra.mxu0 %v815
    %1165 = vmatpush.bf16.msra.mxu0 %v813
    %1166 = vmatpush.bf16.msra.mxu0 %v811
    %1167 = vmatpush.bf16.msra.mxu0 %v809
    %1168 = vmatpush.bf16.msra.mxu0 %v807
    %1169 = vmatpush.bf16.msra.mxu0 %v805
    %1170 = vmatpush.bf16.msra.mxu0 %v803
    %1171 = vmatpush.bf16.msra.mxu0 %v801
    %1172 = vmatmul.bf16.gmra.mxu0 %v373
    %v1173 = vpop.f32.mrf.mxu0
    %v1174 = vadd.f32 %v1160, %v1173
    %v1175 = vpop.f32.mrf.mxu0
    %v1176 = vadd.f32 %v1162, %v1175
    %1177 = vdwg.mxu0
    %1178 = vmatpush.bf16.msra.mxu0 %v831
    %1179 = vmatpush.bf16.msra.mxu0 %v829
    %1180 = vmatpush.bf16.msra.mxu0 %v827
    %1181 = vmatpush.bf16.msra.mxu0 %v825
    %1182 = vmatpush.bf16.msra.mxu0 %v823
    %1183 = vmatpush.bf16.msra.mxu0 %v821
    %1184 = vmatpush.bf16.msra.mxu0 %v819
    %1185 = vmatpush.bf16.msra.mxu0 %v817
    %1186 = vmatmul.bf16.gmra.mxu0 %v374
    %v1187 = vpop.f32.mrf.mxu0
    %v1188 = vadd.f32 %v1174, %v1187
    %v1189 = vpop.f32.mrf.mxu0
    %v1190 = vadd.f32 %v1176, %v1189
    %1191 = vdwg.mxu0
    %1192 = vmatpush.bf16.msra.mxu0 %v847
    %1193 = vmatpush.bf16.msra.mxu0 %v845
    %1194 = vmatpush.bf16.msra.mxu0 %v843
    %1195 = vmatpush.bf16.msra.mxu0 %v841
    %1196 = vmatpush.bf16.msra.mxu0 %v839
    %1197 = vmatpush.bf16.msra.mxu0 %v837
    %1198 = vmatpush.bf16.msra.mxu0 %v835
    %1199 = vmatpush.bf16.msra.mxu0 %v833
    %1200 = vmatmul.bf16.gmra.mxu0 %v375
    %v1201 = vpop.f32.mrf.mxu0
    %v1202 = vadd.f32 %v1188, %v1201
    %v1203 = vpop.f32.mrf.mxu0
    %v1204 = vadd.f32 %v1190, %v1203
    %1205 = vdwg.mxu0
    %1206 = vmatpush.bf16.msra.mxu0 %v863
    %1207 = vmatpush.bf16.msra.mxu0 %v861
    %1208 = vmatpush.bf16.msra.mxu0 %v859
    %1209 = vmatpush.bf16.msra.mxu0 %v857
    %1210 = vmatpush.bf16.msra.mxu0 %v855
    %1211 = vmatpush.bf16.msra.mxu0 %v853
    %1212 = vmatpush.bf16.msra.mxu0 %v851
    %1213 = vmatpush.bf16.msra.mxu0 %v849
    %1214 = vmatmul.bf16.gmra.mxu0 %v376
    %v1215 = vpop.f32.mrf.mxu0
    %v1216 = vadd.f32 %v1202, %v1215
    %v1217 = vpop.f32.mrf.mxu0
    %v1218 = vadd.f32 %v1204, %v1217
    %1219 = vdwg.mxu0
    %1220 = vmatpush.bf16.msra.mxu0 %v879
    %1221 = vmatpush.bf16.msra.mxu0 %v877
    %1222 = vmatpush.bf16.msra.mxu0 %v875
    %1223 = vmatpush.bf16.msra.mxu0 %v873
    %1224 = vmatpush.bf16.msra.mxu0 %v871
    %1225 = vmatpush.bf16.msra.mxu0 %v869
    %1226 = vmatpush.bf16.msra.mxu0 %v867
    %1227 = vmatpush.bf16.msra.mxu0 %v865
    %1228 = vmatmul.bf16.gmra.mxu0 %v377
    %v1229 = vpop.f32.mrf.mxu0
    %v1230 = vadd.f32 %v1216, %v1229
    %v1231 = vpop.f32.mrf.mxu0
    %v1232 = vadd.f32 %v1218, %v1231
    %1233 = vdwg.mxu0
    %1234 = vmatpush.bf16.msra.mxu0 %v895
    %1235 = vmatpush.bf16.msra.mxu0 %v893
    %1236 = vmatpush.bf16.msra.mxu0 %v891
    %1237 = vmatpush.bf16.msra.mxu0 %v889
    %1238 = vmatpush.bf16.msra.mxu0 %v887
    %1239 = vmatpush.bf16.msra.mxu0 %v885
    %1240 = vmatpush.bf16.msra.mxu0 %v883
    %1241 = vmatpush.bf16.msra.mxu0 %v881
    %1242 = vmatmul.bf16.gmra.mxu0 %v378
    %v1243 = vpop.f32.mrf.mxu0
    %v1244 = vadd.f32 %v1230, %v1243
    %v1245 = vpop.f32.mrf.mxu0
    %v1246 = vadd.f32 %v1232, %v1245
    %1247 = vdwg.mxu0
    %v1248 = vmax.f32 %v1132, 0.0
    %v1249 = vmax.f32 %v1244, 0.0
    %v1250 = vmax.f32 %v1134, 0.0
    %v1251 = vmax.f32 %v1246, 0.0
    %v1252 = vmul.f32 %v1248, %v1248
    %v1253 = vmul.f32 %v1249, %v1249
    %v1254 = vmul.f32 %v1250, %v1250
    %v1255 = vmul.f32 %v1251, %v1251
    %v1256 = vadd.f32 %v1252, %v1253
    %1257 = vadd.xlane.f32.xlu0 %v1256
    %v1258 = vpop.xlane.xlu0 %1257
    %v1259 = vadd.f32 %v1254, %v1255
    %1260 = vadd.xlane.f32.xlu0 %v1259
    %v1261 = vpop.xlane.xlu0 %1260
    %v1262 = vrcp.pop 256.0
    %v1263 = vmul.f32 256.0, %v1262
    %v1264 = vsub.f32 1.0, %v1263
    %v1265 = vmul.f32 %v1262, %v1264
    %v1266 = vadd.f32 %v1262, %v1265
    %vm1267 = vweird.f32 %v1262
    %v1268 = vsel %vm1267, %v1262, %v1266
    %v1269 = vmul.f32 %v1258, %v1268
    %v1270 = vmul.f32 %v1261, %v1268
    %v1271 = vrsqrt.pop %v1269
    %v1272 = vmul.f32 %v1271, %v1269
    %v1273 = vmul.f32 %v1272, %v1271
    %v1274 = vmul.f32 0.5, %v1273
    %v1275 = vsub.f32 1.5, %v1274
    %v1276 = vmul.f32 %v1271, %v1275
    %v1277 = vmul.f32 %v1269, %v1276
    %vm1278 = vcmp.eq.f32.partialorder %v1269, inf
    %v1279 = vsel %vm1278, %v1269, %v1277
    %vm1280 = vcmp.eq.f32.partialorder %v1269, 0.0
    %v1281 = vand.u32 %v1269, 2147483648
    %v1282 = vsel %vm1280, %v1281, %v1279
    %v1283 = vrsqrt.pop %v1270
    %v1284 = vmul.f32 %v1283, %v1270
    %v1285 = vmul.f32 %v1284, %v1283
    %v1286 = vmul.f32 0.5, %v1285
    %v1287 = vsub.f32 1.5, %v1286
    %v1288 = vmul.f32 %v1283, %v1287
    %v1289 = vmul.f32 %v1270, %v1288
    %vm1290 = vcmp.eq.f32.partialorder %v1270, inf
    %v1291 = vsel %vm1290, %v1270, %v1289
    %vm1292 = vcmp.eq.f32.partialorder %v1270, 0.0
    %v1293 = vand.u32 %v1270, 2147483648
    %v1294 = vsel %vm1292, %v1293, %v1291
    %v1295 = vadd.f32 %v1282, 1e-08
    %v1296 = vadd.f32 %v1294, 1e-08
    %v1297 = vrcp.pop %v1295
    %v1298 = vmul.f32 %v1295, %v1297
    %v1299 = vsub.f32 1.0, %v1298
    %v1300 = vmul.f32 %v1297, %v1299
    %v1301 = vadd.f32 %v1297, %v1300
    %vm1302 = vweird.f32 %v1295
    %vm1303 = vweird.f32 %v1297
    %vm1304 = vmor %vm1302, %vm1303
    %v1305 = vsel %vm1304, %v1297, %v1301
    %v1306 = vand.u32 2147483647, %v1295
    %vm1307 = vcmp.eq.f32.partialorder %v1306, 8.507059e+37
    %v1308 = vand.u32 %v1295, 2147483648
    %v1309 = vor.u32 1.1754944e-38, %v1308
    %v1310 = vsel %vm1307, %v1309, %v1305
    %v1311 = vmul.f32 1.0, %v1310
    %v1312 = vrcp.pop %v1296
    %v1313 = vmul.f32 %v1296, %v1312
    %v1314 = vsub.f32 1.0, %v1313
    %v1315 = vmul.f32 %v1312, %v1314
    %v1316 = vadd.f32 %v1312, %v1315
    %vm1317 = vweird.f32 %v1296
    %vm1318 = vweird.f32 %v1312
    %vm1319 = vmor %vm1317, %vm1318
    %v1320 = vsel %vm1319, %v1312, %v1316
    %v1321 = vand.u32 2147483647, %v1296
    %vm1322 = vcmp.eq.f32.partialorder %v1321, 8.507059e+37
    %v1323 = vand.u32 %v1296, 2147483648
    %v1324 = vor.u32 1.1754944e-38, %v1323
    %v1325 = vsel %vm1322, %v1324, %v1320
    %v1326 = vmul.f32 1.0, %v1325
    %v1327 = vmul.f32 %v1248, %v1311
    %v1328 = vmul.f32 %v1249, %v1311
    %v1329 = vmul.f32 %v1250, %v1326
    %v1330 = vmul.f32 %v1251, %v1326
    %v1331 = vld [vmem:[#allocation8] sm:$0xff]
    %v1332 = vld [vmem:[#allocation8 + $0x8] sm:$0xff]
    %v1333 = vld [vmem:[#allocation8 + $0x10] sm:$0xff]
    %v1334 = vld [vmem:[#allocation8 + $0x18] sm:$0xff]
    %v1335 = vld [vmem:[#allocation8 + $0x20] sm:$0xff]
    %v1336 = vld [vmem:[#allocation8 + $0x28] sm:$0xff]
    %v1337 = vld [vmem:[#allocation8 + $0x30] sm:$0xff]
    %v1338 = vld [vmem:[#allocation8 + $0x38] sm:$0xff]
    %v1339 = vld [vmem:[#allocation8 + $0x40] sm:$0xff]
    %v1340 = vld [vmem:[#allocation8 + $0x48] sm:$0xff]
    %v1341 = vld [vmem:[#allocation8 + $0x50] sm:$0xff]
    %v1342 = vld [vmem:[#allocation8 + $0x58] sm:$0xff]
    %v1343 = vld [vmem:[#allocation8 + $0x60] sm:$0xff]
    %v1344 = vld [vmem:[#allocation8 + $0x68] sm:$0xff]
    %v1345 = vld [vmem:[#allocation8 + $0x70] sm:$0xff]
    %v1346 = vld [vmem:[#allocation8 + $0x78] sm:$0xff]
    %v1347 = vld [vmem:[#allocation8 + $0x80] sm:$0xff]
    %v1348 = vld [vmem:[#allocation8 + $0x88] sm:$0xff]
    %v1349 = vld [vmem:[#allocation8 + $0x90] sm:$0xff]
    %v1350 = vld [vmem:[#allocation8 + $0x98] sm:$0xff]
    %v1351 = vld [vmem:[#allocation8 + $0xa0] sm:$0xff]
    %v1352 = vld [vmem:[#allocation8 + $0xa8] sm:$0xff]
    %v1353 = vld [vmem:[#allocation8 + $0xb0] sm:$0xff]
    %v1354 = vld [vmem:[#allocation8 + $0xb8] sm:$0xff]
    %v1355 = vld [vmem:[#allocation8 + $0xc0] sm:$0xff]
    %v1356 = vld [vmem:[#allocation8 + $0xc8] sm:$0xff]
    %v1357 = vld [vmem:[#allocation8 + $0xd0] sm:$0xff]
    %v1358 = vld [vmem:[#allocation8 + $0xd8] sm:$0xff]
    %v1359 = vld [vmem:[#allocation8 + $0xe0] sm:$0xff]
    %v1360 = vld [vmem:[#allocation8 + $0xe8] sm:$0xff]
    %v1361 = vld [vmem:[#allocation8 + $0xf0] sm:$0xff]
    %v1362 = vld [vmem:[#allocation8 + $0xf8] sm:$0xff]
    %v1363 = vld [vmem:[%s4] sm:$0x3]
    %v1364 = vpack.c.bf16 %v1329, %v1327
    %v1365 = vpack.c.bf16 %v1330, %v1328
    %v1367 = vperm.slane %v1363, 0
    %v1368 = vperm.slane %v1363, 1
    %v1403 = vunpack.c.l.b16 %v1331
    %v1404 = vunpack.c.h.b16 %v1331
    %v1405 = vunpack.c.l.b16 %v1332
    %v1406 = vunpack.c.h.b16 %v1332
    %v1407 = vunpack.c.l.b16 %v1333
    %v1408 = vunpack.c.h.b16 %v1333
    %v1409 = vunpack.c.l.b16 %v1334
    %v1410 = vunpack.c.h.b16 %v1334
    %v1411 = vunpack.c.l.b16 %v1335
    %v1412 = vunpack.c.h.b16 %v1335
    %v1413 = vunpack.c.l.b16 %v1336
    %v1414 = vunpack.c.h.b16 %v1336
    %v1415 = vunpack.c.l.b16 %v1337
    %v1416 = vunpack.c.h.b16 %v1337
    %v1417 = vunpack.c.l.b16 %v1338
    %v1418 = vunpack.c.h.b16 %v1338
    %v1419 = vunpack.c.l.b16 %v1339
    %v1420 = vunpack.c.h.b16 %v1339
    %v1421 = vunpack.c.l.b16 %v1340
    %v1422 = vunpack.c.h.b16 %v1340
    %v1423 = vunpack.c.l.b16 %v1341
    %v1424 = vunpack.c.h.b16 %v1341
    %v1425 = vunpack.c.l.b16 %v1342
    %v1426 = vunpack.c.h.b16 %v1342
    %v1427 = vunpack.c.l.b16 %v1343
    %v1428 = vunpack.c.h.b16 %v1343
    %v1429 = vunpack.c.l.b16 %v1344
    %v1430 = vunpack.c.h.b16 %v1344
    %v1431 = vunpack.c.l.b16 %v1345
    %v1432 = vunpack.c.h.b16 %v1345
    %v1433 = vunpack.c.l.b16 %v1346
    %v1434 = vunpack.c.h.b16 %v1346
    %v1435 = vunpack.c.l.b16 %v1347
    %v1436 = vunpack.c.h.b16 %v1347
    %v1437 = vunpack.c.l.b16 %v1348
    %v1438 = vunpack.c.h.b16 %v1348
    %v1439 = vunpack.c.l.b16 %v1349
    %v1440 = vunpack.c.h.b16 %v1349
    %v1441 = vunpack.c.l.b16 %v1350
    %v1442 = vunpack.c.h.b16 %v1350
    %v1443 = vunpack.c.l.b16 %v1351
    %v1444 = vunpack.c.h.b16 %v1351
    %v1445 = vunpack.c.l.b16 %v1352
    %v1446 = vunpack.c.h.b16 %v1352
    %v1447 = vunpack.c.l.b16 %v1353
    %v1448 = vunpack.c.h.b16 %v1353
    %v1449 = vunpack.c.l.b16 %v1354
    %v1450 = vunpack.c.h.b16 %v1354
    %v1451 = vunpack.c.l.b16 %v1355
    %v1452 = vunpack.c.h.b16 %v1355
    %v1453 = vunpack.c.l.b16 %v1356
    %v1454 = vunpack.c.h.b16 %v1356
    %v1455 = vunpack.c.l.b16 %v1357
    %v1456 = vunpack.c.h.b16 %v1357
    %v1457 = vunpack.c.l.b16 %v1358
    %v1458 = vunpack.c.h.b16 %v1358
    %v1459 = vunpack.c.l.b16 %v1359
    %v1460 = vunpack.c.h.b16 %v1359
    %v1461 = vunpack.c.l.b16 %v1360
    %v1462 = vunpack.c.h.b16 %v1360
    %v1463 = vunpack.c.l.b16 %v1361
    %v1464 = vunpack.c.h.b16 %v1361
    %v1465 = vunpack.c.l.b16 %v1362
    %v1466 = vunpack.c.h.b16 %v1362
    %v1467 = vpack.c.b16 %v1405, %v1403
    %v1468 = vpack.c.b16 %v1406, %v1404
    %v1469 = vpack.c.b16 %v1409, %v1407
    %v1470 = vpack.c.b16 %v1410, %v1408
    %v1471 = vpack.c.b16 %v1413, %v1411
    %v1472 = vpack.c.b16 %v1414, %v1412
    %v1473 = vpack.c.b16 %v1417, %v1415
    %v1474 = vpack.c.b16 %v1418, %v1416
    %v1475 = vpack.c.b16 %v1421, %v1419
    %v1476 = vpack.c.b16 %v1422, %v1420
    %v1477 = vpack.c.b16 %v1425, %v1423
    %v1478 = vpack.c.b16 %v1426, %v1424
    %v1479 = vpack.c.b16 %v1429, %v1427
    %v1480 = vpack.c.b16 %v1430, %v1428
    %v1481 = vpack.c.b16 %v1433, %v1431
    %v1482 = vpack.c.b16 %v1434, %v1432
    %v1483 = vpack.c.b16 %v1437, %v1435
    %v1484 = vpack.c.b16 %v1438, %v1436
    %v1485 = vpack.c.b16 %v1441, %v1439
    %v1486 = vpack.c.b16 %v1442, %v1440
    %v1487 = vpack.c.b16 %v1445, %v1443
    %v1488 = vpack.c.b16 %v1446, %v1444
    %v1489 = vpack.c.b16 %v1449, %v1447
    %v1490 = vpack.c.b16 %v1450, %v1448
    %v1491 = vpack.c.b16 %v1453, %v1451
    %v1492 = vpack.c.b16 %v1454, %v1452
    %v1493 = vpack.c.b16 %v1457, %v1455
    %v1494 = vpack.c.b16 %v1458, %v1456
    %v1495 = vpack.c.b16 %v1461, %v1459
    %v1496 = vpack.c.b16 %v1462, %v1460
    %v1497 = vpack.c.b16 %v1465, %v1463
    %v1498 = vpack.c.b16 %v1466, %v1464
    %1531 = vmatpush.bf16.msra.mxu0 %v1481
    %1532 = vmatpush.bf16.msra.mxu0 %v1479
    %1533 = vmatpush.bf16.msra.mxu0 %v1477
    %1534 = vmatpush.bf16.msra.mxu0 %v1475
    %1535 = vmatpush.bf16.msra.mxu0 %v1473
    %1536 = vmatpush.bf16.msra.mxu0 %v1471
    %1537 = vmatpush.bf16.msra.mxu0 %v1469
    %1538 = vmatpush.bf16.msra.mxu0 %v1467
    %1539 = vmatmul.bf16.gmra.mxu0 %v1364
    %v1540 = vpop.f32.mrf.mxu0
    %v1541 = vadd.f32 %v1367, %v1540
    %v1542 = vpop.f32.mrf.mxu0
    %v1543 = vadd.f32 %v1367, %v1542
    %1544 = vdwg.mxu0
    %1545 = vmatpush.bf16.msra.mxu0 %v1497
    %1546 = vmatpush.bf16.msra.mxu0 %v1495
    %1547 = vmatpush.bf16.msra.mxu0 %v1493
    %1548 = vmatpush.bf16.msra.mxu0 %v1491
    %1549 = vmatpush.bf16.msra.mxu0 %v1489
    %1550 = vmatpush.bf16.msra.mxu0 %v1487
    %1551 = vmatpush.bf16.msra.mxu0 %v1485
    %1552 = vmatpush.bf16.msra.mxu0 %v1483
    %1553 = vmatmul.bf16.gmra.mxu0 %v1365
    %v1554 = vpop.f32.mrf.mxu0
    %v1555 = vadd.f32 %v1541, %v1554
    %v1556 = vpop.f32.mrf.mxu0
    %v1557 = vadd.f32 %v1543, %v1556
    %1558 = vdwg.mxu0
    %1559 = vmatpush.bf16.msra.mxu0 %v1482
    %1560 = vmatpush.bf16.msra.mxu0 %v1480
    %1561 = vmatpush.bf16.msra.mxu0 %v1478
    %1562 = vmatpush.bf16.msra.mxu0 %v1476
    %1563 = vmatpush.bf16.msra.mxu0 %v1474
    %1564 = vmatpush.bf16.msra.mxu0 %v1472
    %1565 = vmatpush.bf16.msra.mxu0 %v1470
    %1566 = vmatpush.bf16.msra.mxu0 %v1468
    %1567 = vmatmul.bf16.gmra.mxu0 %v1364
    %v1568 = vpop.f32.mrf.mxu0
    %v1569 = vadd.f32 %v1368, %v1568
    %v1570 = vpop.f32.mrf.mxu0
    %v1571 = vadd.f32 %v1368, %v1570
    %1572 = vdwg.mxu0
    %1573 = vmatpush.bf16.msra.mxu0 %v1498
    %1574 = vmatpush.bf16.msra.mxu0 %v1496
    %1575 = vmatpush.bf16.msra.mxu0 %v1494
    %1576 = vmatpush.bf16.msra.mxu0 %v1492
    %1577 = vmatpush.bf16.msra.mxu0 %v1490
    %1578 = vmatpush.bf16.msra.mxu0 %v1488
    %1579 = vmatpush.bf16.msra.mxu0 %v1486
    %1580 = vmatpush.bf16.msra.mxu0 %v1484
    %1581 = vmatmul.bf16.gmra.mxu0 %v1365
    %v1582 = vpop.f32.mrf.mxu0
    %v1583 = vadd.f32 %v1569, %v1582
    %v1584 = vpop.f32.mrf.mxu0
    %v1585 = vadd.f32 %v1571, %v1584
    %1586 = vdwg.mxu0
    %v1587 = vmax.f32 %v1555, 0.0
    %v1588 = vmax.f32 %v1583, 0.0
    %v1589 = vmax.f32 %v1557, 0.0
    %v1590 = vmax.f32 %v1585, 0.0
    %v1591 = vmul.f32 %v1587, %v1587
    %v1592 = vmul.f32 %v1588, %v1588
    %v1593 = vmul.f32 %v1589, %v1589
    %v1594 = vmul.f32 %v1590, %v1590
    %v1595 = vadd.f32 %v1591, %v1592
    %1596 = vadd.xlane.f32.xlu0 %v1595
    %v1597 = vpop.xlane.xlu0 %1596
    %v1598 = vadd.f32 %v1593, %v1594
    %1599 = vadd.xlane.f32.xlu0 %v1598
    %v1600 = vpop.xlane.xlu0 %1599
    %v1601 = vmul.f32 %v1597, %v1268
    %v1602 = vmul.f32 %v1600, %v1268
    %v1603 = vrsqrt.pop %v1601
    %v1604 = vmul.f32 %v1603, %v1601
    %v1605 = vmul.f32 %v1604, %v1603
    %v1606 = vmul.f32 0.5, %v1605
    %v1607 = vsub.f32 1.5, %v1606
    %v1608 = vmul.f32 %v1603, %v1607
    %v1609 = vmul.f32 %v1601, %v1608
    %vm1610 = vcmp.eq.f32.partialorder %v1601, inf
    %v1611 = vsel %vm1610, %v1601, %v1609
    %vm1612 = vcmp.eq.f32.partialorder %v1601, 0.0
    %v1613 = vand.u32 %v1601, 2147483648
    %v1614 = vsel %vm1612, %v1613, %v1611
    %v1615 = vrsqrt.pop %v1602
    %v1616 = vmul.f32 %v1615, %v1602
    %v1617 = vmul.f32 %v1616, %v1615
    %v1618 = vmul.f32 0.5, %v1617
    %v1619 = vsub.f32 1.5, %v1618
    %v1620 = vmul.f32 %v1615, %v1619
    %v1621 = vmul.f32 %v1602, %v1620
    %vm1622 = vcmp.eq.f32.partialorder %v1602, inf
    %v1623 = vsel %vm1622, %v1602, %v1621
    %vm1624 = vcmp.eq.f32.partialorder %v1602, 0.0
    %v1625 = vand.u32 %v1602, 2147483648
    %v1626 = vsel %vm1624, %v1625, %v1623
    %v1627 = vadd.f32 %v1614, 1e-08
    %v1628 = vadd.f32 %v1626, 1e-08
    %v1629 = vrcp.pop %v1627
    %v1630 = vmul.f32 %v1627, %v1629
    %v1631 = vsub.f32 1.0, %v1630
    %v1632 = vmul.f32 %v1629, %v1631
    %v1633 = vadd.f32 %v1629, %v1632
    %vm1634 = vweird.f32 %v1627
    %vm1635 = vweird.f32 %v1629
    %vm1636 = vmor %vm1634, %vm1635
    %v1637 = vsel %vm1636, %v1629, %v1633
    %v1638 = vand.u32 2147483647, %v1627
    %vm1639 = vcmp.eq.f32.partialorder %v1638, 8.507059e+37
    %v1640 = vand.u32 %v1627, 2147483648
    %v1641 = vor.u32 1.1754944e-38, %v1640
    %v1642 = vsel %vm1639, %v1641, %v1637
    %v1643 = vmul.f32 1.0, %v1642
    %v1644 = vrcp.pop %v1628
    %v1645 = vmul.f32 %v1628, %v1644
    %v1646 = vsub.f32 1.0, %v1645
    %v1647 = vmul.f32 %v1644, %v1646
    %v1648 = vadd.f32 %v1644, %v1647
    %vm1649 = vweird.f32 %v1628
    %vm1650 = vweird.f32 %v1644
    %vm1651 = vmor %vm1649, %vm1650
    %v1652 = vsel %vm1651, %v1644, %v1648
    %v1653 = vand.u32 2147483647, %v1628
    %vm1654 = vcmp.eq.f32.partialorder %v1653, 8.507059e+37
    %v1655 = vand.u32 %v1628, 2147483648
    %v1656 = vor.u32 1.1754944e-38, %v1655
    %v1657 = vsel %vm1654, %v1656, %v1652
    %v1658 = vmul.f32 1.0, %v1657
    %v1659 = vmul.f32 %v1587, %v1643
    %v1660 = vmul.f32 %v1588, %v1643
    %v1661 = vmul.f32 %v1589, %v1658
    %v1662 = vmul.f32 %v1590, %v1658
    %v1663 = vld [vmem:[#allocation10] sm:$0xf]
    %v1664 = vld [vmem:[#allocation10 + $0x4] sm:$0xf]
    %v1665 = vld [vmem:[#allocation10 + $0x8] sm:$0xf]
    %v1666 = vld [vmem:[#allocation10 + $0xc] sm:$0xf]
    %v1667 = vld [vmem:[#allocation10 + $0x10] sm:$0xf]
    %v1668 = vld [vmem:[#allocation10 + $0x14] sm:$0xf]
    %v1669 = vld [vmem:[#allocation10 + $0x18] sm:$0xf]
    %v1670 = vld [vmem:[#allocation10 + $0x1c] sm:$0xf]
    %v1671 = vld [vmem:[#allocation10 + $0x20] sm:$0xf]
    %v1672 = vld [vmem:[#allocation10 + $0x24] sm:$0xf]
    %v1673 = vld [vmem:[#allocation10 + $0x28] sm:$0xf]
    %v1674 = vld [vmem:[#allocation10 + $0x2c] sm:$0xf]
    %v1675 = vld [vmem:[#allocation10 + $0x30] sm:$0xf]
    %v1676 = vld [vmem:[#allocation10 + $0x34] sm:$0xf]
    %v1677 = vld [vmem:[#allocation10 + $0x38] sm:$0xf]
    %v1678 = vld [vmem:[#allocation10 + $0x3c] sm:$0xf]
    %v1679 = vld [vmem:[#allocation10 + $0x40] sm:$0xf]
    %v1680 = vld [vmem:[#allocation10 + $0x44] sm:$0xf]
    %v1681 = vld [vmem:[#allocation10 + $0x48] sm:$0xf]
    %v1682 = vld [vmem:[#allocation10 + $0x4c] sm:$0xf]
    %v1683 = vld [vmem:[#allocation10 + $0x50] sm:$0xf]
    %v1684 = vld [vmem:[#allocation10 + $0x54] sm:$0xf]
    %v1685 = vld [vmem:[#allocation10 + $0x58] sm:$0xf]
    %v1686 = vld [vmem:[#allocation10 + $0x5c] sm:$0xf]
    %v1687 = vld [vmem:[#allocation10 + $0x60] sm:$0xf]
    %v1688 = vld [vmem:[#allocation10 + $0x64] sm:$0xf]
    %v1689 = vld [vmem:[#allocation10 + $0x68] sm:$0xf]
    %v1690 = vld [vmem:[#allocation10 + $0x6c] sm:$0xf]
    %v1691 = vld [vmem:[#allocation10 + $0x70] sm:$0xf]
    %v1692 = vld [vmem:[#allocation10 + $0x74] sm:$0xf]
    %v1693 = vld [vmem:[#allocation10 + $0x78] sm:$0xf]
    %v1694 = vld [vmem:[#allocation10 + $0x7c] sm:$0xf]
    %v1695 = vld [vmem:[%s6] sm:$0x1]
    %v1696 = vpack.c.bf16 %v1661, %v1659
    %v1697 = vpack.c.bf16 %v1662, %v1660
    %v1699 = vperm.slane %v1695, 0
    %v1733 = vunpack.c.l.b16 %v1663
    %v1734 = vunpack.c.l.b16 %v1664
    %v1735 = vunpack.c.l.b16 %v1665
    %v1736 = vunpack.c.l.b16 %v1666
    %v1737 = vunpack.c.l.b16 %v1667
    %v1738 = vunpack.c.l.b16 %v1668
    %v1739 = vunpack.c.l.b16 %v1669
    %v1740 = vunpack.c.l.b16 %v1670
    %v1741 = vunpack.c.l.b16 %v1671
    %v1742 = vunpack.c.l.b16 %v1672
    %v1743 = vunpack.c.l.b16 %v1673
    %v1744 = vunpack.c.l.b16 %v1674
    %v1745 = vunpack.c.l.b16 %v1675
    %v1746 = vunpack.c.l.b16 %v1676
    %v1747 = vunpack.c.l.b16 %v1677
    %v1748 = vunpack.c.l.b16 %v1678
    %v1749 = vunpack.c.l.b16 %v1679
    %v1750 = vunpack.c.l.b16 %v1680
    %v1751 = vunpack.c.l.b16 %v1681
    %v1752 = vunpack.c.l.b16 %v1682
    %v1753 = vunpack.c.l.b16 %v1683
    %v1754 = vunpack.c.l.b16 %v1684
    %v1755 = vunpack.c.l.b16 %v1685
    %v1756 = vunpack.c.l.b16 %v1686
    %v1757 = vunpack.c.l.b16 %v1687
    %v1758 = vunpack.c.l.b16 %v1688
    %v1759 = vunpack.c.l.b16 %v1689
    %v1760 = vunpack.c.l.b16 %v1690
    %v1761 = vunpack.c.l.b16 %v1691
    %v1762 = vunpack.c.l.b16 %v1692
    %v1763 = vunpack.c.l.b16 %v1693
    %v1764 = vunpack.c.l.b16 %v1694
    %v1765 = vpack.c.b16 %v1734, %v1733
    %v1766 = vpack.c.b16 %v1736, %v1735
    %v1767 = vpack.c.b16 %v1738, %v1737
    %v1768 = vpack.c.b16 %v1740, %v1739
    %v1769 = vpack.c.b16 %v1742, %v1741
    %v1770 = vpack.c.b16 %v1744, %v1743
    %v1771 = vpack.c.b16 %v1746, %v1745
    %v1772 = vpack.c.b16 %v1748, %v1747
    %v1773 = vpack.c.b16 %v1750, %v1749
    %v1774 = vpack.c.b16 %v1752, %v1751
    %v1775 = vpack.c.b16 %v1754, %v1753
    %v1776 = vpack.c.b16 %v1756, %v1755
    %v1777 = vpack.c.b16 %v1758, %v1757
    %v1778 = vpack.c.b16 %v1760, %v1759
    %v1779 = vpack.c.b16 %v1762, %v1761
    %v1780 = vpack.c.b16 %v1764, %v1763
    %1797 = vmatpush.bf16.msra.mxu0 %v1772
    %1798 = vmatpush.bf16.msra.mxu0 %v1771
    %1799 = vmatpush.bf16.msra.mxu0 %v1770
    %1800 = vmatpush.bf16.msra.mxu0 %v1769
    %1801 = vmatpush.bf16.msra.mxu0 %v1768
    %1802 = vmatpush.bf16.msra.mxu0 %v1767
    %1803 = vmatpush.bf16.msra.mxu0 %v1766
    %1804 = vmatpush.bf16.msra.mxu0 %v1765
    %1805 = vmatmul.bf16.gmra.mxu0 %v1696
    %v1806 = vpop.f32.mrf.mxu0
    %v1807 = vadd.f32 %v1699, %v1806
    %v1808 = vpop.f32.mrf.mxu0
    %v1809 = vadd.f32 %v1699, %v1808
    %1810 = vdwg.mxu0
    %1811 = vmatpush.bf16.msra.mxu0 %v1780
    %1812 = vmatpush.bf16.msra.mxu0 %v1779
    %1813 = vmatpush.bf16.msra.mxu0 %v1778
    %1814 = vmatpush.bf16.msra.mxu0 %v1777
    %1815 = vmatpush.bf16.msra.mxu0 %v1776
    %1816 = vmatpush.bf16.msra.mxu0 %v1775
    %1817 = vmatpush.bf16.msra.mxu0 %v1774
    %1818 = vmatpush.bf16.msra.mxu0 %v1773
    %1819 = vmatmul.bf16.gmra.mxu0 %v1697
    %v1820 = vpop.f32.mrf.mxu0
    %v1821 = vadd.f32 %v1807, %v1820
    %v1822 = vpop.f32.mrf.mxu0
    %v1823 = vadd.f32 %v1809, %v1822
    %1824 = vdwg.mxu0
    %v1825 = vmax.f32 %v1821, 0.0
    %v1826 = vmax.f32 %v1823, 0.0
    %v1827 = vmul.f32 %v1825, %v1825
    %v1828 = vmul.f32 %v1826, %v1826
    %1829 = vadd.xlane.f32.xlu0 %v1827
    %v1830 = vpop.xlane.xlu0 %1829
    %1831 = vadd.xlane.f32.xlu0 %v1828
    %v1832 = vpop.xlane.xlu0 %1831
    %v1833 = vrcp.pop 128.0
    %v1834 = vmul.f32 128.0, %v1833
    %v1835 = vsub.f32 1.0, %v1834
    %v1836 = vmul.f32 %v1833, %v1835
    %v1837 = vadd.f32 %v1833, %v1836
    %vm1838 = vweird.f32 %v1833
    %v1839 = vsel %vm1838, %v1833, %v1837
    %v1840 = vmul.f32 %v1830, %v1839
    %v1841 = vmul.f32 %v1832, %v1839
    %v1842 = vrsqrt.pop %v1840
    %v1843 = vmul.f32 %v1842, %v1840
    %v1844 = vmul.f32 %v1843, %v1842
    %v1845 = vmul.f32 0.5, %v1844
    %v1846 = vsub.f32 1.5, %v1845
    %v1847 = vmul.f32 %v1842, %v1846
    %v1848 = vmul.f32 %v1840, %v1847
    %vm1849 = vcmp.eq.f32.partialorder %v1840, inf
    %v1850 = vsel %vm1849, %v1840, %v1848
    %vm1851 = vcmp.eq.f32.partialorder %v1840, 0.0
    %v1852 = vand.u32 %v1840, 2147483648
    %v1853 = vsel %vm1851, %v1852, %v1850
    %v1854 = vrsqrt.pop %v1841
    %v1855 = vmul.f32 %v1854, %v1841
    %v1856 = vmul.f32 %v1855, %v1854
    %v1857 = vmul.f32 0.5, %v1856
    %v1858 = vsub.f32 1.5, %v1857
    %v1859 = vmul.f32 %v1854, %v1858
    %v1860 = vmul.f32 %v1841, %v1859
    %vm1861 = vcmp.eq.f32.partialorder %v1841, inf
    %v1862 = vsel %vm1861, %v1841, %v1860
    %vm1863 = vcmp.eq.f32.partialorder %v1841, 0.0
    %v1864 = vand.u32 %v1841, 2147483648
    %v1865 = vsel %vm1863, %v1864, %v1862
    %v1866 = vadd.f32 %v1853, 1e-08
    %v1867 = vadd.f32 %v1865, 1e-08
    %v1868 = vrcp.pop %v1866
    %v1869 = vmul.f32 %v1866, %v1868
    %v1870 = vsub.f32 1.0, %v1869
    %v1871 = vmul.f32 %v1868, %v1870
    %v1872 = vadd.f32 %v1868, %v1871
    %vm1873 = vweird.f32 %v1866
    %vm1874 = vweird.f32 %v1868
    %vm1875 = vmor %vm1873, %vm1874
    %v1876 = vsel %vm1875, %v1868, %v1872
    %v1877 = vand.u32 2147483647, %v1866
    %vm1878 = vcmp.eq.f32.partialorder %v1877, 8.507059e+37
    %v1879 = vand.u32 %v1866, 2147483648
    %v1880 = vor.u32 1.1754944e-38, %v1879
    %v1881 = vsel %vm1878, %v1880, %v1876
    %v1882 = vmul.f32 1.0, %v1881
    %v1883 = vrcp.pop %v1867
    %v1884 = vmul.f32 %v1867, %v1883
    %v1885 = vsub.f32 1.0, %v1884
    %v1886 = vmul.f32 %v1883, %v1885
    %v1887 = vadd.f32 %v1883, %v1886
    %vm1888 = vweird.f32 %v1867
    %vm1889 = vweird.f32 %v1883
    %vm1890 = vmor %vm1888, %vm1889
    %v1891 = vsel %vm1890, %v1883, %v1887
    %v1892 = vand.u32 2147483647, %v1867
    %vm1893 = vcmp.eq.f32.partialorder %v1892, 8.507059e+37
    %v1894 = vand.u32 %v1867, 2147483648
    %v1895 = vor.u32 1.1754944e-38, %v1894
    %v1896 = vsel %vm1893, %v1895, %v1891
    %v1897 = vmul.f32 1.0, %v1896
    %v1898 = vmul.f32 %v1825, %v1882
    %v1899 = vmul.f32 %v1826, %v1897
    %v1900 = vpack.c.bf16 %v1898, %v1898
    %v1901 = vpack.c.bf16 %v1899, %v1899
    %1902 = vst [vmem:[#allocation11] sm:$0xf] %v1900
    %1903 = vst [vmem:[#allocation11 + $0x4] sm:$0xf] %v1901
    // Predicated region
    $region50: #{tpu_custom_call.1} parent=1 // pred_check
      _
    $region51: #{tpu_custom_call.1} parent=1 // pred_check_branch
      %1905 = sbr.rel (0) target = $region53
    $region52: #{tpu_custom_call.1} parent=1 // pred_region
      %1907 = vsyncadd [#allocation4], 0
      %s1908 = sshll.u32 [#allocation11], 4
      %s1909 = int_to_ptr.vmem [resolvable:$true] %s1908
      %s1910 = sshll.u32 %s7, 4
      %s1911 = int_to_ptr.hbm [resolvable:$true] %s1910
      %1916 = dma.vmem_to_hbm [thread:$0]  %s1909, 128, %s1911, [#allocation4], 64, 64, 4
    $region53: #{tpu_custom_call.1} parent=1 // pred_fallthru
      _
    // Predicated region
    $region54: #{tpu_custom_call.1} parent=1 // pred_check
      _
    $region55: #{tpu_custom_call.1} parent=1 // pred_check_branch
      %1918 = sbr.rel (0) target = $region57
    $region56: #{tpu_custom_call.1} parent=1 // pred_region
      %1920 = dma.done [#allocation4], 128
    $region57: #{tpu_custom_call.1} parent=1 // pred_fallthru
      _
    %1921 = vsyncpa [#allocation3], 1
    %1922 = vsyncpa [#allocation6], 1
    %1923 = vsyncpa [#allocation9], 1
    %1924 = vsyncpa [#allocation4], 1

// kernel: tpu_custom_call.1
$region0: #{tpu_custom_call.1}
  #allocation0 [shape = 'u32[]', space=smem, size = 0x4, offset = 0x4, fixed_abs, tag = 'smem constant byte address 0x4 - core index']
  #allocation1 [shape = 'u32[72,128]{1,0:T(1,128)}', space=vmem, size = 0x9000, scoped, tag = 'internal scratch']
  %s0 = inlined_call_operand.hbm [shape: bf16[16,1024], index: 0, kind: input, shape index: {}]
  %s1 = inlined_call_operand.hbm [shape: bf16[1024,256], index: 1, kind: input, shape index: {}]
  %s2 = inlined_call_operand.hbm [shape: f32[1,256], index: 2, kind: input, shape index: {}]
  %s3 = inlined_call_operand.hbm [shape: bf16[256,256], index: 3, kind: input, shape index: {}]
  %s4 = inlined_call_operand.vmem [shape: f32[1,256], index: 4, kind: input, shape index: {}]
  %s5 = inlined_call_operand.hbm [shape: bf16[256,128], index: 5, kind: input, shape index: {}]
  %s6 = inlined_call_operand.vmem [shape: f32[1,128], index: 6, kind: input, shape index: {}]
  %s7 = inlined_call_operand.hbm [shape: bf16[16,128], index: 7, kind: output, shape index: {}]
  %s8 = sld [smem:[#allocation0]]
  $region58: #{tpu_custom_call.1} parent=0
    _
  %s10 = ssub.s32 1, %s8
  %s11 = scalar_select 0, %s10, %s8
  $region1: #{tpu_custom_call.1} parent=0
    #allocation2 [shape = 'u8[32768]{0}', space=vmem, size = 0x8000, scoped, tag = 'input window, operand 0, single buffered']
    #allocation3 [shape = 's32[1]{0}', space=sflag, size = 0x4, scoped, tag = 'scoped memory for tpu_custom_call.1']
    #allocation4 [shape = 's32[1]{0}', space=sflag, size = 0x4, scoped, tag = 'scoped memory for tpu_custom_call.1']
    #allocation5 [shape = 'u8[524288]{0}', space=vmem, size = 0x80000, scoped, tag = 'input window, operand 1, single buffered']
    #allocation6 [shape = 's32[1]{0}', space=sflag, size = 0x4, scoped, tag = 'scoped memory for tpu_custom_call.1']
    #allocation7 [shape = 'u8[1024]{0}', space=vmem, size = 0x400, scoped, tag = 'input window, operand 2, single buffered']
    #allocation8 [shape = 'u8[131072]{0}', space=vmem, size = 0x20000, scoped, tag = 'input window, operand 3, single buffered']
    #allocation9 [shape = 's32[1]{0}', space=sflag, size = 0x4, scoped, tag = 'scoped memory for tpu_custom_call.1']
    #allocation10 [shape = 'u8[65536]{0}', space=vmem, size = 0x10000, scoped, tag = 'input window, operand 5, single buffered']
    #allocation11 [shape = 'u8[4096]{0}', space=vmem, size = 0x1000, scoped, tag = 'output window, operand 0, single buffered']
    %12 = vsyncpa [#allocation3], 0
    %13 = vsyncpa [#allocation6], 0
    %14 = vsyncpa [#allocation9], 0
    %15 = vsyncpa [#allocation4], 0
    // Predicated region
    $region2: #{tpu_custom_call.1} parent=1 // pred_check
      _
    $region3: #{tpu_custom_call.1} parent=1 // pred_check_branch
      %17 = sbr.rel (0) target = $region5
    $region4: #{tpu_custom_call.1} parent=1 // pred_region
      %19 = vsyncadd [#allocation3], 0
      %s20 = sshll.u32 %s0, 4
      %s21 = int_to_ptr.hbm [resolvable:$true] %s20
      %s22 = sshll.u32 [#allocation2], 4
      %s23 = int_to_ptr.vmem [resolvable:$true] %s22
      %28 = dma.hbm_to_vmem [thread:$0]  %s21, 1024, %s23, [#allocation3], 512, 512, 32
    $region5: #{tpu_custom_call.1} parent=1 // pred_fallthru
      _
    // Predicated region
    $region6: #{tpu_custom_call.1} parent=1 // pred_check
      _
    $region7: #{tpu_custom_call.1} parent=1 // pred_check_branch
      %30 = sbr.rel (0) target = $region9
    $region8: #{tpu_custom_call.1} parent=1 // pred_region
      %32 = vsyncadd [#allocation6], 0
      %s33 = sshll.u32 %s1, 4
      %s34 = int_to_ptr.hbm [resolvable:$true] %s33
      %s35 = sshll.u32 [#allocation5], 4
      %s36 = int_to_ptr.vmem [resolvable:$true] %s35
      %41 = dma.hbm_to_vmem [thread:$0]  %s34, 16384, %s36, [#allocation6], 128, 128, 8
    $region9: #{tpu_custom_call.1} parent=1 // pred_fallthru
      _
    // Predicated region
    $region10: #{tpu_custom_call.1} parent=1 // pred_check
      _
    $region11: #{tpu_custom_call.1} parent=1 // pred_check_branch
      %43 = sbr.rel (0) target = $region13
    $region12: #{tpu_custom_call.1} parent=1 // pred_region
      %45 = vsyncadd [#allocation6], 0
      %s47 = sshll.u32 %s2, 4
      %s48 = int_to_ptr.hbm [resolvable:$true] %s47
      %s49 = sshll.u32 [#allocation7], 4
      %s50 = int_to_ptr.vmem [resolvable:$true] %s49
      %52 = dma.hbm_to_vmem [thread:$0]  %s48, 32, %s50, [#allocation6]
    $region13: #{tpu_custom_call.1} parent=1 // pred_fallthru
      _
    // Predicated region
    $region14: #{tpu_custom_call.1} parent=1 // pred_check
      _
    $region15: #{tpu_custom_call.1} parent=1 // pred_check_branch
      %54 = sbr.rel (0) target = $region17
    $region16: #{tpu_custom_call.1} parent=1 // pred_region
      %56 = vsyncadd [#allocation9], 0
      %s57 = sshll.u32 %s3, 4
      %s58 = int_to_ptr.hbm [resolvable:$true] %s57
      %s59 = sshll.u32 [#allocation8], 4
      %s60 = int_to_ptr.vmem [resolvable:$true] %s59
      %65 = dma.hbm_to_vmem [thread:$0]  %s58, 4096, %s60, [#allocation9], 128, 128, 8
    $region17: #{tpu_custom_call.1} parent=1 // pred_fallthru
      _
    // Predicated region
    $region18: #{tpu_custom_call.1} parent=1 // pred_check
      _
    $region19: #{tpu_custom_call.1} parent=1 // pred_check_branch
      %67 = sbr.rel (0) target = $region21
    $region20: #{tpu_custom_call.1} parent=1 // pred_region
      _
    $region21: #{tpu_custom_call.1} parent=1 // pred_fallthru
      _
    // Predicated region
    $region22: #{tpu_custom_call.1} parent=1 // pred_check
      _
    $region23: #{tpu_custom_call.1} parent=1 // pred_check_branch
      %69 = sbr.rel (0) target = $region25
    $region24: #{tpu_custom_call.1} parent=1 // pred_region
      %71 = vsyncadd [#allocation9], 0
      %s72 = sshll.u32 %s5, 4
      %s73 = int_to_ptr.hbm [resolvable:$true] %s72
      %s74 = sshll.u32 [#allocation10], 4
      %s75 = int_to_ptr.vmem [resolvable:$true] %s74
      %80 = dma.hbm_to_vmem [thread:$0]  %s73, 2048, %s75, [#allocation9], 64, 64, 4
    $region25: #{tpu_custom_call.1} parent=1 // pred_fallthru
      _
    // Predicated region
    $region26: #{tpu_custom_call.1} parent=1 // pred_check
      _
    $region27: #{tpu_custom_call.1} parent=1 // pred_check_branch
      %82 = sbr.rel (0) target = $region29
    $region28: #{tpu_custom_call.1} parent=1 // pred_region
      _
    $region29: #{tpu_custom_call.1} parent=1 // pred_fallthru
      _
    // Predicated region
    $region30: #{tpu_custom_call.1} parent=1 // pred_check
      _
    $region31: #{tpu_custom_call.1} parent=1 // pred_check_branch
      %84 = sbr.rel (0) target = $region33
    $region32: #{tpu_custom_call.1} parent=1 // pred_region
      %86 = dma.done [#allocation3], 1024
    $region33: #{tpu_custom_call.1} parent=1 // pred_fallthru
      _
    // Predicated region
    $region34: #{tpu_custom_call.1} parent=1 // pred_check
      _
    $region35: #{tpu_custom_call.1} parent=1 // pred_check_branch
      %88 = sbr.rel (0) target = $region37
    $region36: #{tpu_custom_call.1} parent=1 // pred_region
      %90 = dma.done [#allocation6], 16384
    $region37: #{tpu_custom_call.1} parent=1 // pred_fallthru
      _
    // Predicated region
    $region38: #{tpu_custom_call.1} parent=1 // pred_check
      _
    $region39: #{tpu_custom_call.1} parent=1 // pred_check_branch
      %92 = sbr.rel (0) target = $region41
    $region40: #{tpu_custom_call.1} parent=1 // pred_region
      %94 = dma.done [#allocation6], 32
    $region41: #{tpu_custom_call.1} parent=1 // pred_fallthru
      _
    // Predicated region
    $region42: #{tpu_custom_call.1} parent=1 // pred_check
      _
    $region43: #{tpu_custom_call.1} parent=1 // pred_check_branch
      %96 = sbr.rel (0) target = $region45
    $region44: #{tpu_custom_call.1} parent=1 // pred_region
      %98 = dma.done [#allocation9], 4096
    $region45: #{tpu_custom_call.1} parent=1 // pred_fallthru
      _
    // Predicated region
    $region46: #{tpu_custom_call.1} parent=1 // pred_check
      _
    $region47: #{tpu_custom_call.1} parent=1 // pred_check_branch
      %100 = sbr.rel (0) target = $region49
    $region48: #{tpu_custom_call.1} parent=1 // pred_region
      %102 = dma.done [#allocation9], 2048
    $region49: #{tpu_custom_call.1} parent=1 // pred_fallthru
      _
    %v103 = vld [vmem:[#allocation2] sm:$0xff]
    %v104 = vld [vmem:[#allocation2 + $0x8] sm:$0xff]
    %v105 = vld [vmem:[#allocation2 + $0x10] sm:$0xff]
    %v106 = vld [vmem:[#allocation2 + $0x18] sm:$0xff]
    %v107 = vld [vmem:[#allocation2 + $0x20] sm:$0xff]
    %v108 = vld [vmem:[#allocation2 + $0x28] sm:$0xff]
    %v109 = vld [vmem:[#allocation2 + $0x30] sm:$0xff]
    %v110 = vld [vmem:[#allocation2 + $0x38] sm:$0xff]
    %v111 = vunpack.c.l.bf16 %v103
    %v112 = vunpack.c.h.bf16 %v103
    %v113 = vunpack.c.l.bf16 %v104
    %v114 = vunpack.c.h.bf16 %v104
    %v115 = vunpack.c.l.bf16 %v105
    %v116 = vunpack.c.h.bf16 %v105
    %v117 = vunpack.c.l.bf16 %v106
    %v118 = vunpack.c.h.bf16 %v106
    %v119 = vunpack.c.l.bf16 %v107
    %v120 = vunpack.c.h.bf16 %v107
    %v121 = vunpack.c.l.bf16 %v108
    %v122 = vunpack.c.h.bf16 %v108
    %v123 = vunpack.c.l.bf16 %v109
    %v124 = vunpack.c.h.bf16 %v109
    %v125 = vunpack.c.l.bf16 %v110
    %v126 = vunpack.c.h.bf16 %v110
    %v127 = vmul.f32 %v111, %v111
    %v128 = vmul.f32 %v112, %v112
    %v129 = vmul.f32 %v113, %v113
    %v130 = vmul.f32 %v114, %v114
    %v131 = vmul.f32 %v115, %v115
    %v132 = vmul.f32 %v116, %v116
    %v133 = vmul.f32 %v117, %v117
    %v134 = vmul.f32 %v118, %v118
    %v135 = vmul.f32 %v119, %v119
    %v136 = vmul.f32 %v120, %v120
    %v137 = vmul.f32 %v121, %v121
    %v138 = vmul.f32 %v122, %v122
    %v139 = vmul.f32 %v123, %v123
    %v140 = vmul.f32 %v124, %v124
    %v141 = vmul.f32 %v125, %v125
    %v142 = vmul.f32 %v126, %v126
    %v143 = vadd.f32 %v127, %v128
    %v144 = vadd.f32 %v143, %v129
    %v145 = vadd.f32 %v144, %v130
    %v146 = vadd.f32 %v145, %v131
    %v147 = vadd.f32 %v146, %v132
    %v148 = vadd.f32 %v147, %v133
    %v149 = vadd.f32 %v148, %v134
    %150 = vadd.xlane.f32.xlu0 %v149
    %v151 = vpop.xlane.xlu0 %150
    %v152 = vadd.f32 %v135, %v136
    %v153 = vadd.f32 %v152, %v137
    %v154 = vadd.f32 %v153, %v138
    %v155 = vadd.f32 %v154, %v139
    %v156 = vadd.f32 %v155, %v140
    %v157 = vadd.f32 %v156, %v141
    %v158 = vadd.f32 %v157, %v142
    %159 = vadd.xlane.f32.xlu0 %v158
    %v160 = vpop.xlane.xlu0 %159
    %v161 = vrcp.pop 1024.0
    %v162 = vmul.f32 1024.0, %v161
    %v163 = vsub.f32 1.0, %v162
    %v164 = vmul.f32 %v161, %v163
    %v165 = vadd.f32 %v161, %v164
    %vm166 = vweird.f32 %v161
    %v167 = vsel %vm166, %v161, %v165
    %v168 = vmul.f32 %v151, %v167
    %v169 = vmul.f32 %v160, %v167
    %v170 = vrsqrt.pop %v168
    %v171 = vmul.f32 %v170, %v168
    %v172 = vmul.f32 %v171, %v170
    %v173 = vmul.f32 0.5, %v172
    %v174 = vsub.f32 1.5, %v173
    %v175 = vmul.f32 %v170, %v174
    %v176 = vmul.f32 %v168, %v175
    %vm177 = vcmp.eq.f32.partialorder %v168, inf
    %v178 = vsel %vm177, %v168, %v176
    %vm179 = vcmp.eq.f32.partialorder %v168, 0.0
    %v180 = vand.u32 %v168, 2147483648
    %v181 = vsel %vm179, %v180, %v178
    %v182 = vrsqrt.pop %v169
    %v183 = vmul.f32 %v182, %v169
    %v184 = vmul.f32 %v183, %v182
    %v185 = vmul.f32 0.5, %v184
    %v186 = vsub.f32 1.5, %v185
    %v187 = vmul.f32 %v182, %v186
    %v188 = vmul.f32 %v169, %v187
    %vm189 = vcmp.eq.f32.partialorder %v169, inf
    %v190 = vsel %vm189, %v169, %v188
    %vm191 = vcmp.eq.f32.partialorder %v169, 0.0
    %v192 = vand.u32 %v169, 2147483648
    %v193 = vsel %vm191, %v192, %v190
    %v194 = vadd.f32 %v181, 1e-08
    %v195 = vadd.f32 %v193, 1e-08
    %v196 = vrcp.pop %v194
    %v197 = vmul.f32 %v194, %v196
    %v198 = vsub.f32 1.0, %v197
    %v199 = vmul.f32 %v196, %v198
    %v200 = vadd.f32 %v196, %v199
    %vm201 = vweird.f32 %v194
    %vm202 = vweird.f32 %v196
    %vm203 = vmor %vm201, %vm202
    %v204 = vsel %vm203, %v196, %v200
    %v205 = vand.u32 2147483647, %v194
    %vm206 = vcmp.eq.f32.partialorder %v205, 8.507059e+37
    %v207 = vand.u32 %v194, 2147483648
    %v208 = vor.u32 1.1754944e-38, %v207
    %v209 = vsel %vm206, %v208, %v204
    %v210 = vmul.f32 1.0, %v209
    %v211 = vrcp.pop %v195
    %v212 = vmul.f32 %v195, %v211
    %v213 = vsub.f32 1.0, %v212
    %v214 = vmul.f32 %v211, %v213
    %v215 = vadd.f32 %v211, %v214
    %vm216 = vweird.f32 %v195
    %vm217 = vweird.f32 %v211
    %vm218 = vmor %vm216, %vm217
    %v219 = vsel %vm218, %v211, %v215
    %v220 = vand.u32 2147483647, %v195
    %vm221 = vcmp.eq.f32.partialorder %v220, 8.507059e+37
    %v222 = vand.u32 %v195, 2147483648
    %v223 = vor.u32 1.1754944e-38, %v222
    %v224 = vsel %vm221, %v223, %v219
    %v225 = vmul.f32 1.0, %v224
    %v226 = vmul.f32 %v111, %v210
    %v227 = vmul.f32 %v112, %v210
    %v228 = vmul.f32 %v113, %v210
    %v229 = vmul.f32 %v114, %v210
    %v230 = vmul.f32 %v115, %v210
    %v231 = vmul.f32 %v116, %v210
    %v232 = vmul.f32 %v117, %v210
    %v233 = vmul.f32 %v118, %v210
    %v234 = vmul.f32 %v119, %v225
    %v235 = vmul.f32 %v120, %v225
    %v236 = vmul.f32 %v121, %v225
    %v237 = vmul.f32 %v122, %v225
    %v238 = vmul.f32 %v123, %v225
    %v239 = vmul.f32 %v124, %v225
    %v240 = vmul.f32 %v125, %v225
    %v241 = vmul.f32 %v126, %v225
    %v242 = vld [vmem:[#allocation5] sm:$0xff]
    %v243 = vld [vmem:[#allocation5 + $0x8] sm:$0xff]
    %v244 = vld [vmem:[#allocation5 + $0x10] sm:$0xff]
    %v245 = vld [vmem:[#allocation5 + $0x18] sm:$0xff]
    %v246 = vld [vmem:[#allocation5 + $0x20] sm:$0xff]
    %v247 = vld [vmem:[#allocation5 + $0x28] sm:$0xff]
    %v248 = vld [vmem:[#allocation5 + $0x30] sm:$0xff]
    %v249 = vld [vmem:[#allocation5 + $0x38] sm:$0xff]
    %v250 = vld [vmem:[#allocation5 + $0x40] sm:$0xff]
    %v251 = vld [vmem:[#allocation5 + $0x48] sm:$0xff]
    %v252 = vld [vmem:[#allocation5 + $0x50] sm:$0xff]
    %v253 = vld [vmem:[#allocation5 + $0x58] sm:$0xff]
    %v254 = vld [vmem:[#allocation5 + $0x60] sm:$0xff]
    %v255 = vld [vmem:[#allocation5 + $0x68] sm:$0xff]
    %v256 = vld [vmem:[#allocation5 + $0x70] sm:$0xff]
    %v257 = vld [vmem:[#allocation5 + $0x78] sm:$0xff]
    %v258 = vld [vmem:[#allocation5 + $0x80] sm:$0xff]
    %v259 = vld [vmem:[#allocation5 + $0x88] sm:$0xff]
    %v260 = vld [vmem:[#allocation5 + $0x90] sm:$0xff]
    %v261 = vld [vmem:[#allocation5 + $0x98] sm:$0xff]
    %v262 = vld [vmem:[#allocation5 + $0xa0] sm:$0xff]
    %v263 = vld [vmem:[#allocation5 + $0xa8] sm:$0xff]
    %v264 = vld [vmem:[#allocation5 + $0xb0] sm:$0xff]
    %v265 = vld [vmem:[#allocation5 + $0xb8] sm:$0xff]
    %v266 = vld [vmem:[#allocation5 + $0xc0] sm:$0xff]
    %v267 = vld [vmem:[#allocation5 + $0xc8] sm:$0xff]
    %v268 = vld [vmem:[#allocation5 + $0xd0] sm:$0xff]
    %v269 = vld [vmem:[#allocation5 + $0xd8] sm:$0xff]
    %v270 = vld [vmem:[#allocation5 + $0xe0] sm:$0xff]
    %v271 = vld [vmem:[#allocation5 + $0xe8] sm:$0xff]
    %v272 = vld [vmem:[#allocation5 + $0xf0] sm:$0xff]
    %v273 = vld [vmem:[#allocation5 + $0xf8] sm:$0xff]
    %v274 = vld [vmem:[#allocation5 + $0x100] sm:$0xff]
    %v275 = vld [vmem:[#allocation5 + $0x108] sm:$0xff]
    %v276 = vld [vmem:[#allocation5 + $0x110] sm:$0xff]
    %v277 = vld [vmem:[#allocation5 + $0x118] sm:$0xff]
    %v278 = vld [vmem:[#allocation5 + $0x120] sm:$0xff]
    %v279 = vld [vmem:[#allocation5 + $0x128] sm:$0xff]
    %v280 = vld [vmem:[#allocation5 + $0x130] sm:$0xff]
    %v281 = vld [vmem:[#allocation5 + $0x138] sm:$0xff]
    %v282 = vld [vmem:[#allocation5 + $0x140] sm:$0xff]
    %v283 = vld [vmem:[#allocation5 + $0x148] sm:$0xff]
    %v284 = vld [vmem:[#allocation5 + $0x150] sm:$0xff]
    %v285 = vld [vmem:[#allocation5 + $0x158] sm:$0xff]
    %v286 = vld [vmem:[#allocation5 + $0x160] sm:$0xff]
    %v287 = vld [vmem:[#allocation5 + $0x168] sm:$0xff]
    %v288 = vld [vmem:[#allocation5 + $0x170] sm:$0xff]
    %v289 = vld [vmem:[#allocation5 + $0x178] sm:$0xff]
    %v290 = vld [vmem:[#allocation5 + $0x180] sm:$0xff]
    %v291 = vld [vmem:[#allocation5 + $0x188] sm:$0xff]
    %v292 = vld [vmem:[#allocation5 + $0x190] sm:$0xff]
    %v293 = vld [vmem:[#allocation5 + $0x198] sm:$0xff]
    %v294 = vld [vmem:[#allocation5 + $0x1a0] sm:$0xff]
    %v295 = vld [vmem:[#allocation5 + $0x1a8] sm:$0xff]
    %v296 = vld [vmem:[#allocation5 + $0x1b0] sm:$0xff]
    %v297 = vld [vmem:[#allocation5 + $0x1b8] sm:$0xff]
    %v298 = vld [vmem:[#allocation5 + $0x1c0] sm:$0xff]
    %v299 = vld [vmem:[#allocation5 + $0x1c8] sm:$0xff]
    %v300 = vld [vmem:[#allocation5 + $0x1d0] sm:$0xff]
    %v301 = vld [vmem:[#allocation5 + $0x1d8] sm:$0xff]
    %v302 = vld [vmem:[#allocation5 + $0x1e0] sm:$0xff]
    %v303 = vld [vmem:[#allocation5 + $0x1e8] sm:$0xff]
    %v304 = vld [vmem:[#allocation5 + $0x1f0] sm:$0xff]
    %v305 = vld [vmem:[#allocation5 + $0x1f8] sm:$0xff]
    %v306 = vld [vmem:[#allocation5 + $0x200] sm:$0xff]
    %v307 = vld [vmem:[#allocation5 + $0x208] sm:$0xff]
    %v308 = vld [vmem:[#allocation5 + $0x210] sm:$0xff]
    %v309 = vld [vmem:[#allocation5 + $0x218] sm:$0xff]
    %v310 = vld [vmem:[#allocation5 + $0x220] sm:$0xff]
    %v311 = vld [vmem:[#allocation5 + $0x228] sm:$0xff]
    %v312 = vld [vmem:[#allocation5 + $0x230] sm:$0xff]
    %v313 = vld [vmem:[#allocation5 + $0x238] sm:$0xff]
    %v314 = vld [vmem:[#allocation5 + $0x240] sm:$0xff]
    %v315 = vld [vmem:[#allocation5 + $0x248] sm:$0xff]
    %v316 = vld [vmem:[#allocation5 + $0x250] sm:$0xff]
    %v317 = vld [vmem:[#allocation5 + $0x258] sm:$0xff]
    %v318 = vld [vmem:[#allocation5 + $0x260] sm:$0xff]
    %v319 = vld [vmem:[#allocation5 + $0x268] sm:$0xff]
    %v320 = vld [vmem:[#allocation5 + $0x270] sm:$0xff]
    %v321 = vld [vmem:[#allocation5 + $0x278] sm:$0xff]
    %v322 = vld [vmem:[#allocation5 + $0x280] sm:$0xff]
    %v323 = vld [vmem:[#allocation5 + $0x288] sm:$0xff]
    %v324 = vld [vmem:[#allocation5 + $0x290] sm:$0xff]
    %v325 = vld [vmem:[#allocation5 + $0x298] sm:$0xff]
    %v326 = vld [vmem:[#allocation5 + $0x2a0] sm:$0xff]
    %v327 = vld [vmem:[#allocation5 + $0x2a8] sm:$0xff]
    %v328 = vld [vmem:[#allocation5 + $0x2b0] sm:$0xff]
    %v329 = vld [vmem:[#allocation5 + $0x2b8] sm:$0xff]
    %v330 = vld [vmem:[#allocation5 + $0x2c0] sm:$0xff]
    %v331 = vld [vmem:[#allocation5 + $0x2c8] sm:$0xff]
    %v332 = vld [vmem:[#allocation5 + $0x2d0] sm:$0xff]
    %v333 = vld [vmem:[#allocation5 + $0x2d8] sm:$0xff]
    %v334 = vld [vmem:[#allocation5 + $0x2e0] sm:$0xff]
    %v335 = vld [vmem:[#allocation5 + $0x2e8] sm:$0xff]
    %v336 = vld [vmem:[#allocation5 + $0x2f0] sm:$0xff]
    %v337 = vld [vmem:[#allocation5 + $0x2f8] sm:$0xff]
    %v338 = vld [vmem:[#allocation5 + $0x300] sm:$0xff]
    %v339 = vld [vmem:[#allocation5 + $0x308] sm:$0xff]
    %v340 = vld [vmem:[#allocation5 + $0x310] sm:$0xff]
    %v341 = vld [vmem:[#allocation5 + $0x318] sm:$0xff]
    %v342 = vld [vmem:[#allocation5 + $0x320] sm:$0xff]
    %v343 = vld [vmem:[#allocation5 + $0x328] sm:$0xff]
    %v344 = vld [vmem:[#allocation5 + $0x330] sm:$0xff]
    %v345 = vld [vmem:[#allocation5 + $0x338] sm:$0xff]
    %v346 = vld [vmem:[#allocation5 + $0x340] sm:$0xff]
    %v347 = vld [vmem:[#allocation5 + $0x348] sm:$0xff]
    %v348 = vld [vmem:[#allocation5 + $0x350] sm:$0xff]
    %v349 = vld [vmem:[#allocation5 + $0x358] sm:$0xff]
    %v350 = vld [vmem:[#allocation5 + $0x360] sm:$0xff]
    %v351 = vld [vmem:[#allocation5 + $0x368] sm:$0xff]
    %v352 = vld [vmem:[#allocation5 + $0x370] sm:$0xff]
    %v353 = vld [vmem:[#allocation5 + $0x378] sm:$0xff]
    %v354 = vld [vmem:[#allocation5 + $0x380] sm:$0xff]
    %v355 = vld [vmem:[#allocation5 + $0x388] sm:$0xff]
    %v356 = vld [vmem:[#allocation5 + $0x390] sm:$0xff]
    %v357 = vld [vmem:[#allocation5 + $0x398] sm:$0xff]
    %v358 = vld [vmem:[#allocation5 + $0x3a0] sm:$0xff]
    %v359 = vld [vmem:[#allocation5 + $0x3a8] sm:$0xff]
    %v360 = vld [vmem:[#allocation5 + $0x3b0] sm:$0xff]
    %v361 = vld [vmem:[#allocation5 + $0x3b8] sm:$0xff]
    %v362 = vld [vmem:[#allocation5 + $0x3c0] sm:$0xff]
    %v363 = vld [vmem:[#allocation5 + $0x3c8] sm:$0xff]
    %v364 = vld [vmem:[#allocation5 + $0x3d0] sm:$0xff]
    %v365 = vld [vmem:[#allocation5 + $0x3d8] sm:$0xff]
    %v366 = vld [vmem:[#allocation5 + $0x3e0] sm:$0xff]
    %v367 = vld [vmem:[#allocation5 + $0x3e8] sm:$0xff]
    %v368 = vld [vmem:[#allocation5 + $0x3f0] sm:$0xff]
    %v369 = vld [vmem:[#allocation5 + $0x3f8] sm:$0xff]
    %v370 = vld [vmem:[#allocation7] sm:$0x3]
    %v371 = vpack.c.bf16 %v234, %v226
    %v372 = vpack.c.bf16 %v235, %v227
    %v373 = vpack.c.bf16 %v236, %v228
    %v374 = vpack.c.bf16 %v237, %v229
    %v375 = vpack.c.bf16 %v238, %v230
    %v376 = vpack.c.bf16 %v239, %v231
    %v377 = vpack.c.bf16 %v240, %v232
    %v378 = vpack.c.bf16 %v241, %v233
    %v380 = vperm.slane %v370, 0
    %v381 = vperm.slane %v370, 1
    %v512 = vunpack.c.l.b16 %v242
    %v513 = vunpack.c.h.b16 %v242
    %v514 = vunpack.c.l.b16 %v243
    %v515 = vunpack.c.h.b16 %v243
    %v516 = vunpack.c.l.b16 %v244
    %v517 = vunpack.c.h.b16 %v244
    %v518 = vunpack.c.l.b16 %v245
    %v519 = vunpack.c.h.b16 %v245
    %v520 = vunpack.c.l.b16 %v246
    %v521 = vunpack.c.h.b16 %v246
    %v522 = vunpack.c.l.b16 %v247
    %v523 = vunpack.c.h.b16 %v247
    %v524 = vunpack.c.l.b16 %v248
    %v525 = vunpack.c.h.b16 %v248
    %v526 = vunpack.c.l.b16 %v249
    %v527 = vunpack.c.h.b16 %v249
    %v528 = vunpack.c.l.b16 %v250
    %v529 = vunpack.c.h.b16 %v250
    %v530 = vunpack.c.l.b16 %v251
    %v531 = vunpack.c.h.b16 %v251
    %v532 = vunpack.c.l.b16 %v252
    %v533 = vunpack.c.h.b16 %v252
    %v534 = vunpack.c.l.b16 %v253
    %v535 = vunpack.c.h.b16 %v253
    %v536 = vunpack.c.l.b16 %v254
    %v537 = vunpack.c.h.b16 %v254
    %v538 = vunpack.c.l.b16 %v255
    %v539 = vunpack.c.h.b16 %v255
    %v540 = vunpack.c.l.b16 %v256
    %v541 = vunpack.c.h.b16 %v256
    %v542 = vunpack.c.l.b16 %v257
    %v543 = vunpack.c.h.b16 %v257
    %v544 = vunpack.c.l.b16 %v258
    %v545 = vunpack.c.h.b16 %v258
    %v546 = vunpack.c.l.b16 %v259
    %v547 = vunpack.c.h.b16 %v259
    %v548 = vunpack.c.l.b16 %v260
    %v549 = vunpack.c.h.b16 %v260
    %v550 = vunpack.c.l.b16 %v261
    %v551 = vunpack.c.h.b16 %v261
    %v552 = vunpack.c.l.b16 %v262
    %v553 = vunpack.c.h.b16 %v262
    %v554 = vunpack.c.l.b16 %v263
    %v555 = vunpack.c.h.b16 %v263
    %v556 = vunpack.c.l.b16 %v264
    %v557 = vunpack.c.h.b16 %v264
    %v558 = vunpack.c.l.b16 %v265
    %v559 = vunpack.c.h.b16 %v265
    %v560 = vunpack.c.l.b16 %v266
    %v561 = vunpack.c.h.b16 %v266
    %v562 = vunpack.c.l.b16 %v267
    %v563 = vunpack.c.h.b16 %v267
    %v564 = vunpack.c.l.b16 %v268
    %v565 = vunpack.c.h.b16 %v268
    %v566 = vunpack.c.l.b16 %v269
    %v567 = vunpack.c.h.b16 %v269
    %v568 = vunpack.c.l.b16 %v270
    %v569 = vunpack.c.h.b16 %v270
    %v570 = vunpack.c.l.b16 %v271
    %v571 = vunpack.c.h.b16 %v271
    %v572 = vunpack.c.l.b16 %v272
    %v573 = vunpack.c.h.b16 %v272
    %v574 = vunpack.c.l.b16 %v273
    %v575 = vunpack.c.h.b16 %v273
    %v576 = vunpack.c.l.b16 %v274
    %v577 = vunpack.c.h.b16 %v274
    %v578 = vunpack.c.l.b16 %v275
    %v579 = vunpack.c.h.b16 %v275
    %v580 = vunpack.c.l.b16 %v276
    %v581 = vunpack.c.h.b16 %v276
    %v582 = vunpack.c.l.b16 %v277
    %v583 = vunpack.c.h.b16 %v277
    %v584 = vunpack.c.l.b16 %v278
    %v585 = vunpack.c.h.b16 %v278
    %v586 = vunpack.c.l.b16 %v279
    %v587 = vunpack.c.h.b16 %v279
    %v588 = vunpack.c.l.b16 %v280
    %v589 = vunpack.c.h.b16 %v280
    %v590 = vunpack.c.l.b16 %v281
    %v591 = vunpack.c.h.b16 %v281
    %v592 = vunpack.c.l.b16 %v282
    %v593 = vunpack.c.h.b16 %v282
    %v594 = vunpack.c.l.b16 %v283
    %v595 = vunpack.c.h.b16 %v283
    %v596 = vunpack.c.l.b16 %v284
    %v597 = vunpack.c.h.b16 %v284
    %v598 = vunpack.c.l.b16 %v285
    %v599 = vunpack.c.h.b16 %v285
    %v600 = vunpack.c.l.b16 %v286
    %v601 = vunpack.c.h.b16 %v286
    %v602 = vunpack.c.l.b16 %v287
    %v603 = vunpack.c.h.b16 %v287
    %v604 = vunpack.c.l.b16 %v288
    %v605 = vunpack.c.h.b16 %v288
    %v606 = vunpack.c.l.b16 %v289
    %v607 = vunpack.c.h.b16 %v289
    %v608 = vunpack.c.l.b16 %v290
    %v609 = vunpack.c.h.b16 %v290
    %v610 = vunpack.c.l.b16 %v291
    %v611 = vunpack.c.h.b16 %v291
    %v612 = vunpack.c.l.b16 %v292
    %v613 = vunpack.c.h.b16 %v292
    %v614 = vunpack.c.l.b16 %v293
    %v615 = vunpack.c.h.b16 %v293
    %v616 = vunpack.c.l.b16 %v294
    %v617 = vunpack.c.h.b16 %v294
    %v618 = vunpack.c.l.b16 %v295
    %v619 = vunpack.c.h.b16 %v295
    %v620 = vunpack.c.l.b16 %v296
    %v621 = vunpack.c.h.b16 %v296
    %v622 = vunpack.c.l.b16 %v297
    %v623 = vunpack.c.h.b16 %v297
    %v624 = vunpack.c.l.b16 %v298
    %v625 = vunpack.c.h.b16 %v298
    %v626 = vunpack.c.l.b16 %v299
    %v627 = vunpack.c.h.b16 %v299
    %v628 = vunpack.c.l.b16 %v300
    %v629 = vunpack.c.h.b16 %v300
    %v630 = vunpack.c.l.b16 %v301
    %v631 = vunpack.c.h.b16 %v301
    %v632 = vunpack.c.l.b16 %v302
    %v633 = vunpack.c.h.b16 %v302
    %v634 = vunpack.c.l.b16 %v303
    %v635 = vunpack.c.h.b16 %v303
    %v636 = vunpack.c.l.b16 %v304
    %v637 = vunpack.c.h.b16 %v304
    %v638 = vunpack.c.l.b16 %v305
    %v639 = vunpack.c.h.b16 %v305
    %v640 = vunpack.c.l.b16 %v306
    %v641 = vunpack.c.h.b16 %v306
    %v642 = vunpack.c.l.b16 %v307
    %v643 = vunpack.c.h.b16 %v307
    %v644 = vunpack.c.l.b16 %v308
    %v645 = vunpack.c.h.b16 %v308
    %v646 = vunpack.c.l.b16 %v309
    %v647 = vunpack.c.h.b16 %v309
    %v648 = vunpack.c.l.b16 %v310
    %v649 = vunpack.c.h.b16 %v310
    %v650 = vunpack.c.l.b16 %v311
    %v651 = vunpack.c.h.b16 %v311
    %v652 = vunpack.c.l.b16 %v312
    %v653 = vunpack.c.h.b16 %v312
    %v654 = vunpack.c.l.b16 %v313
    %v655 = vunpack.c.h.b16 %v313
    %v656 = vunpack.c.l.b16 %v314
    %v657 = vunpack.c.h.b16 %v314
    %v658 = vunpack.c.l.b16 %v315
    %v659 = vunpack.c.h.b16 %v315
    %v660 = vunpack.c.l.b16 %v316
    %v661 = vunpack.c.h.b16 %v316
    %v662 = vunpack.c.l.b16 %v317
    %v663 = vunpack.c.h.b16 %v317
    %v664 = vunpack.c.l.b16 %v318
    %v665 = vunpack.c.h.b16 %v318
    %v666 = vunpack.c.l.b16 %v319
    %v667 = vunpack.c.h.b16 %v319
    %v668 = vunpack.c.l.b16 %v320
    %v669 = vunpack.c.h.b16 %v320
    %v670 = vunpack.c.l.b16 %v321
    %v671 = vunpack.c.h.b16 %v321
    %v672 = vunpack.c.l.b16 %v322
    %v673 = vunpack.c.h.b16 %v322
    %v674 = vunpack.c.l.b16 %v323
    %v675 = vunpack.c.h.b16 %v323
    %v676 = vunpack.c.l.b16 %v324
    %v677 = vunpack.c.h.b16 %v324
    %v678 = vunpack.c.l.b16 %v325
    %v679 = vunpack.c.h.b16 %v325
    %v680 = vunpack.c.l.b16 %v326
    %v681 = vunpack.c.h.b16 %v326
    %v682 = vunpack.c.l.b16 %v327
    %v683 = vunpack.c.h.b16 %v327
    %v684 = vunpack.c.l.b16 %v328
    %v685 = vunpack.c.h.b16 %v328
    %v686 = vunpack.c.l.b16 %v329
    %v687 = vunpack.c.h.b16 %v329
    %v688 = vunpack.c.l.b16 %v330
    %v689 = vunpack.c.h.b16 %v330
    %v690 = vunpack.c.l.b16 %v331
    %v691 = vunpack.c.h.b16 %v331
    %v692 = vunpack.c.l.b16 %v332
    %v693 = vunpack.c.h.b16 %v332
    %v694 = vunpack.c.l.b16 %v333
    %v695 = vunpack.c.h.b16 %v333
    %v696 = vunpack.c.l.b16 %v334
    %v697 = vunpack.c.h.b16 %v334
    %v698 = vunpack.c.l.b16 %v335
    %v699 = vunpack.c.h.b16 %v335
    %v700 = vunpack.c.l.b16 %v336
    %v701 = vunpack.c.h.b16 %v336
    %v702 = vunpack.c.l.b16 %v337
    %v703 = vunpack.c.h.b16 %v337
    %v704 = vunpack.c.l.b16 %v338
    %v705 = vunpack.c.h.b16 %v338
    %v706 = vunpack.c.l.b16 %v339
    %v707 = vunpack.c.h.b16 %v339
    %v708 = vunpack.c.l.b16 %v340
    %v709 = vunpack.c.h.b16 %v340
    %v710 = vunpack.c.l.b16 %v341
    %v711 = vunpack.c.h.b16 %v341
    %v712 = vunpack.c.l.b16 %v342
    %v713 = vunpack.c.h.b16 %v342
    %v714 = vunpack.c.l.b16 %v343
    %v715 = vunpack.c.h.b16 %v343
    %v716 = vunpack.c.l.b16 %v344
    %v717 = vunpack.c.h.b16 %v344
    %v718 = vunpack.c.l.b16 %v345
    %v719 = vunpack.c.h.b16 %v345
    %v720 = vunpack.c.l.b16 %v346
    %v721 = vunpack.c.h.b16 %v346
    %v722 = vunpack.c.l.b16 %v347
    %v723 = vunpack.c.h.b16 %v347
    %v724 = vunpack.c.l.b16 %v348
    %v725 = vunpack.c.h.b16 %v348
    %v726 = vunpack.c.l.b16 %v349
    %v727 = vunpack.c.h.b16 %v349
    %v728 = vunpack.c.l.b16 %v350
    %v729 = vunpack.c.h.b16 %v350
    %v730 = vunpack.c.l.b16 %v351
    %v731 = vunpack.c.h.b16 %v351
    %v732 = vunpack.c.l.b16 %v352
    %v733 = vunpack.c.h.b16 %v352
    %v734 = vunpack.c.l.b16 %v353
    %v735 = vunpack.c.h.b16 %v353
    %v736 = vunpack.c.l.b16 %v354
    %v737 = vunpack.c.h.b16 %v354
    %v738 = vunpack.c.l.b16 %v355
    %v739 = vunpack.c.h.b16 %v355
    %v740 = vunpack.c.l.b16 %v356
    %v741 = vunpack.c.h.b16 %v356
    %v742 = vunpack.c.l.b16 %v357
    %v743 = vunpack.c.h.b16 %v357
    %v744 = vunpack.c.l.b16 %v358
    %v745 = vunpack.c.h.b16 %v358
    %v746 = vunpack.c.l.b16 %v359
    %v747 = vunpack.c.h.b16 %v359
    %v748 = vunpack.c.l.b16 %v360
    %v749 = vunpack.c.h.b16 %v360
    %v750 = vunpack.c.l.b16 %v361
    %v751 = vunpack.c.h.b16 %v361
    %v752 = vunpack.c.l.b16 %v362
    %v753 = vunpack.c.h.b16 %v362
    %v754 = vunpack.c.l.b16 %v363
    %v755 = vunpack.c.h.b16 %v363
    %v756 = vunpack.c.l.b16 %v364
    %v757 = vunpack.c.h.b16 %v364
    %v758 = vunpack.c.l.b16 %v365
    %v759 = vunpack.c.h.b16 %v365
    %v760 = vunpack.c.l.b16 %v366
    %v761 = vunpack.c.h.b16 %v366
    %v762 = vunpack.c.l.b16 %v367
    %v763 = vunpack.c.h.b16 %v367
    %v764 = vunpack.c.l.b16 %v368
    %v765 = vunpack.c.h.b16 %v368
    %v766 = vunpack.c.l.b16 %v369
    %v767 = vunpack.c.h.b16 %v369
    %v768 = vpack.c.b16 %v514, %v512
    %v769 = vpack.c.b16 %v515, %v513
    %v770 = vpack.c.b16 %v518, %v516
    %v771 = vpack.c.b16 %v519, %v517
    %v772 = vpack.c.b16 %v522, %v520
    %v773 = vpack.c.b16 %v523, %v521
    %v774 = vpack.c.b16 %v526, %v524
    %v775 = vpack.c.b16 %v527, %v525
    %v776 = vpack.c.b16 %v530, %v528
    %v777 = vpack.c.b16 %v531, %v529
    %v778 = vpack.c.b16 %v534, %v532
    %v779 = vpack.c.b16 %v535, %v533
    %v780 = vpack.c.b16 %v538, %v536
    %v781 = vpack.c.b16 %v539, %v537
    %v782 = vpack.c.b16 %v542, %v540
    %v783 = vpack.c.b16 %v543, %v541
    %v784 = vpack.c.b16 %v546, %v544
    %v785 = vpack.c.b16 %v547, %v545
    %v786 = vpack.c.b16 %v550, %v548
    %v787 = vpack.c.b16 %v551, %v549
    %v788 = vpack.c.b16 %v554, %v552
    %v789 = vpack.c.b16 %v555, %v553
    %v790 = vpack.c.b16 %v558, %v556
    %v791 = vpack.c.b16 %v559, %v557
    %v792 = vpack.c.b16 %v562, %v560
    %v793 = vpack.c.b16 %v563, %v561
    %v794 = vpack.c.b16 %v566, %v564
    %v795 = vpack.c.b16 %v567, %v565
    %v796 = vpack.c.b16 %v570, %v568
    %v797 = vpack.c.b16 %v571, %v569
    %v798 = vpack.c.b16 %v574, %v572
    %v799 = vpack.c.b16 %v575, %v573
    %v800 = vpack.c.b16 %v578, %v576
    %v801 = vpack.c.b16 %v579, %v577
    %v802 = vpack.c.b16 %v582, %v580
    %v803 = vpack.c.b16 %v583, %v581
    %v804 = vpack.c.b16 %v586, %v584
    %v805 = vpack.c.b16 %v587, %v585
    %v806 = vpack.c.b16 %v590, %v588
    %v807 = vpack.c.b16 %v591, %v589
    %v808 = vpack.c.b16 %v594, %v592
    %v809 = vpack.c.b16 %v595, %v593
    %v810 = vpack.c.b16 %v598, %v596
    %v811 = vpack.c.b16 %v599, %v597
    %v812 = vpack.c.b16 %v602, %v600
    %v813 = vpack.c.b16 %v603, %v601
    %v814 = vpack.c.b16 %v606, %v604
    %v815 = vpack.c.b16 %v607, %v605
    %v816 = vpack.c.b16 %v610, %v608
    %v817 = vpack.c.b16 %v611, %v609
    %v818 = vpack.c.b16 %v614, %v612
    %v819 = vpack.c.b16 %v615, %v613
    %v820 = vpack.c.b16 %v618, %v616
    %v821 = vpack.c.b16 %v619, %v617
    %v822 = vpack.c.b16 %v622, %v620
    %v823 = vpack.c.b16 %v623, %v621
    %v824 = vpack.c.b16 %v626, %v624
    %v825 = vpack.c.b16 %v627, %v625
    %v826 = vpack.c.b16 %v630, %v628
    %v827 = vpack.c.b16 %v631, %v629
    %v828 = vpack.c.b16 %v634, %v632
    %v829 = vpack.c.b16 %v635, %v633
    %v830 = vpack.c.b16 %v638, %v636
    %v831 = vpack.c.b16 %v639, %v637
    %v832 = vpack.c.b16 %v642, %v640
    %v833 = vpack.c.b16 %v643, %v641
    %v834 = vpack.c.b16 %v646, %v644
    %v835 = vpack.c.b16 %v647, %v645
    %v836 = vpack.c.b16 %v650, %v648
    %v837 = vpack.c.b16 %v651, %v649
    %v838 = vpack.c.b16 %v654, %v652
    %v839 = vpack.c.b16 %v655, %v653
    %v840 = vpack.c.b16 %v658, %v656
    %v841 = vpack.c.b16 %v659, %v657
    %v842 = vpack.c.b16 %v662, %v660
    %v843 = vpack.c.b16 %v663, %v661
    %v844 = vpack.c.b16 %v666, %v664
    %v845 = vpack.c.b16 %v667, %v665
    %v846 = vpack.c.b16 %v670, %v668
    %v847 = vpack.c.b16 %v671, %v669
    %v848 = vpack.c.b16 %v674, %v672
    %v849 = vpack.c.b16 %v675, %v673
    %v850 = vpack.c.b16 %v678, %v676
    %v851 = vpack.c.b16 %v679, %v677
    %v852 = vpack.c.b16 %v682, %v680
    %v853 = vpack.c.b16 %v683, %v681
    %v854 = vpack.c.b16 %v686, %v684
    %v855 = vpack.c.b16 %v687, %v685
    %v856 = vpack.c.b16 %v690, %v688
    %v857 = vpack.c.b16 %v691, %v689
    %v858 = vpack.c.b16 %v694, %v692
    %v859 = vpack.c.b16 %v695, %v693
    %v860 = vpack.c.b16 %v698, %v696
    %v861 = vpack.c.b16 %v699, %v697
    %v862 = vpack.c.b16 %v702, %v700
    %v863 = vpack.c.b16 %v703, %v701
    %v864 = vpack.c.b16 %v706, %v704
    %v865 = vpack.c.b16 %v707, %v705
    %v866 = vpack.c.b16 %v710, %v708
    %v867 = vpack.c.b16 %v711, %v709
    %v868 = vpack.c.b16 %v714, %v712
    %v869 = vpack.c.b16 %v715, %v713
    %v870 = vpack.c.b16 %v718, %v716
    %v871 = vpack.c.b16 %v719, %v717
    %v872 = vpack.c.b16 %v722, %v720
    %v873 = vpack.c.b16 %v723, %v721
    %v874 = vpack.c.b16 %v726, %v724
    %v875 = vpack.c.b16 %v727, %v725
    %v876 = vpack.c.b16 %v730, %v728
    %v877 = vpack.c.b16 %v731, %v729
    %v878 = vpack.c.b16 %v734, %v732
    %v879 = vpack.c.b16 %v735, %v733
    %v880 = vpack.c.b16 %v738, %v736
    %v881 = vpack.c.b16 %v739, %v737
    %v882 = vpack.c.b16 %v742, %v740
    %v883 = vpack.c.b16 %v743, %v741
    %v884 = vpack.c.b16 %v746, %v744
    %v885 = vpack.c.b16 %v747, %v745
    %v886 = vpack.c.b16 %v750, %v748
    %v887 = vpack.c.b16 %v751, %v749
    %v888 = vpack.c.b16 %v754, %v752
    %v889 = vpack.c.b16 %v755, %v753
    %v890 = vpack.c.b16 %v758, %v756
    %v891 = vpack.c.b16 %v759, %v757
    %v892 = vpack.c.b16 %v762, %v760
    %v893 = vpack.c.b16 %v763, %v761
    %v894 = vpack.c.b16 %v766, %v764
    %v895 = vpack.c.b16 %v767, %v765
    %1024 = vmatpush.bf16.msra.mxu0 %v782
    %1025 = vmatpush.bf16.msra.mxu0 %v780
    %1026 = vmatpush.bf16.msra.mxu0 %v778
    %1027 = vmatpush.bf16.msra.mxu0 %v776
    %1028 = vmatpush.bf16.msra.mxu0 %v774
    %1029 = vmatpush.bf16.msra.mxu0 %v772
    %1030 = vmatpush.bf16.msra.mxu0 %v770
    %1031 = vmatpush.bf16.msra.mxu0 %v768
    %1032 = vmatmul.bf16.gmra.mxu0 %v371
    %v1033 = vpop.f32.mrf.mxu0
    %v1034 = vadd.f32 %v380, %v1033
    %v1035 = vpop.f32.mrf.mxu0
    %v1036 = vadd.f32 %v380, %v1035
    %1037 = vdwg.mxu0
    %1038 = vmatpush.bf16.msra.mxu0 %v798
    %1039 = vmatpush.bf16.msra.mxu0 %v796
    %1040 = vmatpush.bf16.msra.mxu0 %v794
    %1041 = vmatpush.bf16.msra.mxu0 %v792
    %1042 = vmatpush.bf16.msra.mxu0 %v790
    %1043 = vmatpush.bf16.msra.mxu0 %v788
    %1044 = vmatpush.bf16.msra.mxu0 %v786
    %1045 = vmatpush.bf16.msra.mxu0 %v784
    %1046 = vmatmul.bf16.gmra.mxu0 %v372
    %v1047 = vpop.f32.mrf.mxu0
    %v1048 = vadd.f32 %v1034, %v1047
    %v1049 = vpop.f32.mrf.mxu0
    %v1050 = vadd.f32 %v1036, %v1049
    %1051 = vdwg.mxu0
    %1052 = vmatpush.bf16.msra.mxu0 %v814
    %1053 = vmatpush.bf16.msra.mxu0 %v812
    %1054 = vmatpush.bf16.msra.mxu0 %v810
    %1055 = vmatpush.bf16.msra.mxu0 %v808
    %1056 = vmatpush.bf16.msra.mxu0 %v806
    %1057 = vmatpush.bf16.msra.mxu0 %v804
    %1058 = vmatpush.bf16.msra.mxu0 %v802
    %1059 = vmatpush.bf16.msra.mxu0 %v800
    %1060 = vmatmul.bf16.gmra.mxu0 %v373
    %v1061 = vpop.f32.mrf.mxu0
    %v1062 = vadd.f32 %v1048, %v1061
    %v1063 = vpop.f32.mrf.mxu0
    %v1064 = vadd.f32 %v1050, %v1063
    %1065 = vdwg.mxu0
    %1066 = vmatpush.bf16.msra.mxu0 %v830
    %1067 = vmatpush.bf16.msra.mxu0 %v828
    %1068 = vmatpush.bf16.msra.mxu0 %v826
    %1069 = vmatpush.bf16.msra.mxu0 %v824
    %1070 = vmatpush.bf16.msra.mxu0 %v822
    %1071 = vmatpush.bf16.msra.mxu0 %v820
    %1072 = vmatpush.bf16.msra.mxu0 %v818
    %1073 = vmatpush.bf16.msra.mxu0 %v816
    %1074 = vmatmul.bf16.gmra.mxu0 %v374
    %v1075 = vpop.f32.mrf.mxu0
    %v1076 = vadd.f32 %v1062, %v1075
    %v1077 = vpop.f32.mrf.mxu0
    %v1078 = vadd.f32 %v1064, %v1077
    %1079 = vdwg.mxu0
    %1080 = vmatpush.bf16.msra.mxu0 %v846
    %1081 = vmatpush.bf16.msra.mxu0 %v844
    %1082 = vmatpush.bf16.msra.mxu0 %v842
    %1083 = vmatpush.bf16.msra.mxu0 %v840
    %1084 = vmatpush.bf16.msra.mxu0 %v838
    %1085 = vmatpush.bf16.msra.mxu0 %v836
    %1086 = vmatpush.bf16.msra.mxu0 %v834
    %1087 = vmatpush.bf16.msra.mxu0 %v832
    %1088 = vmatmul.bf16.gmra.mxu0 %v375
    %v1089 = vpop.f32.mrf.mxu0
    %v1090 = vadd.f32 %v1076, %v1089
    %v1091 = vpop.f32.mrf.mxu0
    %v1092 = vadd.f32 %v1078, %v1091
    %1093 = vdwg.mxu0
    %1094 = vmatpush.bf16.msra.mxu0 %v862
    %1095 = vmatpush.bf16.msra.mxu0 %v860
    %1096 = vmatpush.bf16.msra.mxu0 %v858
    %1097 = vmatpush.bf16.msra.mxu0 %v856
    %1098 = vmatpush.bf16.msra.mxu0 %v854
    %1099 = vmatpush.bf16.msra.mxu0 %v852
    %1100 = vmatpush.bf16.msra.mxu0 %v850
    %1101 = vmatpush.bf16.msra.mxu0 %v848
    %1102 = vmatmul.bf16.gmra.mxu0 %v376
    %v1103 = vpop.f32.mrf.mxu0
    %v1104 = vadd.f32 %v1090, %v1103
    %v1105 = vpop.f32.mrf.mxu0
    %v1106 = vadd.f32 %v1092, %v1105
    %1107 = vdwg.mxu0
    %1108 = vmatpush.bf16.msra.mxu0 %v878
    %1109 = vmatpush.bf16.msra.mxu0 %v876
    %1110 = vmatpush.bf16.msra.mxu0 %v874
    %1111 = vmatpush.bf16.msra.mxu0 %v872
    %1112 = vmatpush.bf16.msra.mxu0 %v870
    %1113 = vmatpush.bf16.msra.mxu0 %v868
    %1114 = vmatpush.bf16.msra.mxu0 %v866
    %1115 = vmatpush.bf16.msra.mxu0 %v864
    %1116 = vmatmul.bf16.gmra.mxu0 %v377
    %v1117 = vpop.f32.mrf.mxu0
    %v1118 = vadd.f32 %v1104, %v1117
    %v1119 = vpop.f32.mrf.mxu0
    %v1120 = vadd.f32 %v1106, %v1119
    %1121 = vdwg.mxu0
    %1122 = vmatpush.bf16.msra.mxu0 %v894
    %1123 = vmatpush.bf16.msra.mxu0 %v892
    %1124 = vmatpush.bf16.msra.mxu0 %v890
    %1125 = vmatpush.bf16.msra.mxu0 %v888
    %1126 = vmatpush.bf16.msra.mxu0 %v886
    %1127 = vmatpush.bf16.msra.mxu0 %v884
    %1128 = vmatpush.bf16.msra.mxu0 %v882
    %1129 = vmatpush.bf16.msra.mxu0 %v880
    %1130 = vmatmul.bf16.gmra.mxu0 %v378
    %v1131 = vpop.f32.mrf.mxu0
    %v1132 = vadd.f32 %v1118, %v1131
    %v1133 = vpop.f32.mrf.mxu0
    %v1134 = vadd.f32 %v1120, %v1133
    %1135 = vdwg.mxu0
    %1136 = vmatpush.bf16.msra.mxu0 %v783
    %1137 = vmatpush.bf16.msra.mxu0 %v781
    %1138 = vmatpush.bf16.msra.mxu0 %v779
    %1139 = vmatpush.bf16.msra.mxu0 %v777
    %1140 = vmatpush.bf16.msra.mxu0 %v775
    %1141 = vmatpush.bf16.msra.mxu0 %v773
    %1142 = vmatpush.bf16.msra.mxu0 %v771
    %1143 = vmatpush.bf16.msra.mxu0 %v769
    %1144 = vmatmul.bf16.gmra.mxu0 %v371
    %v1145 = vpop.f32.mrf.mxu0
    %v1146 = vadd.f32 %v381, %v1145
    %v1147 = vpop.f32.mrf.mxu0
    %v1148 = vadd.f32 %v381, %v1147
    %1149 = vdwg.mxu0
    %1150 = vmatpush.bf16.msra.mxu0 %v799
    %1151 = vmatpush.bf16.msra.mxu0 %v797
    %1152 = vmatpush.bf16.msra.mxu0 %v795
    %1153 = vmatpush.bf16.msra.mxu0 %v793
    %1154 = vmatpush.bf16.msra.mxu0 %v791
    %1155 = vmatpush.bf16.msra.mxu0 %v789
    %1156 = vmatpush.bf16.msra.mxu0 %v787
    %1157 = vmatpush.bf16.msra.mxu0 %v785
    %1158 = vmatmul.bf16.gmra.mxu0 %v372
    %v1159 = vpop.f32.mrf.mxu0
    %v1160 = vadd.f32 %v1146, %v1159
    %v1161 = vpop.f32.mrf.mxu0
    %v1162 = vadd.f32 %v1148, %v1161
    %1163 = vdwg.mxu0
    %1164 = vmatpush.bf16.msra.mxu0 %v815
    %1165 = vmatpush.bf16.msra.mxu0 %v813
    %1166 = vmatpush.bf16.msra.mxu0 %v811
    %1167 = vmatpush.bf16.msra.mxu0 %v809
    %1168 = vmatpush.bf16.msra.mxu0 %v807
    %1169 = vmatpush.bf16.msra.mxu0 %v805
    %1170 = vmatpush.bf16.msra.mxu0 %v803
    %1171 = vmatpush.bf16.msra.mxu0 %v801
    %1172 = vmatmul.bf16.gmra.mxu0 %v373
    %v1173 = vpop.f32.mrf.mxu0
    %v1174 = vadd.f32 %v1160, %v1173
    %v1175 = vpop.f32.mrf.mxu0
    %v1176 = vadd.f32 %v1162, %v1175
    %1177 = vdwg.mxu0
    %1178 = vmatpush.bf16.msra.mxu0 %v831
    %1179 = vmatpush.bf16.msra.mxu0 %v829
    %1180 = vmatpush.bf16.msra.mxu0 %v827
    %1181 = vmatpush.bf16.msra.mxu0 %v825
    %1182 = vmatpush.bf16.msra.mxu0 %v823
    %1183 = vmatpush.bf16.msra.mxu0 %v821
    %1184 = vmatpush.bf16.msra.mxu0 %v819
    %1185 = vmatpush.bf16.msra.mxu0 %v817
    %1186 = vmatmul.bf16.gmra.mxu0 %v374
    %v1187 = vpop.f32.mrf.mxu0
    %v1188 = vadd.f32 %v1174, %v1187
    %v1189 = vpop.f32.mrf.mxu0
    %v1190 = vadd.f32 %v1176, %v1189
    %1191 = vdwg.mxu0
    %1192 = vmatpush.bf16.msra.mxu0 %v847
    %1193 = vmatpush.bf16.msra.mxu0 %v845
    %1194 = vmatpush.bf16.msra.mxu0 %v843
    %1195 = vmatpush.bf16.msra.mxu0 %v841
    %1196 = vmatpush.bf16.msra.mxu0 %v839
    %1197 = vmatpush.bf16.msra.mxu0 %v837
    %1198 = vmatpush.bf16.msra.mxu0 %v835
    %1199 = vmatpush.bf16.msra.mxu0 %v833
    %1200 = vmatmul.bf16.gmra.mxu0 %v375
    %v1201 = vpop.f32.mrf.mxu0
    %v1202 = vadd.f32 %v1188, %v1201
    %v1203 = vpop.f32.mrf.mxu0
    %v1204 = vadd.f32 %v1190, %v1203
    %1205 = vdwg.mxu0
    %1206 = vmatpush.bf16.msra.mxu0 %v863
    %1207 = vmatpush.bf16.msra.mxu0 %v861
    %1208 = vmatpush.bf16.msra.mxu0 %v859
    %1209 = vmatpush.bf16.msra.mxu0 %v857
    %1210 = vmatpush.bf16.msra.mxu0 %v855
    %1211 = vmatpush.bf16.msra.mxu0 %v853
    %1212 = vmatpush.bf16.msra.mxu0 %v851
    %1213 = vmatpush.bf16.msra.mxu0 %v849
    %1214 = vmatmul.bf16.gmra.mxu0 %v376
    %v1215 = vpop.f32.mrf.mxu0
    %v1216 = vadd.f32 %v1202, %v1215
    %v1217 = vpop.f32.mrf.mxu0
    %v1218 = vadd.f32 %v1204, %v1217
    %1219 = vdwg.mxu0
    %1220 = vmatpush.bf16.msra.mxu0 %v879
    %1221 = vmatpush.bf16.msra.mxu0 %v877
    %1222 = vmatpush.bf16.msra.mxu0 %v875
    %1223 = vmatpush.bf16.msra.mxu0 %v873
    %1224 = vmatpush.bf16.msra.mxu0 %v871
    %1225 = vmatpush.bf16.msra.mxu0 %v869
    %1226 = vmatpush.bf16.msra.mxu0 %v867
    %1227 = vmatpush.bf16.msra.mxu0 %v865
    %1228 = vmatmul.bf16.gmra.mxu0 %v377
    %v1229 = vpop.f32.mrf.mxu0
    %v1230 = vadd.f32 %v1216, %v1229
    %v1231 = vpop.f32.mrf.mxu0
    %v1232 = vadd.f32 %v1218, %v1231
    %1233 = vdwg.mxu0
    %1234 = vmatpush.bf16.msra.mxu0 %v895
    %1235 = vmatpush.bf16.msra.mxu0 %v893
    %1236 = vmatpush.bf16.msra.mxu0 %v891
    %1237 = vmatpush.bf16.msra.mxu0 %v889
    %1238 = vmatpush.bf16.msra.mxu0 %v887
    %1239 = vmatpush.bf16.msra.mxu0 %v885
    %1240 = vmatpush.bf16.msra.mxu0 %v883
    %1241 = vmatpush.bf16.msra.mxu0 %v881
    %1242 = vmatmul.bf16.gmra.mxu0 %v378
    %v1243 = vpop.f32.mrf.mxu0
    %v1244 = vadd.f32 %v1230, %v1243
    %v1245 = vpop.f32.mrf.mxu0
    %v1246 = vadd.f32 %v1232, %v1245
    %1247 = vdwg.mxu0
    %v1248 = vmax.f32 %v1132, 0.0
    %v1249 = vmax.f32 %v1244, 0.0
    %v1250 = vmax.f32 %v1134, 0.0
    %v1251 = vmax.f32 %v1246, 0.0
    %v1252 = vmul.f32 %v1248, %v1248
    %v1253 = vmul.f32 %v1249, %v1249
    %v1254 = vmul.f32 %v1250, %v1250
    %v1255 = vmul.f32 %v1251, %v1251
    %v1256 = vadd.f32 %v1252, %v1253
    %1257 = vadd.xlane.f32.xlu0 %v1256
    %v1258 = vpop.xlane.xlu0 %1257
    %v1259 = vadd.f32 %v1254, %v1255
    %1260 = vadd.xlane.f32.xlu0 %v1259
    %v1261 = vpop.xlane.xlu0 %1260
    %v1262 = vrcp.pop 256.0
    %v1263 = vmul.f32 256.0, %v1262
    %v1264 = vsub.f32 1.0, %v1263
    %v1265 = vmul.f32 %v1262, %v1264
    %v1266 = vadd.f32 %v1262, %v1265
    %vm1267 = vweird.f32 %v1262
    %v1268 = vsel %vm1267, %v1262, %v1266
    %v1269 = vmul.f32 %v1258, %v1268
    %v1270 = vmul.f32 %v1261, %v1268
    %v1271 = vrsqrt.pop %v1269
    %v1272 = vmul.f32 %v1271, %v1269
    %v1273 = vmul.f32 %v1272, %v1271
    %v1274 = vmul.f32 0.5, %v1273
    %v1275 = vsub.f32 1.5, %v1274
    %v1276 = vmul.f32 %v1271, %v1275
    %v1277 = vmul.f32 %v1269, %v1276
    %vm1278 = vcmp.eq.f32.partialorder %v1269, inf
    %v1279 = vsel %vm1278, %v1269, %v1277
    %vm1280 = vcmp.eq.f32.partialorder %v1269, 0.0
    %v1281 = vand.u32 %v1269, 2147483648
    %v1282 = vsel %vm1280, %v1281, %v1279
    %v1283 = vrsqrt.pop %v1270
    %v1284 = vmul.f32 %v1283, %v1270
    %v1285 = vmul.f32 %v1284, %v1283
    %v1286 = vmul.f32 0.5, %v1285
    %v1287 = vsub.f32 1.5, %v1286
    %v1288 = vmul.f32 %v1283, %v1287
    %v1289 = vmul.f32 %v1270, %v1288
    %vm1290 = vcmp.eq.f32.partialorder %v1270, inf
    %v1291 = vsel %vm1290, %v1270, %v1289
    %vm1292 = vcmp.eq.f32.partialorder %v1270, 0.0
    %v1293 = vand.u32 %v1270, 2147483648
    %v1294 = vsel %vm1292, %v1293, %v1291
    %v1295 = vadd.f32 %v1282, 1e-08
    %v1296 = vadd.f32 %v1294, 1e-08
    %v1297 = vrcp.pop %v1295
    %v1298 = vmul.f32 %v1295, %v1297
    %v1299 = vsub.f32 1.0, %v1298
    %v1300 = vmul.f32 %v1297, %v1299
    %v1301 = vadd.f32 %v1297, %v1300
    %vm1302 = vweird.f32 %v1295
    %vm1303 = vweird.f32 %v1297
    %vm1304 = vmor %vm1302, %vm1303
    %v1305 = vsel %vm1304, %v1297, %v1301
    %v1306 = vand.u32 2147483647, %v1295
    %vm1307 = vcmp.eq.f32.partialorder %v1306, 8.507059e+37
    %v1308 = vand.u32 %v1295, 2147483648
    %v1309 = vor.u32 1.1754944e-38, %v1308
    %v1310 = vsel %vm1307, %v1309, %v1305
    %v1311 = vmul.f32 1.0, %v1310
    %v1312 = vrcp.pop %v1296
    %v1313 = vmul.f32 %v1296, %v1312
    %v1314 = vsub.f32 1.0, %v1313
    %v1315 = vmul.f32 %v1312, %v1314
    %v1316 = vadd.f32 %v1312, %v1315
    %vm1317 = vweird.f32 %v1296
    %vm1318 = vweird.f32 %v1312
    %vm1319 = vmor %vm1317, %vm1318
    %v1320 = vsel %vm1319, %v1312, %v1316
    %v1321 = vand.u32 2147483647, %v1296
    %vm1322 = vcmp.eq.f32.partialorder %v1321, 8.507059e+37
    %v1323 = vand.u32 %v1296, 2147483648
    %v1324 = vor.u32 1.1754944e-38, %v1323
    %v1325 = vsel %vm1322, %v1324, %v1320
    %v1326 = vmul.f32 1.0, %v1325
    %v1327 = vmul.f32 %v1248, %v1311
    %v1328 = vmul.f32 %v1249, %v1311
    %v1329 = vmul.f32 %v1250, %v1326
    %v1330 = vmul.f32 %v1251, %v1326
    %v1331 = vld [vmem:[#allocation8] sm:$0xff]
    %v1332 = vld [vmem:[#allocation8 + $0x8] sm:$0xff]
    %v1333 = vld [vmem:[#allocation8 + $0x10] sm:$0xff]
    %v1334 = vld [vmem:[#allocation8 + $0x18] sm:$0xff]
    %v1335 = vld [vmem:[#allocation8 + $0x20] sm:$0xff]
    %v1336 = vld [vmem:[#allocation8 + $0x28] sm:$0xff]
    %v1337 = vld [vmem:[#allocation8 + $0x30] sm:$0xff]
    %v1338 = vld [vmem:[#allocation8 + $0x38] sm:$0xff]
    %v1339 = vld [vmem:[#allocation8 + $0x40] sm:$0xff]
    %v1340 = vld [vmem:[#allocation8 + $0x48] sm:$0xff]
    %v1341 = vld [vmem:[#allocation8 + $0x50] sm:$0xff]
    %v1342 = vld [vmem:[#allocation8 + $0x58] sm:$0xff]
    %v1343 = vld [vmem:[#allocation8 + $0x60] sm:$0xff]
    %v1344 = vld [vmem:[#allocation8 + $0x68] sm:$0xff]
    %v1345 = vld [vmem:[#allocation8 + $0x70] sm:$0xff]
    %v1346 = vld [vmem:[#allocation8 + $0x78] sm:$0xff]
    %v1347 = vld [vmem:[#allocation8 + $0x80] sm:$0xff]
    %v1348 = vld [vmem:[#allocation8 + $0x88] sm:$0xff]
    %v1349 = vld [vmem:[#allocation8 + $0x90] sm:$0xff]
    %v1350 = vld [vmem:[#allocation8 + $0x98] sm:$0xff]
    %v1351 = vld [vmem:[#allocation8 + $0xa0] sm:$0xff]
    %v1352 = vld [vmem:[#allocation8 + $0xa8] sm:$0xff]
    %v1353 = vld [vmem:[#allocation8 + $0xb0] sm:$0xff]
    %v1354 = vld [vmem:[#allocation8 + $0xb8] sm:$0xff]
    %v1355 = vld [vmem:[#allocation8 + $0xc0] sm:$0xff]
    %v1356 = vld [vmem:[#allocation8 + $0xc8] sm:$0xff]
    %v1357 = vld [vmem:[#allocation8 + $0xd0] sm:$0xff]
    %v1358 = vld [vmem:[#allocation8 + $0xd8] sm:$0xff]
    %v1359 = vld [vmem:[#allocation8 + $0xe0] sm:$0xff]
    %v1360 = vld [vmem:[#allocation8 + $0xe8] sm:$0xff]
    %v1361 = vld [vmem:[#allocation8 + $0xf0] sm:$0xff]
    %v1362 = vld [vmem:[#allocation8 + $0xf8] sm:$0xff]
    %v1363 = vld [vmem:[%s4] sm:$0x3]
    %v1364 = vpack.c.bf16 %v1329, %v1327
    %v1365 = vpack.c.bf16 %v1330, %v1328
    %v1367 = vperm.slane %v1363, 0
    %v1368 = vperm.slane %v1363, 1
    %v1403 = vunpack.c.l.b16 %v1331
    %v1404 = vunpack.c.h.b16 %v1331
    %v1405 = vunpack.c.l.b16 %v1332
    %v1406 = vunpack.c.h.b16 %v1332
    %v1407 = vunpack.c.l.b16 %v1333
    %v1408 = vunpack.c.h.b16 %v1333
    %v1409 = vunpack.c.l.b16 %v1334
    %v1410 = vunpack.c.h.b16 %v1334
    %v1411 = vunpack.c.l.b16 %v1335
    %v1412 = vunpack.c.h.b16 %v1335
    %v1413 = vunpack.c.l.b16 %v1336
    %v1414 = vunpack.c.h.b16 %v1336
    %v1415 = vunpack.c.l.b16 %v1337
    %v1416 = vunpack.c.h.b16 %v1337
    %v1417 = vunpack.c.l.b16 %v1338
    %v1418 = vunpack.c.h.b16 %v1338
    %v1419 = vunpack.c.l.b16 %v1339
    %v1420 = vunpack.c.h.b16 %v1339
    %v1421 = vunpack.c.l.b16 %v1340
    %v1422 = vunpack.c.h.b16 %v1340
    %v1423 = vunpack.c.l.b16 %v1341
    %v1424 = vunpack.c.h.b16 %v1341
    %v1425 = vunpack.c.l.b16 %v1342
    %v1426 = vunpack.c.h.b16 %v1342
    %v1427 = vunpack.c.l.b16 %v1343
    %v1428 = vunpack.c.h.b16 %v1343
    %v1429 = vunpack.c.l.b16 %v1344
    %v1430 = vunpack.c.h.b16 %v1344
    %v1431 = vunpack.c.l.b16 %v1345
    %v1432 = vunpack.c.h.b16 %v1345
    %v1433 = vunpack.c.l.b16 %v1346
    %v1434 = vunpack.c.h.b16 %v1346
    %v1435 = vunpack.c.l.b16 %v1347
    %v1436 = vunpack.c.h.b16 %v1347
    %v1437 = vunpack.c.l.b16 %v1348
    %v1438 = vunpack.c.h.b16 %v1348
    %v1439 = vunpack.c.l.b16 %v1349
    %v1440 = vunpack.c.h.b16 %v1349
    %v1441 = vunpack.c.l.b16 %v1350
    %v1442 = vunpack.c.h.b16 %v1350
    %v1443 = vunpack.c.l.b16 %v1351
    %v1444 = vunpack.c.h.b16 %v1351
    %v1445 = vunpack.c.l.b16 %v1352
    %v1446 = vunpack.c.h.b16 %v1352
    %v1447 = vunpack.c.l.b16 %v1353
    %v1448 = vunpack.c.h.b16 %v1353
    %v1449 = vunpack.c.l.b16 %v1354
    %v1450 = vunpack.c.h.b16 %v1354
    %v1451 = vunpack.c.l.b16 %v1355
    %v1452 = vunpack.c.h.b16 %v1355
    %v1453 = vunpack.c.l.b16 %v1356
    %v1454 = vunpack.c.h.b16 %v1356
    %v1455 = vunpack.c.l.b16 %v1357
    %v1456 = vunpack.c.h.b16 %v1357
    %v1457 = vunpack.c.l.b16 %v1358
    %v1458 = vunpack.c.h.b16 %v1358
    %v1459 = vunpack.c.l.b16 %v1359
    %v1460 = vunpack.c.h.b16 %v1359
    %v1461 = vunpack.c.l.b16 %v1360
    %v1462 = vunpack.c.h.b16 %v1360
    %v1463 = vunpack.c.l.b16 %v1361
    %v1464 = vunpack.c.h.b16 %v1361
    %v1465 = vunpack.c.l.b16 %v1362
    %v1466 = vunpack.c.h.b16 %v1362
    %v1467 = vpack.c.b16 %v1405, %v1403
    %v1468 = vpack.c.b16 %v1406, %v1404
    %v1469 = vpack.c.b16 %v1409, %v1407
    %v1470 = vpack.c.b16 %v1410, %v1408
    %v1471 = vpack.c.b16 %v1413, %v1411
    %v1472 = vpack.c.b16 %v1414, %v1412
    %v1473 = vpack.c.b16 %v1417, %v1415
    %v1474 = vpack.c.b16 %v1418, %v1416
    %v1475 = vpack.c.b16 %v1421, %v1419
    %v1476 = vpack.c.b16 %v1422, %v1420
    %v1477 = vpack.c.b16 %v1425, %v1423
    %v1478 = vpack.c.b16 %v1426, %v1424
    %v1479 = vpack.c.b16 %v1429, %v1427
    %v1480 = vpack.c.b16 %v1430, %v1428
    %v1481 = vpack.c.b16 %v1433, %v1431
    %v1482 = vpack.c.b16 %v1434, %v1432
    %v1483 = vpack.c.b16 %v1437, %v1435
    %v1484 = vpack.c.b16 %v1438, %v1436
    %v1485 = vpack.c.b16 %v1441, %v1439
    %v1486 = vpack.c.b16 %v1442, %v1440
    %v1487 = vpack.c.b16 %v1445, %v1443
    %v1488 = vpack.c.b16 %v1446, %v1444
    %v1489 = vpack.c.b16 %v1449, %v1447
    %v1490 = vpack.c.b16 %v1450, %v1448
    %v1491 = vpack.c.b16 %v1453, %v1451
    %v1492 = vpack.c.b16 %v1454, %v1452
    %v1493 = vpack.c.b16 %v1457, %v1455
    %v1494 = vpack.c.b16 %v1458, %v1456
    %v1495 = vpack.c.b16 %v1461, %v1459
    %v1496 = vpack.c.b16 %v1462, %v1460
    %v1497 = vpack.c.b16 %v1465, %v1463
    %v1498 = vpack.c.b16 %v1466, %v1464
    %1531 = vmatpush.bf16.msra.mxu0 %v1481
    %1532 = vmatpush.bf16.msra.mxu0 %v1479
    %1533 = vmatpush.bf16.msra.mxu0 %v1477
    %1534 = vmatpush.bf16.msra.mxu0 %v1475
    %1535 = vmatpush.bf16.msra.mxu0 %v1473
    %1536 = vmatpush.bf16.msra.mxu0 %v1471
    %1537 = vmatpush.bf16.msra.mxu0 %v1469
    %1538 = vmatpush.bf16.msra.mxu0 %v1467
    %1539 = vmatmul.bf16.gmra.mxu0 %v1364
    %v1540 = vpop.f32.mrf.mxu0
    %v1541 = vadd.f32 %v1367, %v1540
    %v1542 = vpop.f32.mrf.mxu0
    %v1543 = vadd.f32 %v1367, %v1542
    %1544 = vdwg.mxu0
    %1545 = vmatpush.bf16.msra.mxu0 %v1497
    %1546 = vmatpush.bf16.msra.mxu0 %v1495
    %1547 = vmatpush.bf16.msra.mxu0 %v1493
    %1548 = vmatpush.bf16.msra.mxu0 %v1491
    %1549 = vmatpush.bf16.msra.mxu0 %v1489
    %1550 = vmatpush.bf16.msra.mxu0 %v1487
    %1551 = vmatpush.bf16.msra.mxu0 %v1485
    %1552 = vmatpush.bf16.msra.mxu0 %v1483
    %1553 = vmatmul.bf16.gmra.mxu0 %v1365
    %v1554 = vpop.f32.mrf.mxu0
    %v1555 = vadd.f32 %v1541, %v1554
    %v1556 = vpop.f32.mrf.mxu0
    %v1557 = vadd.f32 %v1543, %v1556
    %1558 = vdwg.mxu0
    %1559 = vmatpush.bf16.msra.mxu0 %v1482
    %1560 = vmatpush.bf16.msra.mxu0 %v1480
    %1561 = vmatpush.bf16.msra.mxu0 %v1478
    %1562 = vmatpush.bf16.msra.mxu0 %v1476
    %1563 = vmatpush.bf16.msra.mxu0 %v1474
    %1564 = vmatpush.bf16.msra.mxu0 %v1472
    %1565 = vmatpush.bf16.msra.mxu0 %v1470
    %1566 = vmatpush.bf16.msra.mxu0 %v1468
    %1567 = vmatmul.bf16.gmra.mxu0 %v1364
    %v1568 = vpop.f32.mrf.mxu0
    %v1569 = vadd.f32 %v1368, %v1568
    %v1570 = vpop.f32.mrf.mxu0
    %v1571 = vadd.f32 %v1368, %v1570
    %1572 = vdwg.mxu0
    %1573 = vmatpush.bf16.msra.mxu0 %v1498
    %1574 = vmatpush.bf16.msra.mxu0 %v1496
    %1575 = vmatpush.bf16.msra.mxu0 %v1494
    %1576 = vmatpush.bf16.msra.mxu0 %v1492
    %1577 = vmatpush.bf16.msra.mxu0 %v1490
    %1578 = vmatpush.bf16.msra.mxu0 %v1488
    %1579 = vmatpush.bf16.msra.mxu0 %v1486
    %1580 = vmatpush.bf16.msra.mxu0 %v1484
    %1581 = vmatmul.bf16.gmra.mxu0 %v1365
    %v1582 = vpop.f32.mrf.mxu0
    %v1583 = vadd.f32 %v1569, %v1582
    %v1584 = vpop.f32.mrf.mxu0
    %v1585 = vadd.f32 %v1571, %v1584
    %1586 = vdwg.mxu0
    %v1587 = vmax.f32 %v1555, 0.0
    %v1588 = vmax.f32 %v1583, 0.0
    %v1589 = vmax.f32 %v1557, 0.0
    %v1590 = vmax.f32 %v1585, 0.0
    %v1591 = vmul.f32 %v1587, %v1587
    %v1592 = vmul.f32 %v1588, %v1588
    %v1593 = vmul.f32 %v1589, %v1589
    %v1594 = vmul.f32 %v1590, %v1590
    %v1595 = vadd.f32 %v1591, %v1592
    %1596 = vadd.xlane.f32.xlu0 %v1595
    %v1597 = vpop.xlane.xlu0 %1596
    %v1598 = vadd.f32 %v1593, %v1594
    %1599 = vadd.xlane.f32.xlu0 %v1598
    %v1600 = vpop.xlane.xlu0 %1599
    %v1601 = vmul.f32 %v1597, %v1268
    %v1602 = vmul.f32 %v1600, %v1268
    %v1603 = vrsqrt.pop %v1601
    %v1604 = vmul.f32 %v1603, %v1601
    %v1605 = vmul.f32 %v1604, %v1603
    %v1606 = vmul.f32 0.5, %v1605
    %v1607 = vsub.f32 1.5, %v1606
    %v1608 = vmul.f32 %v1603, %v1607
    %v1609 = vmul.f32 %v1601, %v1608
    %vm1610 = vcmp.eq.f32.partialorder %v1601, inf
    %v1611 = vsel %vm1610, %v1601, %v1609
    %vm1612 = vcmp.eq.f32.partialorder %v1601, 0.0
    %v1613 = vand.u32 %v1601, 2147483648
    %v1614 = vsel %vm1612, %v1613, %v1611
    %v1615 = vrsqrt.pop %v1602
    %v1616 = vmul.f32 %v1615, %v1602
    %v1617 = vmul.f32 %v1616, %v1615
    %v1618 = vmul.f32 0.5, %v1617
    %v1619 = vsub.f32 1.5, %v1618
    %v1620 = vmul.f32 %v1615, %v1619
    %v1621 = vmul.f32 %v1602, %v1620
    %vm1622 = vcmp.eq.f32.partialorder %v1602, inf
    %v1623 = vsel %vm1622, %v1602, %v1621
    %vm1624 = vcmp.eq.f32.partialorder %v1602, 0.0
    %v1625 = vand.u32 %v1602, 2147483648
    %v1626 = vsel %vm1624, %v1625, %v1623
    %v1627 = vadd.f32 %v1614, 1e-08
    %v1628 = vadd.f32 %v1626, 1e-08
    %v1629 = vrcp.pop %v1627
    %v1630 = vmul.f32 %v1627, %v1629
    %v1631 = vsub.f32 1.0, %v1630
    %v1632 = vmul.f32 %v1629, %v1631
    %v1633 = vadd.f32 %v1629, %v1632
    %vm1634 = vweird.f32 %v1627
    %vm1635 = vweird.f32 %v1629
    %vm1636 = vmor %vm1634, %vm1635
    %v1637 = vsel %vm1636, %v1629, %v1633
    %v1638 = vand.u32 2147483647, %v1627
    %vm1639 = vcmp.eq.f32.partialorder %v1638, 8.507059e+37
    %v1640 = vand.u32 %v1627, 2147483648
    %v1641 = vor.u32 1.1754944e-38, %v1640
    %v1642 = vsel %vm1639, %v1641, %v1637
    %v1643 = vmul.f32 1.0, %v1642
    %v1644 = vrcp.pop %v1628
    %v1645 = vmul.f32 %v1628, %v1644
    %v1646 = vsub.f32 1.0, %v1645
    %v1647 = vmul.f32 %v1644, %v1646
    %v1648 = vadd.f32 %v1644, %v1647
    %vm1649 = vweird.f32 %v1628
    %vm1650 = vweird.f32 %v1644
    %vm1651 = vmor %vm1649, %vm1650
    %v1652 = vsel %vm1651, %v1644, %v1648
    %v1653 = vand.u32 2147483647, %v1628
    %vm1654 = vcmp.eq.f32.partialorder %v1653, 8.507059e+37
    %v1655 = vand.u32 %v1628, 2147483648
    %v1656 = vor.u32 1.1754944e-38, %v1655
    %v1657 = vsel %vm1654, %v1656, %v1652
    %v1658 = vmul.f32 1.0, %v1657
    %v1659 = vmul.f32 %v1587, %v1643
    %v1660 = vmul.f32 %v1588, %v1643
    %v1661 = vmul.f32 %v1589, %v1658
    %v1662 = vmul.f32 %v1590, %v1658
    %v1663 = vld [vmem:[#allocation10] sm:$0xf]
    %v1664 = vld [vmem:[#allocation10 + $0x4] sm:$0xf]
    %v1665 = vld [vmem:[#allocation10 + $0x8] sm:$0xf]
    %v1666 = vld [vmem:[#allocation10 + $0xc] sm:$0xf]
    %v1667 = vld [vmem:[#allocation10 + $0x10] sm:$0xf]
    %v1668 = vld [vmem:[#allocation10 + $0x14] sm:$0xf]
    %v1669 = vld [vmem:[#allocation10 + $0x18] sm:$0xf]
    %v1670 = vld [vmem:[#allocation10 + $0x1c] sm:$0xf]
    %v1671 = vld [vmem:[#allocation10 + $0x20] sm:$0xf]
    %v1672 = vld [vmem:[#allocation10 + $0x24] sm:$0xf]
    %v1673 = vld [vmem:[#allocation10 + $0x28] sm:$0xf]
    %v1674 = vld [vmem:[#allocation10 + $0x2c] sm:$0xf]
    %v1675 = vld [vmem:[#allocation10 + $0x30] sm:$0xf]
    %v1676 = vld [vmem:[#allocation10 + $0x34] sm:$0xf]
    %v1677 = vld [vmem:[#allocation10 + $0x38] sm:$0xf]
    %v1678 = vld [vmem:[#allocation10 + $0x3c] sm:$0xf]
    %v1679 = vld [vmem:[#allocation10 + $0x40] sm:$0xf]
    %v1680 = vld [vmem:[#allocation10 + $0x44] sm:$0xf]
    %v1681 = vld [vmem:[#allocation10 + $0x48] sm:$0xf]
    %v1682 = vld [vmem:[#allocation10 + $0x4c] sm:$0xf]
    %v1683 = vld [vmem:[#allocation10 + $0x50] sm:$0xf]
    %v1684 = vld [vmem:[#allocation10 + $0x54] sm:$0xf]
    %v1685 = vld [vmem:[#allocation10 + $0x58] sm:$0xf]
    %v1686 = vld [vmem:[#allocation10 + $0x5c] sm:$0xf]
    %v1687 = vld [vmem:[#allocation10 + $0x60] sm:$0xf]
    %v1688 = vld [vmem:[#allocation10 + $0x64] sm:$0xf]
    %v1689 = vld [vmem:[#allocation10 + $0x68] sm:$0xf]
    %v1690 = vld [vmem:[#allocation10 + $0x6c] sm:$0xf]
    %v1691 = vld [vmem:[#allocation10 + $0x70] sm:$0xf]
    %v1692 = vld [vmem:[#allocation10 + $0x74] sm:$0xf]
    %v1693 = vld [vmem:[#allocation10 + $0x78] sm:$0xf]
    %v1694 = vld [vmem:[#allocation10 + $0x7c] sm:$0xf]
    %v1695 = vld [vmem:[%s6] sm:$0x1]
    %v1696 = vpack.c.bf16 %v1661, %v1659
    %v1697 = vpack.c.bf16 %v1662, %v1660
    %v1699 = vperm.slane %v1695, 0
    %v1733 = vunpack.c.l.b16 %v1663
    %v1734 = vunpack.c.l.b16 %v1664
    %v1735 = vunpack.c.l.b16 %v1665
    %v1736 = vunpack.c.l.b16 %v1666
    %v1737 = vunpack.c.l.b16 %v1667
    %v1738 = vunpack.c.l.b16 %v1668
    %v1739 = vunpack.c.l.b16 %v1669
    %v1740 = vunpack.c.l.b16 %v1670
    %v1741 = vunpack.c.l.b16 %v1671
    %v1742 = vunpack.c.l.b16 %v1672
    %v1743 = vunpack.c.l.b16 %v1673
    %v1744 = vunpack.c.l.b16 %v1674
    %v1745 = vunpack.c.l.b16 %v1675
    %v1746 = vunpack.c.l.b16 %v1676
    %v1747 = vunpack.c.l.b16 %v1677
    %v1748 = vunpack.c.l.b16 %v1678
    %v1749 = vunpack.c.l.b16 %v1679
    %v1750 = vunpack.c.l.b16 %v1680
    %v1751 = vunpack.c.l.b16 %v1681
    %v1752 = vunpack.c.l.b16 %v1682
    %v1753 = vunpack.c.l.b16 %v1683
    %v1754 = vunpack.c.l.b16 %v1684
    %v1755 = vunpack.c.l.b16 %v1685
    %v1756 = vunpack.c.l.b16 %v1686
    %v1757 = vunpack.c.l.b16 %v1687
    %v1758 = vunpack.c.l.b16 %v1688
    %v1759 = vunpack.c.l.b16 %v1689
    %v1760 = vunpack.c.l.b16 %v1690
    %v1761 = vunpack.c.l.b16 %v1691
    %v1762 = vunpack.c.l.b16 %v1692
    %v1763 = vunpack.c.l.b16 %v1693
    %v1764 = vunpack.c.l.b16 %v1694
    %v1765 = vpack.c.b16 %v1734, %v1733
    %v1766 = vpack.c.b16 %v1736, %v1735
    %v1767 = vpack.c.b16 %v1738, %v1737
    %v1768 = vpack.c.b16 %v1740, %v1739
    %v1769 = vpack.c.b16 %v1742, %v1741
    %v1770 = vpack.c.b16 %v1744, %v1743
    %v1771 = vpack.c.b16 %v1746, %v1745
    %v1772 = vpack.c.b16 %v1748, %v1747
    %v1773 = vpack.c.b16 %v1750, %v1749
    %v1774 = vpack.c.b16 %v1752, %v1751
    %v1775 = vpack.c.b16 %v1754, %v1753
    %v1776 = vpack.c.b16 %v1756, %v1755
    %v1777 = vpack.c.b16 %v1758, %v1757
    %v1778 = vpack.c.b16 %v1760, %v1759
    %v1779 = vpack.c.b16 %v1762, %v1761
    %v1780 = vpack.c.b16 %v1764, %v1763
    %1797 = vmatpush.bf16.msra.mxu0 %v1772
    %1798 = vmatpush.bf16.msra.mxu0 %v1771
    %1799 = vmatpush.bf16.msra.mxu0 %v1770
    %1800 = vmatpush.bf16.msra.mxu0 %v1769
    %1801 = vmatpush.bf16.msra.mxu0 %v1768
    %1802 = vmatpush.bf16.msra.mxu0 %v1767
    %1803 = vmatpush.bf16.msra.mxu0 %v1766
    %1804 = vmatpush.bf16.msra.mxu0 %v1765
    %1805 = vmatmul.bf16.gmra.mxu0 %v1696
    %v1806 = vpop.f32.mrf.mxu0
    %v1807 = vadd.f32 %v1699, %v1806
    %v1808 = vpop.f32.mrf.mxu0
    %v1809 = vadd.f32 %v1699, %v1808
    %1810 = vdwg.mxu0
    %1811 = vmatpush.bf16.msra.mxu0 %v1780
    %1812 = vmatpush.bf16.msra.mxu0 %v1779
    %1813 = vmatpush.bf16.msra.mxu0 %v1778
    %1814 = vmatpush.bf16.msra.mxu0 %v1777
    %1815 = vmatpush.bf16.msra.mxu0 %v1776
    %1816 = vmatpush.bf16.msra.mxu0 %v1775
    %1817 = vmatpush.bf16.msra.mxu0 %v1774
    %1818 = vmatpush.bf16.msra.mxu0 %v1773
    %1819 = vmatmul.bf16.gmra.mxu0 %v1697
    %v1820 = vpop.f32.mrf.mxu0
    %v1821 = vadd.f32 %v1807, %v1820
    %v1822 = vpop.f32.mrf.mxu0
    %v1823 = vadd.f32 %v1809, %v1822
    %1824 = vdwg.mxu0
    %v1825 = vmax.f32 %v1821, 0.0
    %v1826 = vmax.f32 %v1823, 0.0
    %v1827 = vmul.f32 %v1825, %v1825
    %v1828 = vmul.f32 %v1826, %v1826
    %1829 = vadd.xlane.f32.xlu0 %v1827
    %v1830 = vpop.xlane.xlu0 %1829
    %1831 = vadd.xlane.f32.xlu0 %v1828
    %v1832 = vpop.xlane.xlu0 %1831
    %v1833 = vrcp.pop 128.0
    %v1834 = vmul.f32 128.0, %v1833
    %v1835 = vsub.f32 1.0, %v1834
    %v1836 = vmul.f32 %v1833, %v1835
    %v1837 = vadd.f32 %v1833, %v1836
    %vm1838 = vweird.f32 %v1833
    %v1839 = vsel %vm1838, %v1833, %v1837
    %v1840 = vmul.f32 %v1830, %v1839
    %v1841 = vmul.f32 %v1832, %v1839
    %v1842 = vrsqrt.pop %v1840
    %v1843 = vmul.f32 %v1842, %v1840
    %v1844 = vmul.f32 %v1843, %v1842
    %v1845 = vmul.f32 0.5, %v1844
    %v1846 = vsub.f32 1.5, %v1845
    %v1847 = vmul.f32 %v1842, %v1846
    %v1848 = vmul.f32 %v1840, %v1847
    %vm1849 = vcmp.eq.f32.partialorder %v1840, inf
    %v1850 = vsel %vm1849, %v1840, %v1848
    %vm1851 = vcmp.eq.f32.partialorder %v1840, 0.0
    %v1852 = vand.u32 %v1840, 2147483648
    %v1853 = vsel %vm1851, %v1852, %v1850
    %v1854 = vrsqrt.pop %v1841
    %v1855 = vmul.f32 %v1854, %v1841
    %v1856 = vmul.f32 %v1855, %v1854
    %v1857 = vmul.f32 0.5, %v1856
    %v1858 = vsub.f32 1.5, %v1857
    %v1859 = vmul.f32 %v1854, %v1858
    %v1860 = vmul.f32 %v1841, %v1859
    %vm1861 = vcmp.eq.f32.partialorder %v1841, inf
    %v1862 = vsel %vm1861, %v1841, %v1860
    %vm1863 = vcmp.eq.f32.partialorder %v1841, 0.0
    %v1864 = vand.u32 %v1841, 2147483648
    %v1865 = vsel %vm1863, %v1864, %v1862
    %v1866 = vadd.f32 %v1853, 1e-08
    %v1867 = vadd.f32 %v1865, 1e-08
    %v1868 = vrcp.pop %v1866
    %v1869 = vmul.f32 %v1866, %v1868
    %v1870 = vsub.f32 1.0, %v1869
    %v1871 = vmul.f32 %v1868, %v1870
    %v1872 = vadd.f32 %v1868, %v1871
    %vm1873 = vweird.f32 %v1866
    %vm1874 = vweird.f32 %v1868
    %vm1875 = vmor %vm1873, %vm1874
    %v1876 = vsel %vm1875, %v1868, %v1872
    %v1877 = vand.u32 2147483647, %v1866
    %vm1878 = vcmp.eq.f32.partialorder %v1877, 8.507059e+37
    %v1879 = vand.u32 %v1866, 2147483648
    %v1880 = vor.u32 1.1754944e-38, %v1879
    %v1881 = vsel %vm1878, %v1880, %v1876
    %v1882 = vmul.f32 1.0, %v1881
    %v1883 = vrcp.pop %v1867
    %v1884 = vmul.f32 %v1867, %v1883
    %v1885 = vsub.f32 1.0, %v1884
    %v1886 = vmul.f32 %v1883, %v1885
    %v1887 = vadd.f32 %v1883, %v1886
    %vm1888 = vweird.f32 %v1867
    %vm1889 = vweird.f32 %v1883
    %vm1890 = vmor %vm1888, %vm1889
    %v1891 = vsel %vm1890, %v1883, %v1887
    %v1892 = vand.u32 2147483647, %v1867
    %vm1893 = vcmp.eq.f32.partialorder %v1892, 8.507059e+37
    %v1894 = vand.u32 %v1867, 2147483648
    %v1895 = vor.u32 1.1754944e-38, %v1894
    %v1896 = vsel %vm1893, %v1895, %v1891
    %v1897 = vmul.f32 1.0, %v1896
    %v1898 = vmul.f32 %v1825, %v1882
    %v1899 = vmul.f32 %v1826, %v1897
    %v1900 = vpack.c.bf16 %v1898, %v1898
    %v1901 = vpack.c.bf16 %v1899, %v1899
    %1902 = vst [vmem:[#allocation11] sm:$0xf] %v1900
    %1903 = vst [vmem:[#allocation11 + $0x4] sm:$0xf] %v1901
    // Predicated region
    $region50: #{tpu_custom_call.1} parent=1 // pred_check
      _
    $region51: #{tpu_custom_call.1} parent=1 // pred_check_branch
      %1905 = sbr.rel (0) target = $region53
    $region52: #{tpu_custom_call.1} parent=1 // pred_region
      %1907 = vsyncadd [#allocation4], 0
      %s1908 = sshll.u32 [#allocation11], 4
      %s1909 = int_to_ptr.vmem [resolvable:$true] %s1908
      %s1910 = sshll.u32 %s7, 4
      %s1911 = int_to_ptr.hbm [resolvable:$true] %s1910
      %1916 = dma.vmem_to_hbm [thread:$0]  %s1909, 128, %s1911, [#allocation4], 64, 64, 4
    $region53: #{tpu_custom_call.1} parent=1 // pred_fallthru
      _
    // Predicated region
    $region54: #{tpu_custom_call.1} parent=1 // pred_check
      _
    $region55: #{tpu_custom_call.1} parent=1 // pred_check_branch
      %1918 = sbr.rel (0) target = $region57
    $region56: #{tpu_custom_call.1} parent=1 // pred_region
      %1920 = dma.done [#allocation4], 128
    $region57: #{tpu_custom_call.1} parent=1 // pred_fallthru
      _
    %1921 = vsyncpa [#allocation3], 1
    %1922 = vsyncpa [#allocation6], 1
    %1923 = vsyncpa [#allocation9], 1
    %1924 = vsyncpa [#allocation4], 1

</llo_original>
